<compile_context>
chip_gen: v7x
topology: tpu7x:2x2x1
jax: 0.10.0
libtpu: 0.0.40
codegen_flags: <defaults>
</compile_context>

<pallas_src>
import functools

import jax
import jax.numpy as jnp
from jax import lax
from jax.experimental import pallas as pl
from jax.experimental.pallas import tpu as pltpu


def _round_up(n, m):
    return ((n + m - 1) // m) * m


# ----------------------------------------------------------------------------
# Weight-slab layout (one DMA for every parameter).  Each segment is padded to
# a multiple of 8 rows so all in-kernel slab reads are 8-aligned static slices.
# ----------------------------------------------------------------------------
def _slab_layout(n_features, channels, hidden, length_size):
    H = hidden
    entries = {}
    row = [0]

    def add(name, rows, cols):
        entries[name] = (row[0], rows, cols)
        row[0] += _round_up(rows, 8)

    cin = n_features
    for i, cout in enumerate(channels):
        add(f"conv{i}_w0", cin, cout)   # tap using h[t - d]
        add(f"conv{i}_w1", cin, cout)   # tap using h[t]
        add(f"conv{i}_b", 1, cout)
        cin = cout
    add("wih1", channels[-1], 3 * H)
    add("bih1", 1, 3 * H)
    add("bhh1", 1, 3 * H)
    add("wbig", 2 * H, 7 * H)           # fused layer-2 + next-step-gh1 weight
    add("bbig", 1, 7 * H)
    add("wfc", H, length_size)
    add("bfc", 1, length_size)
    width = max(c for (_, _, c) in entries.values())
    return entries, row[0], width


def pack_params(params, n_features, channels, hidden, length_size):
    """One-time packing of all weights into a single (rows, width) f32 slab."""
    H = hidden
    entries, total_rows, width = _slab_layout(n_features, channels, hidden,
                                              length_size)
    (wih1, whh1, bih1, bhh1), (wih2, whh2, bih2, bhh2) = params["gru"]
    wfc, bfc = params["fc"]

    zH = jnp.zeros((H, H), jnp.float32)
    z3H = jnp.zeros((H, 3 * H), jnp.float32)
    # Columns of Wbig: [ rz2 (2H) | gi2_n (H) | gh2_n (H) | gh1_next (3H) ]
    top = jnp.concatenate([wih2[:, :2 * H], wih2[:, 2 * H:], zH, whh1], axis=1)
    bot = jnp.concatenate([whh2[:, :2 * H], zH, whh2[:, 2 * H:], z3H], axis=1)
    wbig = jnp.concatenate([top, bot], axis=0)                    # (2H, 7H)
    bbig = jnp.concatenate([bih2[:, :2 * H] + bhh2[:, :2 * H],
                            bih2[:, 2 * H:], bhh2[:, 2 * H:], bhh1], axis=1)

    tensors = {}
    for i, (w0, w1, b, _) in enumerate(params["conv"]):
        tensors[f"conv{i}_w0"] = w0
        tensors[f"conv{i}_w1"] = w1
        tensors[f"conv{i}_b"] = b
    tensors.update(wih1=wih1, bih1=bih1, bhh1=bhh1,
                   wbig=wbig, bbig=bbig, wfc=wfc, bfc=bfc)

    slab = jnp.zeros((total_rows, width), jnp.float32)
    for name, (r0, rows, cols) in entries.items():
        slab = slab.at[r0:r0 + rows, :cols].set(tensors[name])
    return slab


# ----------------------------------------------------------------------------
# Fused kernel: TCN (dilated k=2 convs, batched over B via a time-major
# canvas) -> 2-layer GRU (1 MXU matmul / step) -> Linear.
# ----------------------------------------------------------------------------
def _fused_kernel(x_ref, slab_ref, o_ref, *scratch,
                  channels, n_features, hidden, length_size, seq_len, batch,
                  pos_cap):
    H = hidden
    B = batch
    n_conv = len(channels)
    dilations = tuple(2 ** i for i in range(n_conv))
    off_total = sum(dilations)
    P = pos_cap
    N = P * B                                   # canvas rows (time-major)

    entries, _, _ = _slab_layout(n_features, channels, hidden, length_size)

    def rd(name):
        r0, rows, cols = entries[name]
        return slab_ref[r0:r0 + rows, 0:cols]

    canv_refs = scratch[:n_conv - 1]            # inter-layer canvases
    gi1_ref = scratch[n_conv - 1]               # hoisted layer-1 projection

    # Zero the tail pad rows once so offset tap-reads past N see zeros.
    for c_ref in canv_refs:
        c_ref[N:, :] = jnp.zeros((c_ref.shape[0] - N, c_ref.shape[1]),
                                 jnp.float32)

    # ---- TCN: each tap = one batched matmul; shift = offset ref read. ----
    off = off_total                             # canvas position of x[.,0]
    l_valid = seq_len
    src = x_ref
    tcn = None
    for li, d in enumerate(dilations):
        w0 = rd(f"conv{li}_w0")
        w1 = rd(f"conv{li}_w1")
        cb = rd(f"conv{li}_b")
        v0 = src[0:N, :]                        # aligns h[t-d] with out row t
        v1 = src[d * B:d * B + N, :]            # aligns h[t]   with out row t
        a = (jnp.dot(v0, w0, preferred_element_type=jnp.float32)
             + jnp.dot(v1, w1, preferred_element_type=jnp.float32) + cb)
        off -= d
        l_valid += d                            # PyTorch: L_out = L_in + d
        cout = channels[li]
        row = lax.broadcasted_iota(jnp.int32, (N, cout), 0)
        valid = (row >= off * B) & (row < (off + l_valid) * B)
        y = jnp.where(valid, jnp.maximum(a, 0.0), 0.0)   # ReLU; dropout=id
        if li < n_conv - 1:
            canv_refs[li][0:N, :] = y
            src = canv_refs[li]
        else:
            tcn = y
    T = l_valid                                 # off == 0 here by construction

    # ---- hoisted GRU layer-1 input projection: one (N, 3H) matmul ----
    gi1_ref[...] = (jnp.dot(tcn, rd("wih1"),
                            preferred_element_type=jnp.float32) + rd("bih1"))

    wbig = rd("wbig")
    bbig = rd("bbig")
    gh1 = jnp.broadcast_to(rd("bhh1"), (B, 3 * H))      # h1_prev = 0 at t=0
    h1 = jnp.zeros((B, H), jnp.float32)
    h2 = jnp.zeros((B, H), jnp.float32)

    # ---- 2-layer GRU, fully unrolled; one MXU matmul per timestep ----
    for t in range(T):
        gi1_t = gi1_ref[t * B:(t + 1) * B, :]           # (B, 3H) static slice
        rz1 = jax.nn.sigmoid(gi1_t[:, :2 * H] + gh1[:, :2 * H])
        r1 = rz1[:, :H]
        z1 = rz1[:, H:]
        n1 = jnp.tanh(gi1_t[:, 2 * H:] + r1 * gh1[:, 2 * H:])
        h1 = (1.0 - z1) * n1 + z1 * h1

        h12 = jnp.concatenate([h1, h2], axis=1)         # (B, 2H)
        m = jnp.dot(h12, wbig, preferred_element_type=jnp.float32) + bbig
        rz2 = jax.nn.sigmoid(m[:, :2 * H])
        r2 = rz2[:, :H]
        z2 = rz2[:, H:]
        n2 = jnp.tanh(m[:, 2 * H:3 * H] + r2 * m[:, 3 * H:4 * H])
        h2 = (1.0 - z2) * n2 + z2 * h2
        gh1 = m[:, 4 * H:]                              # next step's gh1

    # ---- final Linear on the last timestep's layer-2 hidden state ----
    o_ref[...] = (jnp.dot(h2, rd("wfc"), preferred_element_type=jnp.float32)
                  + rd("bfc"))


def tcn_gru_forward(x, slab, *, channels, hidden, length_size):
    """x: (B, L, n_features), slab: packed weights -> (B, length_size)."""
    B, L, F = x.shape
    n_conv = len(channels)
    dilations = tuple(2 ** i for i in range(n_conv))
    off_total = sum(dilations)
    P = _round_up(L + off_total, 8)             # canvas positions per batch
    N = P * B
    tail = _round_up(max(dilations) * B, 8)     # pad rows for offset tap reads

    # Time-major zero canvas: row (p*B + b) holds x[b, p - off_total].
    xt = jnp.transpose(x, (1, 0, 2)).reshape(L * B, F)
    x_canvas = jnp.pad(
        xt, ((off_total * B, (P - off_total - L) * B + tail), (0, 0)))

    _, slab_rows, slab_width = _slab_layout(F, channels, hidden, length_size)
    kernel = functools.partial(
        _fused_kernel, channels=tuple(channels), n_features=F, hidden=hidden,
        length_size=length_size, seq_len=L, batch=B, pos_cap=P)

    scratch = [pltpu.VMEM((N + tail, channels[i]), jnp.float32)
               for i in range(n_conv - 1)]
    scratch.append(pltpu.VMEM((N, 3 * hidden), jnp.float32))

    return pl.pallas_call(
        kernel,
        out_shape=jax.ShapeDtypeStruct((B, length_size), jnp.float32),
        grid=(1,),          # tiny, latency-bound: whole problem resident
        in_specs=[pl.BlockSpec(x_canvas.shape, lambda i: (0, 0)),
                  pl.BlockSpec((slab_rows, slab_width), lambda i: (0, 0))],
        out_specs=pl.BlockSpec((B, length_size), lambda i: (0, 0)),
        scratch_shapes=scratch,
        compiler_params=pltpu.CompilerParams(
            dimension_semantics=("arbitrary",)),
    )(x_canvas, slab)


# ----------------------------------------------------------------------------
# Parameter init (deterministic, synthetic).  Conv taps stored as (Cin, Cout)
# per kernel position; GRU gate weights pre-stacked as (in, 3H) = [r | z | n].
# ----------------------------------------------------------------------------
def init_params(key, n_features, tcn_channels, hidden, length_size):
    n_keys = 3 * len(tcn_channels) + 8 + 2
    keys = iter(jax.random.split(key, n_keys))
    scale = 0.1
    params = {"conv": [], "gru": []}
    in_ch = n_features
    for i, out_ch in enumerate(tcn_channels):
        w0 = jax.random.normal(next(keys), (in_ch, out_ch), jnp.float32) * scale
        w1 = jax.random.normal(next(keys), (in_ch, out_ch), jnp.float32) * scale
        b = jax.random.normal(next(keys), (1, out_ch), jnp.float32) * scale
        params["conv"].append((w0, w1, b, 2 ** i))
        in_ch = out_ch
    in_size = tcn_channels[-1]
    for _ in range(2):
        wih = jax.random.normal(next(keys), (in_size, 3 * hidden), jnp.float32) * scale
        whh = jax.random.normal(next(keys), (hidden, 3 * hidden), jnp.float32) * scale
        bih = jax.random.normal(next(keys), (1, 3 * hidden), jnp.float32) * scale
        bhh = jax.random.normal(next(keys), (1, 3 * hidden), jnp.float32) * scale
        params["gru"].append((wih, whh, bih, bhh))
        in_size = hidden
    wfc = jax.random.normal(next(keys), (hidden, length_size), jnp.float32) * scale
    bfc = jax.random.normal(next(keys), (1, length_size), jnp.float32) * scale
    params["fc"] = (wfc, bfc)
    return params


# ----------------------------------------------------------------------------
# Pure-JAX reference (same math, no Pallas) for verification.
# ----------------------------------------------------------------------------
def reference_forward(x, params):
    h = x
    for (w0, w1, b, d) in params["conv"]:
        L = h.shape[1]
        lo = L + d
        hp = jnp.pad(h, ((0, 0), (d, d), (0, 0)))
        y = (jnp.einsum("blc,co->blo", hp[:, :lo], w0, precision="highest")
             + jnp.einsum("blc,co->blo", hp[:, d:d + lo], w1, precision="highest")
             + b)
        h = jnp.maximum(y, 0.0)
    B, T, _ = h.shape
    H = params["gru"][0][1].shape[0]

    def cell(xt, hprev, wih, whh, bih, bhh):
        gi = jnp.dot(xt, wih, precision="highest") + bih
        gh = jnp.dot(hprev, whh, precision="highest") + bhh
        r = jax.nn.sigmoid(gi[:, :H] + gh[:, :H])
        z = jax.nn.sigmoid(gi[:, H:2 * H] + gh[:, H:2 * H])
        n = jnp.tanh(gi[:, 2 * H:] + r * gh[:, 2 * H:])
        return (1.0 - z) * n + z * hprev

    (w1i, w1h, b1i, b1h), (w2i, w2h, b2i, b2h) = params["gru"]
    h1 = jnp.zeros((B, H), jnp.float32)
    h2 = jnp.zeros((B, H), jnp.float32)
    for t in range(T):
        h1 = cell(h[:, t, :], h1, w1i, w1h, b1i, b1h)
        h2 = cell(h1, h2, w2i, w2h, b2i, b2h)
    wfc, bfc = params["fc"]
    return jnp.dot(h2, wfc, precision="highest") + bfc


if __name__ == "__main__":
    B, L, F = 2, 16, 4                  # batch, seq len, n_features
    tcn_channels = (8, 16)
    H, LS = 32, 60                      # gru_hidden_size, length_size

    key = jax.random.PRNGKey(0)
    kx, kp = jax.random.split(key)
    x = jax.random.normal(kx, (B, L, F), jnp.float32)
    params = init_params(kp, F, tcn_channels, H, LS)
    slab = pack_params(params, F, tcn_channels, H, LS)   # one-time packing

    fwd = jax.jit(functools.partial(tcn_gru_forward, channels=tcn_channels,
                                    hidden=H, length_size=LS))
    out = jax.block_until_ready(fwd(x, slab))
    ref = reference_forward(x, params)

    assert out.shape == (B, LS), out.shape
    if not jnp.allclose(out, ref, rtol=2e-3, atol=2e-3):
        raise AssertionError("Pallas output does not match pure-JAX reference")
    print("KERNEL_OK")
</pallas_src>

<mosaic_0001>
module attributes {stable_mosaic.version = 11 : i64} {
  func.func @_fused_kernel(%arg0: i32, %arg1: memref<56x4xf32, #tpu.memory_space<vmem>>, %arg2: memref<192x224xf32, #tpu.memory_space<vmem>>, %arg3: memref<2x60xf32, #tpu.memory_space<vmem>>, %arg4: memref<56x8xf32, #tpu.memory_space<vmem>>, %arg5: memref<48x96xf32, #tpu.memory_space<vmem>>) attributes {dimension_semantics = [#tpu.dimension_semantics<arbitrary>], iteration_bounds = array<i64: 1>, scalar_prefetch = 0 : i64, scratch_operands = 2 : i64, tpu.core_type = #tpu.core_type<tc>, window_params = [{pipeline_mode = #tpu.pipeline_mode<synchronous>, transform_indices = @transform_0, window_bounds = array<i64: 56, 4>}, {pipeline_mode = #tpu.pipeline_mode<synchronous>, transform_indices = @transform_1, window_bounds = array<i64: 192, 224>}, {pipeline_mode = #tpu.pipeline_mode<synchronous>, transform_indices = @transform_2, window_bounds = array<i64: 2, 60>}]} {
    %cst = arith.constant 0.000000e+00 : f32
    %0 = vector.broadcast %cst : f32 to vector<8x8xf32>
    %c48 = arith.constant 48 : index
    %c0 = arith.constant 0 : index
    %1 = vector.load %arg4[%c48, %c0] : memref<56x8xf32, #tpu.memory_space<vmem>>, vector<8x8xf32>
    tpu.vector_store %arg4[%c48, %c0], %0 {strides = array<i32>} : memref<56x8xf32, #tpu.memory_space<vmem>>, vector<8x8xf32>,
    %c0_0 = arith.constant 0 : index
    %c0_1 = arith.constant 0 : index
    %2 = vector.load %arg2[%c0_0, %c0_1] : memref<192x224xf32, #tpu.memory_space<vmem>>, vector<4x8xf32>
    %c8 = arith.constant 8 : index
    %c0_2 = arith.constant 0 : index
    %3 = vector.load %arg2[%c8, %c0_2] : memref<192x224xf32, #tpu.memory_space<vmem>>, vector<4x8xf32>
    %c16 = arith.constant 16 : index
    %c0_3 = arith.constant 0 : index
    %4 = vector.load %arg2[%c16, %c0_3] : memref<192x224xf32, #tpu.memory_space<vmem>>, vector<1x8xf32>
    %c0_4 = arith.constant 0 : index
    %c0_5 = arith.constant 0 : index
    %5 = vector.load %arg1[%c0_4, %c0_5] : memref<56x4xf32, #tpu.memory_space<vmem>>, vector<48x4xf32>
    %c2 = arith.constant 2 : index
    %c0_6 = arith.constant 0 : index
    %6 = vector.load %arg1[%c2, %c0_6] : memref<56x4xf32, #tpu.memory_space<vmem>>, vector<48x4xf32>
    %cst_7 = arith.constant dense<0.000000e+00> : vector<48x8xf32>
    %7 = tpu.matmul %5, %2, %cst_7 {dimension_numbers = #tpu.dot_dimension_numbers<[1], [0], [0], [1], [0, 0, 1, 1], [], []>} : vector<48x4xf32>, vector<4x8xf32>, vector<48x8xf32> -> vector<48x8xf32>
    %cst_8 = arith.constant dense<0.000000e+00> : vector<48x8xf32>
    %8 = tpu.matmul %6, %3, %cst_8 {dimension_numbers = #tpu.dot_dimension_numbers<[1], [0], [0], [1], [0, 0, 1, 1], [], []>} : vector<48x4xf32>, vector<4x8xf32>, vector<48x8xf32> -> vector<48x8xf32>
    %9 = arith.addf %7, %8 : vector<48x8xf32>
    %10 = vector.broadcast %4 : vector<1x8xf32> to vector<48x8xf32>
    %11 = arith.addf %9, %10 : vector<48x8xf32>
    %12 = tpu.iota {dimensions = array<i32: 0>} : vector<48x8xi32>
    %c4_i32 = arith.constant 4 : i32
    %13 = vector.broadcast %c4_i32 : i32 to vector<48x8xi32>
    %14 = arith.cmpi sge, %12, %13 : vector<48x8xi32>
    %c38_i32 = arith.constant 38 : i32
    %15 = vector.broadcast %c38_i32 : i32 to vector<48x8xi32>
    %16 = arith.cmpi slt, %12, %15 : vector<48x8xi32>
    %17 = arith.andi %14, %16 : vector<48x8xi1>
    %cst_9 = arith.constant 0.000000e+00 : f32
    %18 = vector.broadcast %cst_9 : f32 to vector<48x8xf32>
    %19 = arith.maximumf %11, %18 : vector<48x8xf32>
    %cst_10 = arith.constant 0.000000e+00 : f32
    %20 = vector.broadcast %cst_10 : f32 to vector<48x8xf32>
    %21 = arith.select %17, %19, %20 : vector<48x8xi1>, vector<48x8xf32>
    %c0_11 = arith.constant 0 : index
    %c0_12 = arith.constant 0 : index
    %22 = vector.load %arg4[%c0_11, %c0_12] : memref<56x8xf32, #tpu.memory_space<vmem>>, vector<48x8xf32>
    tpu.vector_store %arg4[%c0_11, %c0_12], %21 {strides = array<i32>} : memref<56x8xf32, #tpu.memory_space<vmem>>, vector<48x8xf32>,
    %c24 = arith.constant 24 : index
    %c0_13 = arith.constant 0 : index
    %23 = vector.load %arg2[%c24, %c0_13] : memref<192x224xf32, #tpu.memory_space<vmem>>, vector<8x16xf32>
    %c32 = arith.constant 32 : index
    %c0_14 = arith.constant 0 : index
    %24 = vector.load %arg2[%c32, %c0_14] : memref<192x224xf32, #tpu.memory_space<vmem>>, vector<8x16xf32>
    %c40 = arith.constant 40 : index
    %c0_15 = arith.constant 0 : index
    %25 = vector.load %arg2[%c40, %c0_15] : memref<192x224xf32, #tpu.memory_space<vmem>>, vector<1x16xf32>
    %c0_16 = arith.constant 0 : index
    %c0_17 = arith.constant 0 : index
    %26 = vector.load %arg4[%c0_16, %c0_17] : memref<56x8xf32, #tpu.memory_space<vmem>>, vector<48x8xf32>
    %c4 = arith.constant 4 : index
    %c0_18 = arith.constant 0 : index
    %27 = vector.load %arg4[%c4, %c0_18] : memref<56x8xf32, #tpu.memory_space<vmem>>, vector<48x8xf32>
    %cst_19 = arith.constant dense<0.000000e+00> : vector<48x16xf32>
    %28 = tpu.matmul %26, %23, %cst_19 {dimension_numbers = #tpu.dot_dimension_numbers<[1], [0], [0], [1], [0, 0, 1, 1], [], []>} : vector<48x8xf32>, vector<8x16xf32>, vector<48x16xf32> -> vector<48x16xf32>
    %cst_20 = arith.constant dense<0.000000e+00> : vector<48x16xf32>
    %29 = tpu.matmul %27, %24, %cst_20 {dimension_numbers = #tpu.dot_dimension_numbers<[1], [0], [0], [1], [0, 0, 1, 1], [], []>} : vector<48x8xf32>, vector<8x16xf32>, vector<48x16xf32> -> vector<48x16xf32>
    %30 = arith.addf %28, %29 : vector<48x16xf32>
    %31 = vector.broadcast %25 : vector<1x16xf32> to vector<48x16xf32>
    %32 = arith.addf %30, %31 : vector<48x16xf32>
    %33 = tpu.iota {dimensions = array<i32: 0>} : vector<48x16xi32>
    %c0_i32 = arith.constant 0 : i32
    %34 = vector.broadcast %c0_i32 : i32 to vector<48x16xi32>
    %35 = arith.cmpi sge, %33, %34 : vector<48x16xi32>
    %c38_i32_21 = arith.constant 38 : i32
    %36 = vector.broadcast %c38_i32_21 : i32 to vector<48x16xi32>
    %37 = arith.cmpi slt, %33, %36 : vector<48x16xi32>
    %38 = arith.andi %35, %37 : vector<48x16xi1>
    %cst_22 = arith.constant 0.000000e+00 : f32
    %39 = vector.broadcast %cst_22 : f32 to vector<48x16xf32>
    %40 = arith.maximumf %32, %39 : vector<48x16xf32>
    %cst_23 = arith.constant 0.000000e+00 : f32
    %41 = vector.broadcast %cst_23 : f32 to vector<48x16xf32>
    %42 = arith.select %38, %40, %41 : vector<48x16xi1>, vector<48x16xf32>
    %c48_24 = arith.constant 48 : index
    %c0_25 = arith.constant 0 : index
    %43 = vector.load %arg2[%c48_24, %c0_25] : memref<192x224xf32, #tpu.memory_space<vmem>>, vector<16x96xf32>
    %cst_26 = arith.constant dense<0.000000e+00> : vector<48x96xf32>
    %44 = tpu.matmul %42, %43, %cst_26 {dimension_numbers = #tpu.dot_dimension_numbers<[1], [0], [0], [1], [0, 0, 1, 1], [], []>} : vector<48x16xf32>, vector<16x96xf32>, vector<48x96xf32> -> vector<48x96xf32>
    %c64 = arith.constant 64 : index
    %c0_27 = arith.constant 0 : index
    %45 = vector.load %arg2[%c64, %c0_27] : memref<192x224xf32, #tpu.memory_space<vmem>>, vector<1x96xf32>
    %46 = vector.broadcast %45 : vector<1x96xf32> to vector<48x96xf32>
    %47 = arith.addf %44, %46 : vector<48x96xf32>
    %c0_28 = arith.constant 0 : index
    %c0_29 = arith.constant 0 : index
    %48 = vector.load %arg5[%c0_28, %c0_29] : memref<48x96xf32, #tpu.memory_space<vmem>>, vector<48x96xf32>
    tpu.vector_store %arg5[%c0_28, %c0_29], %47 {strides = array<i32>} : memref<48x96xf32, #tpu.memory_space<vmem>>, vector<48x96xf32>,
    %c80 = arith.constant 80 : index
    %c0_30 = arith.constant 0 : index
    %49 = vector.load %arg2[%c80, %c0_30] : memref<192x224xf32, #tpu.memory_space<vmem>>, vector<64x224xf32>
    %c144 = arith.constant 144 : index
    %c0_31 = arith.constant 0 : index
    %50 = vector.load %arg2[%c144, %c0_31] : memref<192x224xf32, #tpu.memory_space<vmem>>, vector<1x224xf32>
    %c72 = arith.constant 72 : index
    %c0_32 = arith.constant 0 : index
    %51 = vector.load %arg2[%c72, %c0_32] : memref<192x224xf32, #tpu.memory_space<vmem>>, vector<1x96xf32>
    %52 = vector.shape_cast %51 : vector<1x96xf32> to vector<1x96xf32>
    %53 = vector.broadcast %52 : vector<1x96xf32> to vector<2x96xf32>
    %cst_33 = arith.constant 0.000000e+00 : f32
    %54 = vector.broadcast %cst_33 : f32 to vector<2x32xf32>
    %cst_34 = arith.constant 0.000000e+00 : f32
    %55 = vector.broadcast %cst_34 : f32 to vector<2x32xf32>
    %c0_35 = arith.constant 0 : index
    %c0_36 = arith.constant 0 : index
    %56 = vector.load %arg5[%c0_35, %c0_36] : memref<48x96xf32, #tpu.memory_space<vmem>>, vector<2x96xf32>
    %57 = vector.extract_strided_slice %56 {offsets = [0, 0], sizes = [2, 64], strides = [1, 1]} : vector<2x96xf32> to vector<2x64xf32>
    %58 = vector.extract_strided_slice %53 {offsets = [0, 0], sizes = [2, 64], strides = [1, 1]} : vector<2x96xf32> to vector<2x64xf32>
    %59 = arith.addf %57, %58 : vector<2x64xf32>
    %60 = arith.negf %59 : vector<2x64xf32>
    %61 = math.exp %60 : vector<2x64xf32>
    %cst_37 = arith.constant 1.000000e+00 : f32
    %62 = vector.broadcast %cst_37 : f32 to vector<2x64xf32>
    %63 = arith.addf %62, %61 : vector<2x64xf32>
    %64 = arith.divf %62, %63 : vector<2x64xf32>
    %65 = vector.extract_strided_slice %64 {offsets = [0, 0], sizes = [2, 32], strides = [1, 1]} : vector<2x64xf32> to vector<2x32xf32>
    %66 = vector.extract_strided_slice %64 {offsets = [0, 32], sizes = [2, 32], strides = [1, 1]} : vector<2x64xf32> to vector<2x32xf32>
    %67 = vector.extract_strided_slice %56 {offsets = [0, 64], sizes = [2, 32], strides = [1, 1]} : vector<2x96xf32> to vector<2x32xf32>
    %68 = vector.extract_strided_slice %53 {offsets = [0, 64], sizes = [2, 32], strides = [1, 1]} : vector<2x96xf32> to vector<2x32xf32>
    %69 = arith.mulf %65, %68 : vector<2x32xf32>
    %70 = arith.addf %67, %69 : vector<2x32xf32>
    %71 = math.tanh %70 : vector<2x32xf32>
    %cst_38 = arith.constant 1.000000e+00 : f32
    %72 = vector.broadcast %cst_38 : f32 to vector<2x32xf32>
    %73 = arith.subf %72, %66 : vector<2x32xf32>
    %74 = arith.mulf %73, %71 : vector<2x32xf32>
    %75 = arith.mulf %66, %54 : vector<2x32xf32>
    %76 = arith.addf %74, %75 : vector<2x32xf32>
    %77 = tpu.concatenate %76, %55 in 1 : vector<2x32xf32>, vector<2x32xf32> -> vector<2x64xf32>
    %cst_39 = arith.constant dense<0.000000e+00> : vector<2x224xf32>
    %78 = tpu.matmul %77, %49, %cst_39 {dimension_numbers = #tpu.dot_dimension_numbers<[1], [0], [0], [1], [0, 0, 1, 1], [], []>} : vector<2x64xf32>, vector<64x224xf32>, vector<2x224xf32> -> vector<2x224xf32>
    %79 = vector.broadcast %50 : vector<1x224xf32> to vector<2x224xf32>
    %80 = arith.addf %78, %79 : vector<2x224xf32>
    %81 = vector.extract_strided_slice %80 {offsets = [0, 0], sizes = [2, 64], strides = [1, 1]} : vector<2x224xf32> to vector<2x64xf32>
    %82 = arith.negf %81 : vector<2x64xf32>
    %83 = math.exp %82 : vector<2x64xf32>
    %cst_40 = arith.constant 1.000000e+00 : f32
    %84 = vector.broadcast %cst_40 : f32 to vector<2x64xf32>
    %85 = arith.addf %84, %83 : vector<2x64xf32>
    %86 = arith.divf %84, %85 : vector<2x64xf32>
    %87 = vector.extract_strided_slice %86 {offsets = [0, 0], sizes = [2, 32], strides = [1, 1]} : vector<2x64xf32> to vector<2x32xf32>
    %88 = vector.extract_strided_slice %86 {offsets = [0, 32], sizes = [2, 32], strides = [1, 1]} : vector<2x64xf32> to vector<2x32xf32>
    %89 = vector.extract_strided_slice %80 {offsets = [0, 64], sizes = [2, 32], strides = [1, 1]} : vector<2x224xf32> to vector<2x32xf32>
    %90 = vector.extract_strided_slice %80 {offsets = [0, 96], sizes = [2, 32], strides = [1, 1]} : vector<2x224xf32> to vector<2x32xf32>
    %91 = arith.mulf %87, %90 : vector<2x32xf32>
    %92 = arith.addf %89, %91 : vector<2x32xf32>
    %93 = math.tanh %92 : vector<2x32xf32>
    %cst_41 = arith.constant 1.000000e+00 : f32
    %94 = vector.broadcast %cst_41 : f32 to vector<2x32xf32>
    %95 = arith.subf %94, %88 : vector<2x32xf32>
    %96 = arith.mulf %95, %93 : vector<2x32xf32>
    %97 = arith.mulf %88, %55 : vector<2x32xf32>
    %98 = arith.addf %96, %97 : vector<2x32xf32>
    %99 = vector.extract_strided_slice %80 {offsets = [0, 128], sizes = [2, 96], strides = [1, 1]} : vector<2x224xf32> to vector<2x96xf32>
    %c2_42 = arith.constant 2 : index
    %c0_43 = arith.constant 0 : index
    %100 = vector.load %arg5[%c2_42, %c0_43] : memref<48x96xf32, #tpu.memory_space<vmem>>, vector<2x96xf32>
    %101 = vector.extract_strided_slice %100 {offsets = [0, 0], sizes = [2, 64], strides = [1, 1]} : vector<2x96xf32> to vector<2x64xf32>
    %102 = vector.extract_strided_slice %99 {offsets = [0, 0], sizes = [2, 64], strides = [1, 1]} : vector<2x96xf32> to vector<2x64xf32>
    %103 = arith.addf %101, %102 : vector<2x64xf32>
    %104 = arith.negf %103 : vector<2x64xf32>
    %105 = math.exp %104 : vector<2x64xf32>
    %cst_44 = arith.constant 1.000000e+00 : f32
    %106 = vector.broadcast %cst_44 : f32 to vector<2x64xf32>
    %107 = arith.addf %106, %105 : vector<2x64xf32>
    %108 = arith.divf %106, %107 : vector<2x64xf32>
    %109 = vector.extract_strided_slice %108 {offsets = [0, 0], sizes = [2, 32], strides = [1, 1]} : vector<2x64xf32> to vector<2x32xf32>
    %110 = vector.extract_strided_slice %108 {offsets = [0, 32], sizes = [2, 32], strides = [1, 1]} : vector<2x64xf32> to vector<2x32xf32>
    %111 = vector.extract_strided_slice %100 {offsets = [0, 64], sizes = [2, 32], strides = [1, 1]} : vector<2x96xf32> to vector<2x32xf32>
    %112 = vector.extract_strided_slice %99 {offsets = [0, 64], sizes = [2, 32], strides = [1, 1]} : vector<2x96xf32> to vector<2x32xf32>
    %113 = arith.mulf %109, %112 : vector<2x32xf32>
    %114 = arith.addf %111, %113 : vector<2x32xf32>
    %115 = math.tanh %114 : vector<2x32xf32>
    %cst_45 = arith.constant 1.000000e+00 : f32
    %116 = vector.broadcast %cst_45 : f32 to vector<2x32xf32>
    %117 = arith.subf %116, %110 : vector<2x32xf32>
    %118 = arith.mulf %117, %115 : vector<2x32xf32>
    %119 = arith.mulf %110, %76 : vector<2x32xf32>
    %120 = arith.addf %118, %119 : vector<2x32xf32>
    %121 = tpu.concatenate %120, %98 in 1 : vector<2x32xf32>, vector<2x32xf32> -> vector<2x64xf32>
    %cst_46 = arith.constant dense<0.000000e+00> : vector<2x224xf32>
    %122 = tpu.matmul %121, %49, %cst_46 {dimension_numbers = #tpu.dot_dimension_numbers<[1], [0], [0], [1], [0, 0, 1, 1], [], []>} : vector<2x64xf32>, vector<64x224xf32>, vector<2x224xf32> -> vector<2x224xf32>
    %123 = vector.broadcast %50 : vector<1x224xf32> to vector<2x224xf32>
    %124 = arith.addf %122, %123 : vector<2x224xf32>
    %125 = vector.extract_strided_slice %124 {offsets = [0, 0], sizes = [2, 64], strides = [1, 1]} : vector<2x224xf32> to vector<2x64xf32>
    %126 = arith.negf %125 : vector<2x64xf32>
    %127 = math.exp %126 : vector<2x64xf32>
    %cst_47 = arith.constant 1.000000e+00 : f32
    %128 = vector.broadcast %cst_47 : f32 to vector<2x64xf32>
    %129 = arith.addf %128, %127 : vector<2x64xf32>
    %130 = arith.divf %128, %129 : vector<2x64xf32>
    %131 = vector.extract_strided_slice %130 {offsets = [0, 0], sizes = [2, 32], strides = [1, 1]} : vector<2x64xf32> to vector<2x32xf32>
    %132 = vector.extract_strided_slice %130 {offsets = [0, 32], sizes = [2, 32], strides = [1, 1]} : vector<2x64xf32> to vector<2x32xf32>
    %133 = vector.extract_strided_slice %124 {offsets = [0, 64], sizes = [2, 32], strides = [1, 1]} : vector<2x224xf32> to vector<2x32xf32>
    %134 = vector.extract_strided_slice %124 {offsets = [0, 96], sizes = [2, 32], strides = [1, 1]} : vector<2x224xf32> to vector<2x32xf32>
    %135 = arith.mulf %131, %134 : vector<2x32xf32>
    %136 = arith.addf %133, %135 : vector<2x32xf32>
    %137 = math.tanh %136 : vector<2x32xf32>
    %cst_48 = arith.constant 1.000000e+00 : f32
    %138 = vector.broadcast %cst_48 : f32 to vector<2x32xf32>
    %139 = arith.subf %138, %132 : vector<2x32xf32>
    %140 = arith.mulf %139, %137 : vector<2x32xf32>
    %141 = arith.mulf %132, %98 : vector<2x32xf32>
    %142 = arith.addf %140, %141 : vector<2x32xf32>
    %143 = vector.extract_strided_slice %124 {offsets = [0, 128], sizes = [2, 96], strides = [1, 1]} : vector<2x224xf32> to vector<2x96xf32>
    %c4_49 = arith.constant 4 : index
    %c0_50 = arith.constant 0 : index
    %144 = vector.load %arg5[%c4_49, %c0_50] : memref<48x96xf32, #tpu.memory_space<vmem>>, vector<2x96xf32>
    %145 = vector.extract_strided_slice %144 {offsets = [0, 0], sizes = [2, 64], strides = [1, 1]} : vector<2x96xf32> to vector<2x64xf32>
    %146 = vector.extract_strided_slice %143 {offsets = [0, 0], sizes = [2, 64], strides = [1, 1]} : vector<2x96xf32> to vector<2x64xf32>
    %147 = arith.addf %145, %146 : vector<2x64xf32>
    %148 = arith.negf %147 : vector<2x64xf32>
    %149 = math.exp %148 : vector<2x64xf32>
    %cst_51 = arith.constant 1.000000e+00 : f32
    %150 = vector.broadcast %cst_51 : f32 to vector<2x64xf32>
    %151 = arith.addf %150, %149 : vector<2x64xf32>
    %152 = arith.divf %150, %151 : vector<2x64xf32>
    %153 = vector.extract_strided_slice %152 {offsets = [0, 0], sizes = [2, 32], strides = [1, 1]} : vector<2x64xf32> to vector<2x32xf32>
    %154 = vector.extract_strided_slice %152 {offsets = [0, 32], sizes = [2, 32], strides = [1, 1]} : vector<2x64xf32> to vector<2x32xf32>
    %155 = vector.extract_strided_slice %144 {offsets = [0, 64], sizes = [2, 32], strides = [1, 1]} : vector<2x96xf32> to vector<2x32xf32>
    %156 = vector.extract_strided_slice %143 {offsets = [0, 64], sizes = [2, 32], strides = [1, 1]} : vector<2x96xf32> to vector<2x32xf32>
    %157 = arith.mulf %153, %156 : vector<2x32xf32>
    %158 = arith.addf %155, %157 : vector<2x32xf32>
    %159 = math.tanh %158 : vector<2x32xf32>
    %cst_52 = arith.constant 1.000000e+00 : f32
    %160 = vector.broadcast %cst_52 : f32 to vector<2x32xf32>
    %161 = arith.subf %160, %154 : vector<2x32xf32>
    %162 = arith.mulf %161, %159 : vector<2x32xf32>
    %163 = arith.mulf %154, %120 : vector<2x32xf32>
    %164 = arith.addf %162, %163 : vector<2x32xf32>
    %165 = tpu.concatenate %164, %142 in 1 : vector<2x32xf32>, vector<2x32xf32> -> vector<2x64xf32>
    %cst_53 = arith.constant dense<0.000000e+00> : vector<2x224xf32>
    %166 = tpu.matmul %165, %49, %cst_53 {dimension_numbers = #tpu.dot_dimension_numbers<[1], [0], [0], [1], [0, 0, 1, 1], [], []>} : vector<2x64xf32>, vector<64x224xf32>, vector<2x224xf32> -> vector<2x224xf32>
    %167 = vector.broadcast %50 : vector<1x224xf32> to vector<2x224xf32>
    %168 = arith.addf %166, %167 : vector<2x224xf32>
    %169 = vector.extract_strided_slice %168 {offsets = [0, 0], sizes = [2, 64], strides = [1, 1]} : vector<2x224xf32> to vector<2x64xf32>
    %170 = arith.negf %169 : vector<2x64xf32>
    %171 = math.exp %170 : vector<2x64xf32>
    %cst_54 = arith.constant 1.000000e+00 : f32
    %172 = vector.broadcast %cst_54 : f32 to vector<2x64xf32>
    %173 = arith.addf %172, %171 : vector<2x64xf32>
    %174 = arith.divf %172, %173 : vector<2x64xf32>
    %175 = vector.extract_strided_slice %174 {offsets = [0, 0], sizes = [2, 32], strides = [1, 1]} : vector<2x64xf32> to vector<2x32xf32>
    %176 = vector.extract_strided_slice %174 {offsets = [0, 32], sizes = [2, 32], strides = [1, 1]} : vector<2x64xf32> to vector<2x32xf32>
    %177 = vector.extract_strided_slice %168 {offsets = [0, 64], sizes = [2, 32], strides = [1, 1]} : vector<2x224xf32> to vector<2x32xf32>
    %178 = vector.extract_strided_slice %168 {offsets = [0, 96], sizes = [2, 32], strides = [1, 1]} : vector<2x224xf32> to vector<2x32xf32>
    %179 = arith.mulf %175, %178 : vector<2x32xf32>
    %180 = arith.addf %177, %179 : vector<2x32xf32>
    %181 = math.tanh %180 : vector<2x32xf32>
    %cst_55 = arith.constant 1.000000e+00 : f32
    %182 = vector.broadcast %cst_55 : f32 to vector<2x32xf32>
    %183 = arith.subf %182, %176 : vector<2x32xf32>
    %184 = arith.mulf %183, %181 : vector<2x32xf32>
    %185 = arith.mulf %176, %142 : vector<2x32xf32>
    %186 = arith.addf %184, %185 : vector<2x32xf32>
    %187 = vector.extract_strided_slice %168 {offsets = [0, 128], sizes = [2, 96], strides = [1, 1]} : vector<2x224xf32> to vector<2x96xf32>
    %c6 = arith.constant 6 : index
    %c0_56 = arith.constant 0 : index
    %188 = vector.load %arg5[%c6, %c0_56] : memref<48x96xf32, #tpu.memory_space<vmem>>, vector<2x96xf32>
    %189 = vector.extract_strided_slice %188 {offsets = [0, 0], sizes = [2, 64], strides = [1, 1]} : vector<2x96xf32> to vector<2x64xf32>
    %190 = vector.extract_strided_slice %187 {offsets = [0, 0], sizes = [2, 64], strides = [1, 1]} : vector<2x96xf32> to vector<2x64xf32>
    %191 = arith.addf %189, %190 : vector<2x64xf32>
    %192 = arith.negf %191 : vector<2x64xf32>
    %193 = math.exp %192 : vector<2x64xf32>
    %cst_57 = arith.constant 1.000000e+00 : f32
    %194 = vector.broadcast %cst_57 : f32 to vector<2x64xf32>
    %195 = arith.addf %194, %193 : vector<2x64xf32>
    %196 = arith.divf %194, %195 : vector<2x64xf32>
    %197 = vector.extract_strided_slice %196 {offsets = [0, 0], sizes = [2, 32], strides = [1, 1]} : vector<2x64xf32> to vector<2x32xf32>
    %198 = vector.extract_strided_slice %196 {offsets = [0, 32], sizes = [2, 32], strides = [1, 1]} : vector<2x64xf32> to vector<2x32xf32>
    %199 = vector.extract_strided_slice %188 {offsets = [0, 64], sizes = [2, 32], strides = [1, 1]} : vector<2x96xf32> to vector<2x32xf32>
    %200 = vector.extract_strided_slice %187 {offsets = [0, 64], sizes = [2, 32], strides = [1, 1]} : vector<2x96xf32> to vector<2x32xf32>
    %201 = arith.mulf %197, %200 : vector<2x32xf32>
    %202 = arith.addf %199, %201 : vector<2x32xf32>
    %203 = math.tanh %202 : vector<2x32xf32>
    %cst_58 = arith.constant 1.000000e+00 : f32
    %204 = vector.broadcast %cst_58 : f32 to vector<2x32xf32>
    %205 = arith.subf %204, %198 : vector<2x32xf32>
    %206 = arith.mulf %205, %203 : vector<2x32xf32>
    %207 = arith.mulf %198, %164 : vector<2x32xf32>
    %208 = arith.addf %206, %207 : vector<2x32xf32>
    %209 = tpu.concatenate %208, %186 in 1 : vector<2x32xf32>, vector<2x32xf32> -> vector<2x64xf32>
    %cst_59 = arith.constant dense<0.000000e+00> : vector<2x224xf32>
    %210 = tpu.matmul %209, %49, %cst_59 {dimension_numbers = #tpu.dot_dimension_numbers<[1], [0], [0], [1], [0, 0, 1, 1], [], []>} : vector<2x64xf32>, vector<64x224xf32>, vector<2x224xf32> -> vector<2x224xf32>
    %211 = vector.broadcast %50 : vector<1x224xf32> to vector<2x224xf32>
    %212 = arith.addf %210, %211 : vector<2x224xf32>
    %213 = vector.extract_strided_slice %212 {offsets = [0, 0], sizes = [2, 64], strides = [1, 1]} : vector<2x224xf32> to vector<2x64xf32>
    %214 = arith.negf %213 : vector<2x64xf32>
    %215 = math.exp %214 : vector<2x64xf32>
    %cst_60 = arith.constant 1.000000e+00 : f32
    %216 = vector.broadcast %cst_60 : f32 to vector<2x64xf32>
    %217 = arith.addf %216, %215 : vector<2x64xf32>
    %218 = arith.divf %216, %217 : vector<2x64xf32>
    %219 = vector.extract_strided_slice %218 {offsets = [0, 0], sizes = [2, 32], strides = [1, 1]} : vector<2x64xf32> to vector<2x32xf32>
    %220 = vector.extract_strided_slice %218 {offsets = [0, 32], sizes = [2, 32], strides = [1, 1]} : vector<2x64xf32> to vector<2x32xf32>
    %221 = vector.extract_strided_slice %212 {offsets = [0, 64], sizes = [2, 32], strides = [1, 1]} : vector<2x224xf32> to vector<2x32xf32>
    %222 = vector.extract_strided_slice %212 {offsets = [0, 96], sizes = [2, 32], strides = [1, 1]} : vector<2x224xf32> to vector<2x32xf32>
    %223 = arith.mulf %219, %222 : vector<2x32xf32>
    %224 = arith.addf %221, %223 : vector<2x32xf32>
    %225 = math.tanh %224 : vector<2x32xf32>
    %cst_61 = arith.constant 1.000000e+00 : f32
    %226 = vector.broadcast %cst_61 : f32 to vector<2x32xf32>
    %227 = arith.subf %226, %220 : vector<2x32xf32>
    %228 = arith.mulf %227, %225 : vector<2x32xf32>
    %229 = arith.mulf %220, %186 : vector<2x32xf32>
    %230 = arith.addf %228, %229 : vector<2x32xf32>
    %231 = vector.extract_strided_slice %212 {offsets = [0, 128], sizes = [2, 96], strides = [1, 1]} : vector<2x224xf32> to vector<2x96xf32>
    %c8_62 = arith.constant 8 : index
    %c0_63 = arith.constant 0 : index
    %232 = vector.load %arg5[%c8_62, %c0_63] : memref<48x96xf32, #tpu.memory_space<vmem>>, vector<2x96xf32>
    %233 = vector.extract_strided_slice %232 {offsets = [0, 0], sizes = [2, 64], strides = [1, 1]} : vector<2x96xf32> to vector<2x64xf32>
    %234 = vector.extract_strided_slice %231 {offsets = [0, 0], sizes = [2, 64], strides = [1, 1]} : vector<2x96xf32> to vector<2x64xf32>
    %235 = arith.addf %233, %234 : vector<2x64xf32>
    %236 = arith.negf %235 : vector<2x64xf32>
    %237 = math.exp %236 : vector<2x64xf32>
    %cst_64 = arith.constant 1.000000e+00 : f32
    %238 = vector.broadcast %cst_64 : f32 to vector<2x64xf32>
    %239 = arith.addf %238, %237 : vector<2x64xf32>
    %240 = arith.divf %238, %239 : vector<2x64xf32>
    %241 = vector.extract_strided_slice %240 {offsets = [0, 0], sizes = [2, 32], strides = [1, 1]} : vector<2x64xf32> to vector<2x32xf32>
    %242 = vector.extract_strided_slice %240 {offsets = [0, 32], sizes = [2, 32], strides = [1, 1]} : vector<2x64xf32> to vector<2x32xf32>
    %243 = vector.extract_strided_slice %232 {offsets = [0, 64], sizes = [2, 32], strides = [1, 1]} : vector<2x96xf32> to vector<2x32xf32>
    %244 = vector.extract_strided_slice %231 {offsets = [0, 64], sizes = [2, 32], strides = [1, 1]} : vector<2x96xf32> to vector<2x32xf32>
    %245 = arith.mulf %241, %244 : vector<2x32xf32>
    %246 = arith.addf %243, %245 : vector<2x32xf32>
    %247 = math.tanh %246 : vector<2x32xf32>
    %cst_65 = arith.constant 1.000000e+00 : f32
    %248 = vector.broadcast %cst_65 : f32 to vector<2x32xf32>
    %249 = arith.subf %248, %242 : vector<2x32xf32>
    %250 = arith.mulf %249, %247 : vector<2x32xf32>
    %251 = arith.mulf %242, %208 : vector<2x32xf32>
    %252 = arith.addf %250, %251 : vector<2x32xf32>
    %253 = tpu.concatenate %252, %230 in 1 : vector<2x32xf32>, vector<2x32xf32> -> vector<2x64xf32>
    %cst_66 = arith.constant dense<0.000000e+00> : vector<2x224xf32>
    %254 = tpu.matmul %253, %49, %cst_66 {dimension_numbers = #tpu.dot_dimension_numbers<[1], [0], [0], [1], [0, 0, 1, 1], [], []>} : vector<2x64xf32>, vector<64x224xf32>, vector<2x224xf32> -> vector<2x224xf32>
    %255 = vector.broadcast %50 : vector<1x224xf32> to vector<2x224xf32>
    %256 = arith.addf %254, %255 : vector<2x224xf32>
    %257 = vector.extract_strided_slice %256 {offsets = [0, 0], sizes = [2, 64], strides = [1, 1]} : vector<2x224xf32> to vector<2x64xf32>
    %258 = arith.negf %257 : vector<2x64xf32>
    %259 = math.exp %258 : vector<2x64xf32>
    %cst_67 = arith.constant 1.000000e+00 : f32
    %260 = vector.broadcast %cst_67 : f32 to vector<2x64xf32>
    %261 = arith.addf %260, %259 : vector<2x64xf32>
    %262 = arith.divf %260, %261 : vector<2x64xf32>
    %263 = vector.extract_strided_slice %262 {offsets = [0, 0], sizes = [2, 32], strides = [1, 1]} : vector<2x64xf32> to vector<2x32xf32>
    %264 = vector.extract_strided_slice %262 {offsets = [0, 32], sizes = [2, 32], strides = [1, 1]} : vector<2x64xf32> to vector<2x32xf32>
    %265 = vector.extract_strided_slice %256 {offsets = [0, 64], sizes = [2, 32], strides = [1, 1]} : vector<2x224xf32> to vector<2x32xf32>
    %266 = vector.extract_strided_slice %256 {offsets = [0, 96], sizes = [2, 32], strides = [1, 1]} : vector<2x224xf32> to vector<2x32xf32>
    %267 = arith.mulf %263, %266 : vector<2x32xf32>
    %268 = arith.addf %265, %267 : vector<2x32xf32>
    %269 = math.tanh %268 : vector<2x32xf32>
    %cst_68 = arith.constant 1.000000e+00 : f32
    %270 = vector.broadcast %cst_68 : f32 to vector<2x32xf32>
    %271 = arith.subf %270, %264 : vector<2x32xf32>
    %272 = arith.mulf %271, %269 : vector<2x32xf32>
    %273 = arith.mulf %264, %230 : vector<2x32xf32>
    %274 = arith.addf %272, %273 : vector<2x32xf32>
    %275 = vector.extract_strided_slice %256 {offsets = [0, 128], sizes = [2, 96], strides = [1, 1]} : vector<2x224xf32> to vector<2x96xf32>
    %c10 = arith.constant 10 : index
    %c0_69 = arith.constant 0 : index
    %276 = vector.load %arg5[%c10, %c0_69] : memref<48x96xf32, #tpu.memory_space<vmem>>, vector<2x96xf32>
    %277 = vector.extract_strided_slice %276 {offsets = [0, 0], sizes = [2, 64], strides = [1, 1]} : vector<2x96xf32> to vector<2x64xf32>
    %278 = vector.extract_strided_slice %275 {offsets = [0, 0], sizes = [2, 64], strides = [1, 1]} : vector<2x96xf32> to vector<2x64xf32>
    %279 = arith.addf %277, %278 : vector<2x64xf32>
    %280 = arith.negf %279 : vector<2x64xf32>
    %281 = math.exp %280 : vector<2x64xf32>
    %cst_70 = arith.constant 1.000000e+00 : f32
    %282 = vector.broadcast %cst_70 : f32 to vector<2x64xf32>
    %283 = arith.addf %282, %281 : vector<2x64xf32>
    %284 = arith.divf %282, %283 : vector<2x64xf32>
    %285 = vector.extract_strided_slice %284 {offsets = [0, 0], sizes = [2, 32], strides = [1, 1]} : vector<2x64xf32> to vector<2x32xf32>
    %286 = vector.extract_strided_slice %284 {offsets = [0, 32], sizes = [2, 32], strides = [1, 1]} : vector<2x64xf32> to vector<2x32xf32>
    %287 = vector.extract_strided_slice %276 {offsets = [0, 64], sizes = [2, 32], strides = [1, 1]} : vector<2x96xf32> to vector<2x32xf32>
    %288 = vector.extract_strided_slice %275 {offsets = [0, 64], sizes = [2, 32], strides = [1, 1]} : vector<2x96xf32> to vector<2x32xf32>
    %289 = arith.mulf %285, %288 : vector<2x32xf32>
    %290 = arith.addf %287, %289 : vector<2x32xf32>
    %291 = math.tanh %290 : vector<2x32xf32>
    %cst_71 = arith.constant 1.000000e+00 : f32
    %292 = vector.broadcast %cst_71 : f32 to vector<2x32xf32>
    %293 = arith.subf %292, %286 : vector<2x32xf32>
    %294 = arith.mulf %293, %291 : vector<2x32xf32>
    %295 = arith.mulf %286, %252 : vector<2x32xf32>
    %296 = arith.addf %294, %295 : vector<2x32xf32>
    %297 = tpu.concatenate %296, %274 in 1 : vector<2x32xf32>, vector<2x32xf32> -> vector<2x64xf32>
    %cst_72 = arith.constant dense<0.000000e+00> : vector<2x224xf32>
    %298 = tpu.matmul %297, %49, %cst_72 {dimension_numbers = #tpu.dot_dimension_numbers<[1], [0], [0], [1], [0, 0, 1, 1], [], []>} : vector<2x64xf32>, vector<64x224xf32>, vector<2x224xf32> -> vector<2x224xf32>
    %299 = vector.broadcast %50 : vector<1x224xf32> to vector<2x224xf32>
    %300 = arith.addf %298, %299 : vector<2x224xf32>
    %301 = vector.extract_strided_slice %300 {offsets = [0, 0], sizes = [2, 64], strides = [1, 1]} : vector<2x224xf32> to vector<2x64xf32>
    %302 = arith.negf %301 : vector<2x64xf32>
    %303 = math.exp %302 : vector<2x64xf32>
    %cst_73 = arith.constant 1.000000e+00 : f32
    %304 = vector.broadcast %cst_73 : f32 to vector<2x64xf32>
    %305 = arith.addf %304, %303 : vector<2x64xf32>
    %306 = arith.divf %304, %305 : vector<2x64xf32>
    %307 = vector.extract_strided_slice %306 {offsets = [0, 0], sizes = [2, 32], strides = [1, 1]} : vector<2x64xf32> to vector<2x32xf32>
    %308 = vector.extract_strided_slice %306 {offsets = [0, 32], sizes = [2, 32], strides = [1, 1]} : vector<2x64xf32> to vector<2x32xf32>
    %309 = vector.extract_strided_slice %300 {offsets = [0, 64], sizes = [2, 32], strides = [1, 1]} : vector<2x224xf32> to vector<2x32xf32>
    %310 = vector.extract_strided_slice %300 {offsets = [0, 96], sizes = [2, 32], strides = [1, 1]} : vector<2x224xf32> to vector<2x32xf32>
    %311 = arith.mulf %307, %310 : vector<2x32xf32>
    %312 = arith.addf %309, %311 : vector<2x32xf32>
    %313 = math.tanh %312 : vector<2x32xf32>
    %cst_74 = arith.constant 1.000000e+00 : f32
    %314 = vector.broadcast %cst_74 : f32 to vector<2x32xf32>
    %315 = arith.subf %314, %308 : vector<2x32xf32>
    %316 = arith.mulf %315, %313 : vector<2x32xf32>
    %317 = arith.mulf %308, %274 : vector<2x32xf32>
    %318 = arith.addf %316, %317 : vector<2x32xf32>
    %319 = vector.extract_strided_slice %300 {offsets = [0, 128], sizes = [2, 96], strides = [1, 1]} : vector<2x224xf32> to vector<2x96xf32>
    %c12 = arith.constant 12 : index
    %c0_75 = arith.constant 0 : index
    %320 = vector.load %arg5[%c12, %c0_75] : memref<48x96xf32, #tpu.memory_space<vmem>>, vector<2x96xf32>
    %321 = vector.extract_strided_slice %320 {offsets = [0, 0], sizes = [2, 64], strides = [1, 1]} : vector<2x96xf32> to vector<2x64xf32>
    %322 = vector.extract_strided_slice %319 {offsets = [0, 0], sizes = [2, 64], strides = [1, 1]} : vector<2x96xf32> to vector<2x64xf32>
    %323 = arith.addf %321, %322 : vector<2x64xf32>
    %324 = arith.negf %323 : vector<2x64xf32>
    %325 = math.exp %324 : vector<2x64xf32>
    %cst_76 = arith.constant 1.000000e+00 : f32
    %326 = vector.broadcast %cst_76 : f32 to vector<2x64xf32>
    %327 = arith.addf %326, %325 : vector<2x64xf32>
    %328 = arith.divf %326, %327 : vector<2x64xf32>
    %329 = vector.extract_strided_slice %328 {offsets = [0, 0], sizes = [2, 32], strides = [1, 1]} : vector<2x64xf32> to vector<2x32xf32>
    %330 = vector.extract_strided_slice %328 {offsets = [0, 32], sizes = [2, 32], strides = [1, 1]} : vector<2x64xf32> to vector<2x32xf32>
    %331 = vector.extract_strided_slice %320 {offsets = [0, 64], sizes = [2, 32], strides = [1, 1]} : vector<2x96xf32> to vector<2x32xf32>
    %332 = vector.extract_strided_slice %319 {offsets = [0, 64], sizes = [2, 32], strides = [1, 1]} : vector<2x96xf32> to vector<2x32xf32>
    %333 = arith.mulf %329, %332 : vector<2x32xf32>
    %334 = arith.addf %331, %333 : vector<2x32xf32>
    %335 = math.tanh %334 : vector<2x32xf32>
    %cst_77 = arith.constant 1.000000e+00 : f32
    %336 = vector.broadcast %cst_77 : f32 to vector<2x32xf32>
    %337 = arith.subf %336, %330 : vector<2x32xf32>
    %338 = arith.mulf %337, %335 : vector<2x32xf32>
    %339 = arith.mulf %330, %296 : vector<2x32xf32>
    %340 = arith.addf %338, %339 : vector<2x32xf32>
    %341 = tpu.concatenate %340, %318 in 1 : vector<2x32xf32>, vector<2x32xf32> -> vector<2x64xf32>
    %cst_78 = arith.constant dense<0.000000e+00> : vector<2x224xf32>
    %342 = tpu.matmul %341, %49, %cst_78 {dimension_numbers = #tpu.dot_dimension_numbers<[1], [0], [0], [1], [0, 0, 1, 1], [], []>} : vector<2x64xf32>, vector<64x224xf32>, vector<2x224xf32> -> vector<2x224xf32>
    %343 = vector.broadcast %50 : vector<1x224xf32> to vector<2x224xf32>
    %344 = arith.addf %342, %343 : vector<2x224xf32>
    %345 = vector.extract_strided_slice %344 {offsets = [0, 0], sizes = [2, 64], strides = [1, 1]} : vector<2x224xf32> to vector<2x64xf32>
    %346 = arith.negf %345 : vector<2x64xf32>
    %347 = math.exp %346 : vector<2x64xf32>
    %cst_79 = arith.constant 1.000000e+00 : f32
    %348 = vector.broadcast %cst_79 : f32 to vector<2x64xf32>
    %349 = arith.addf %348, %347 : vector<2x64xf32>
    %350 = arith.divf %348, %349 : vector<2x64xf32>
    %351 = vector.extract_strided_slice %350 {offsets = [0, 0], sizes = [2, 32], strides = [1, 1]} : vector<2x64xf32> to vector<2x32xf32>
    %352 = vector.extract_strided_slice %350 {offsets = [0, 32], sizes = [2, 32], strides = [1, 1]} : vector<2x64xf32> to vector<2x32xf32>
    %353 = vector.extract_strided_slice %344 {offsets = [0, 64], sizes = [2, 32], strides = [1, 1]} : vector<2x224xf32> to vector<2x32xf32>
    %354 = vector.extract_strided_slice %344 {offsets = [0, 96], sizes = [2, 32], strides = [1, 1]} : vector<2x224xf32> to vector<2x32xf32>
    %355 = arith.mulf %351, %354 : vector<2x32xf32>
    %356 = arith.addf %353, %355 : vector<2x32xf32>
    %357 = math.tanh %356 : vector<2x32xf32>
    %cst_80 = arith.constant 1.000000e+00 : f32
    %358 = vector.broadcast %cst_80 : f32 to vector<2x32xf32>
    %359 = arith.subf %358, %352 : vector<2x32xf32>
    %360 = arith.mulf %359, %357 : vector<2x32xf32>
    %361 = arith.mulf %352, %318 : vector<2x32xf32>
    %362 = arith.addf %360, %361 : vector<2x32xf32>
    %363 = vector.extract_strided_slice %344 {offsets = [0, 128], sizes = [2, 96], strides = [1, 1]} : vector<2x224xf32> to vector<2x96xf32>
    %c14 = arith.constant 14 : index
    %c0_81 = arith.constant 0 : index
    %364 = vector.load %arg5[%c14, %c0_81] : memref<48x96xf32, #tpu.memory_space<vmem>>, vector<2x96xf32>
    %365 = vector.extract_strided_slice %364 {offsets = [0, 0], sizes = [2, 64], strides = [1, 1]} : vector<2x96xf32> to vector<2x64xf32>
    %366 = vector.extract_strided_slice %363 {offsets = [0, 0], sizes = [2, 64], strides = [1, 1]} : vector<2x96xf32> to vector<2x64xf32>
    %367 = arith.addf %365, %366 : vector<2x64xf32>
    %368 = arith.negf %367 : vector<2x64xf32>
    %369 = math.exp %368 : vector<2x64xf32>
    %cst_82 = arith.constant 1.000000e+00 : f32
    %370 = vector.broadcast %cst_82 : f32 to vector<2x64xf32>
    %371 = arith.addf %370, %369 : vector<2x64xf32>
    %372 = arith.divf %370, %371 : vector<2x64xf32>
    %373 = vector.extract_strided_slice %372 {offsets = [0, 0], sizes = [2, 32], strides = [1, 1]} : vector<2x64xf32> to vector<2x32xf32>
    %374 = vector.extract_strided_slice %372 {offsets = [0, 32], sizes = [2, 32], strides = [1, 1]} : vector<2x64xf32> to vector<2x32xf32>
    %375 = vector.extract_strided_slice %364 {offsets = [0, 64], sizes = [2, 32], strides = [1, 1]} : vector<2x96xf32> to vector<2x32xf32>
    %376 = vector.extract_strided_slice %363 {offsets = [0, 64], sizes = [2, 32], strides = [1, 1]} : vector<2x96xf32> to vector<2x32xf32>
    %377 = arith.mulf %373, %376 : vector<2x32xf32>
    %378 = arith.addf %375, %377 : vector<2x32xf32>
    %379 = math.tanh %378 : vector<2x32xf32>
    %cst_83 = arith.constant 1.000000e+00 : f32
    %380 = vector.broadcast %cst_83 : f32 to vector<2x32xf32>
    %381 = arith.subf %380, %374 : vector<2x32xf32>
    %382 = arith.mulf %381, %379 : vector<2x32xf32>
    %383 = arith.mulf %374, %340 : vector<2x32xf32>
    %384 = arith.addf %382, %383 : vector<2x32xf32>
    %385 = tpu.concatenate %384, %362 in 1 : vector<2x32xf32>, vector<2x32xf32> -> vector<2x64xf32>
    %cst_84 = arith.constant dense<0.000000e+00> : vector<2x224xf32>
    %386 = tpu.matmul %385, %49, %cst_84 {dimension_numbers = #tpu.dot_dimension_numbers<[1], [0], [0], [1], [0, 0, 1, 1], [], []>} : vector<2x64xf32>, vector<64x224xf32>, vector<2x224xf32> -> vector<2x224xf32>
    %387 = vector.broadcast %50 : vector<1x224xf32> to vector<2x224xf32>
    %388 = arith.addf %386, %387 : vector<2x224xf32>
    %389 = vector.extract_strided_slice %388 {offsets = [0, 0], sizes = [2, 64], strides = [1, 1]} : vector<2x224xf32> to vector<2x64xf32>
    %390 = arith.negf %389 : vector<2x64xf32>
    %391 = math.exp %390 : vector<2x64xf32>
    %cst_85 = arith.constant 1.000000e+00 : f32
    %392 = vector.broadcast %cst_85 : f32 to vector<2x64xf32>
    %393 = arith.addf %392, %391 : vector<2x64xf32>
    %394 = arith.divf %392, %393 : vector<2x64xf32>
    %395 = vector.extract_strided_slice %394 {offsets = [0, 0], sizes = [2, 32], strides = [1, 1]} : vector<2x64xf32> to vector<2x32xf32>
    %396 = vector.extract_strided_slice %394 {offsets = [0, 32], sizes = [2, 32], strides = [1, 1]} : vector<2x64xf32> to vector<2x32xf32>
    %397 = vector.extract_strided_slice %388 {offsets = [0, 64], sizes = [2, 32], strides = [1, 1]} : vector<2x224xf32> to vector<2x32xf32>
    %398 = vector.extract_strided_slice %388 {offsets = [0, 96], sizes = [2, 32], strides = [1, 1]} : vector<2x224xf32> to vector<2x32xf32>
    %399 = arith.mulf %395, %398 : vector<2x32xf32>
    %400 = arith.addf %397, %399 : vector<2x32xf32>
    %401 = math.tanh %400 : vector<2x32xf32>
    %cst_86 = arith.constant 1.000000e+00 : f32
    %402 = vector.broadcast %cst_86 : f32 to vector<2x32xf32>
    %403 = arith.subf %402, %396 : vector<2x32xf32>
    %404 = arith.mulf %403, %401 : vector<2x32xf32>
    %405 = arith.mulf %396, %362 : vector<2x32xf32>
    %406 = arith.addf %404, %405 : vector<2x32xf32>
    %407 = vector.extract_strided_slice %388 {offsets = [0, 128], sizes = [2, 96], strides = [1, 1]} : vector<2x224xf32> to vector<2x96xf32>
    %c16_87 = arith.constant 16 : index
    %c0_88 = arith.constant 0 : index
    %408 = vector.load %arg5[%c16_87, %c0_88] : memref<48x96xf32, #tpu.memory_space<vmem>>, vector<2x96xf32>
    %409 = vector.extract_strided_slice %408 {offsets = [0, 0], sizes = [2, 64], strides = [1, 1]} : vector<2x96xf32> to vector<2x64xf32>
    %410 = vector.extract_strided_slice %407 {offsets = [0, 0], sizes = [2, 64], strides = [1, 1]} : vector<2x96xf32> to vector<2x64xf32>
    %411 = arith.addf %409, %410 : vector<2x64xf32>
    %412 = arith.negf %411 : vector<2x64xf32>
    %413 = math.exp %412 : vector<2x64xf32>
    %cst_89 = arith.constant 1.000000e+00 : f32
    %414 = vector.broadcast %cst_89 : f32 to vector<2x64xf32>
    %415 = arith.addf %414, %413 : vector<2x64xf32>
    %416 = arith.divf %414, %415 : vector<2x64xf32>
    %417 = vector.extract_strided_slice %416 {offsets = [0, 0], sizes = [2, 32], strides = [1, 1]} : vector<2x64xf32> to vector<2x32xf32>
    %418 = vector.extract_strided_slice %416 {offsets = [0, 32], sizes = [2, 32], strides = [1, 1]} : vector<2x64xf32> to vector<2x32xf32>
    %419 = vector.extract_strided_slice %408 {offsets = [0, 64], sizes = [2, 32], strides = [1, 1]} : vector<2x96xf32> to vector<2x32xf32>
    %420 = vector.extract_strided_slice %407 {offsets = [0, 64], sizes = [2, 32], strides = [1, 1]} : vector<2x96xf32> to vector<2x32xf32>
    %421 = arith.mulf %417, %420 : vector<2x32xf32>
    %422 = arith.addf %419, %421 : vector<2x32xf32>
    %423 = math.tanh %422 : vector<2x32xf32>
    %cst_90 = arith.constant 1.000000e+00 : f32
    %424 = vector.broadcast %cst_90 : f32 to vector<2x32xf32>
    %425 = arith.subf %424, %418 : vector<2x32xf32>
    %426 = arith.mulf %425, %423 : vector<2x32xf32>
    %427 = arith.mulf %418, %384 : vector<2x32xf32>
    %428 = arith.addf %426, %427 : vector<2x32xf32>
    %429 = tpu.concatenate %428, %406 in 1 : vector<2x32xf32>, vector<2x32xf32> -> vector<2x64xf32>
    %cst_91 = arith.constant dense<0.000000e+00> : vector<2x224xf32>
    %430 = tpu.matmul %429, %49, %cst_91 {dimension_numbers = #tpu.dot_dimension_numbers<[1], [0], [0], [1], [0, 0, 1, 1], [], []>} : vector<2x64xf32>, vector<64x224xf32>, vector<2x224xf32> -> vector<2x224xf32>
    %431 = vector.broadcast %50 : vector<1x224xf32> to vector<2x224xf32>
    %432 = arith.addf %430, %431 : vector<2x224xf32>
    %433 = vector.extract_strided_slice %432 {offsets = [0, 0], sizes = [2, 64], strides = [1, 1]} : vector<2x224xf32> to vector<2x64xf32>
    %434 = arith.negf %433 : vector<2x64xf32>
    %435 = math.exp %434 : vector<2x64xf32>
    %cst_92 = arith.constant 1.000000e+00 : f32
    %436 = vector.broadcast %cst_92 : f32 to vector<2x64xf32>
    %437 = arith.addf %436, %435 : vector<2x64xf32>
    %438 = arith.divf %436, %437 : vector<2x64xf32>
    %439 = vector.extract_strided_slice %438 {offsets = [0, 0], sizes = [2, 32], strides = [1, 1]} : vector<2x64xf32> to vector<2x32xf32>
    %440 = vector.extract_strided_slice %438 {offsets = [0, 32], sizes = [2, 32], strides = [1, 1]} : vector<2x64xf32> to vector<2x32xf32>
    %441 = vector.extract_strided_slice %432 {offsets = [0, 64], sizes = [2, 32], strides = [1, 1]} : vector<2x224xf32> to vector<2x32xf32>
    %442 = vector.extract_strided_slice %432 {offsets = [0, 96], sizes = [2, 32], strides = [1, 1]} : vector<2x224xf32> to vector<2x32xf32>
    %443 = arith.mulf %439, %442 : vector<2x32xf32>
    %444 = arith.addf %441, %443 : vector<2x32xf32>
    %445 = math.tanh %444 : vector<2x32xf32>
    %cst_93 = arith.constant 1.000000e+00 : f32
    %446 = vector.broadcast %cst_93 : f32 to vector<2x32xf32>
    %447 = arith.subf %446, %440 : vector<2x32xf32>
    %448 = arith.mulf %447, %445 : vector<2x32xf32>
    %449 = arith.mulf %440, %406 : vector<2x32xf32>
    %450 = arith.addf %448, %449 : vector<2x32xf32>
    %451 = vector.extract_strided_slice %432 {offsets = [0, 128], sizes = [2, 96], strides = [1, 1]} : vector<2x224xf32> to vector<2x96xf32>
    %c18 = arith.constant 18 : index
    %c0_94 = arith.constant 0 : index
    %452 = vector.load %arg5[%c18, %c0_94] : memref<48x96xf32, #tpu.memory_space<vmem>>, vector<2x96xf32>
    %453 = vector.extract_strided_slice %452 {offsets = [0, 0], sizes = [2, 64], strides = [1, 1]} : vector<2x96xf32> to vector<2x64xf32>
    %454 = vector.extract_strided_slice %451 {offsets = [0, 0], sizes = [2, 64], strides = [1, 1]} : vector<2x96xf32> to vector<2x64xf32>
    %455 = arith.addf %453, %454 : vector<2x64xf32>
    %456 = arith.negf %455 : vector<2x64xf32>
    %457 = math.exp %456 : vector<2x64xf32>
    %cst_95 = arith.constant 1.000000e+00 : f32
    %458 = vector.broadcast %cst_95 : f32 to vector<2x64xf32>
    %459 = arith.addf %458, %457 : vector<2x64xf32>
    %460 = arith.divf %458, %459 : vector<2x64xf32>
    %461 = vector.extract_strided_slice %460 {offsets = [0, 0], sizes = [2, 32], strides = [1, 1]} : vector<2x64xf32> to vector<2x32xf32>
    %462 = vector.extract_strided_slice %460 {offsets = [0, 32], sizes = [2, 32], strides = [1, 1]} : vector<2x64xf32> to vector<2x32xf32>
    %463 = vector.extract_strided_slice %452 {offsets = [0, 64], sizes = [2, 32], strides = [1, 1]} : vector<2x96xf32> to vector<2x32xf32>
    %464 = vector.extract_strided_slice %451 {offsets = [0, 64], sizes = [2, 32], strides = [1, 1]} : vector<2x96xf32> to vector<2x32xf32>
    %465 = arith.mulf %461, %464 : vector<2x32xf32>
    %466 = arith.addf %463, %465 : vector<2x32xf32>
    %467 = math.tanh %466 : vector<2x32xf32>
    %cst_96 = arith.constant 1.000000e+00 : f32
    %468 = vector.broadcast %cst_96 : f32 to vector<2x32xf32>
    %469 = arith.subf %468, %462 : vector<2x32xf32>
    %470 = arith.mulf %469, %467 : vector<2x32xf32>
    %471 = arith.mulf %462, %428 : vector<2x32xf32>
    %472 = arith.addf %470, %471 : vector<2x32xf32>
    %473 = tpu.concatenate %472, %450 in 1 : vector<2x32xf32>, vector<2x32xf32> -> vector<2x64xf32>
    %cst_97 = arith.constant dense<0.000000e+00> : vector<2x224xf32>
    %474 = tpu.matmul %473, %49, %cst_97 {dimension_numbers = #tpu.dot_dimension_numbers<[1], [0], [0], [1], [0, 0, 1, 1], [], []>} : vector<2x64xf32>, vector<64x224xf32>, vector<2x224xf32> -> vector<2x224xf32>
    %475 = vector.broadcast %50 : vector<1x224xf32> to vector<2x224xf32>
    %476 = arith.addf %474, %475 : vector<2x224xf32>
    %477 = vector.extract_strided_slice %476 {offsets = [0, 0], sizes = [2, 64], strides = [1, 1]} : vector<2x224xf32> to vector<2x64xf32>
    %478 = arith.negf %477 : vector<2x64xf32>
    %479 = math.exp %478 : vector<2x64xf32>
    %cst_98 = arith.constant 1.000000e+00 : f32
    %480 = vector.broadcast %cst_98 : f32 to vector<2x64xf32>
    %481 = arith.addf %480, %479 : vector<2x64xf32>
    %482 = arith.divf %480, %481 : vector<2x64xf32>
    %483 = vector.extract_strided_slice %482 {offsets = [0, 0], sizes = [2, 32], strides = [1, 1]} : vector<2x64xf32> to vector<2x32xf32>
    %484 = vector.extract_strided_slice %482 {offsets = [0, 32], sizes = [2, 32], strides = [1, 1]} : vector<2x64xf32> to vector<2x32xf32>
    %485 = vector.extract_strided_slice %476 {offsets = [0, 64], sizes = [2, 32], strides = [1, 1]} : vector<2x224xf32> to vector<2x32xf32>
    %486 = vector.extract_strided_slice %476 {offsets = [0, 96], sizes = [2, 32], strides = [1, 1]} : vector<2x224xf32> to vector<2x32xf32>
    %487 = arith.mulf %483, %486 : vector<2x32xf32>
    %488 = arith.addf %485, %487 : vector<2x32xf32>
    %489 = math.tanh %488 : vector<2x32xf32>
    %cst_99 = arith.constant 1.000000e+00 : f32
    %490 = vector.broadcast %cst_99 : f32 to vector<2x32xf32>
    %491 = arith.subf %490, %484 : vector<2x32xf32>
    %492 = arith.mulf %491, %489 : vector<2x32xf32>
    %493 = arith.mulf %484, %450 : vector<2x32xf32>
    %494 = arith.addf %492, %493 : vector<2x32xf32>
    %495 = vector.extract_strided_slice %476 {offsets = [0, 128], sizes = [2, 96], strides = [1, 1]} : vector<2x224xf32> to vector<2x96xf32>
    %c20 = arith.constant 20 : index
    %c0_100 = arith.constant 0 : index
    %496 = vector.load %arg5[%c20, %c0_100] : memref<48x96xf32, #tpu.memory_space<vmem>>, vector<2x96xf32>
    %497 = vector.extract_strided_slice %496 {offsets = [0, 0], sizes = [2, 64], strides = [1, 1]} : vector<2x96xf32> to vector<2x64xf32>
    %498 = vector.extract_strided_slice %495 {offsets = [0, 0], sizes = [2, 64], strides = [1, 1]} : vector<2x96xf32> to vector<2x64xf32>
    %499 = arith.addf %497, %498 : vector<2x64xf32>
    %500 = arith.negf %499 : vector<2x64xf32>
    %501 = math.exp %500 : vector<2x64xf32>
    %cst_101 = arith.constant 1.000000e+00 : f32
    %502 = vector.broadcast %cst_101 : f32 to vector<2x64xf32>
    %503 = arith.addf %502, %501 : vector<2x64xf32>
    %504 = arith.divf %502, %503 : vector<2x64xf32>
    %505 = vector.extract_strided_slice %504 {offsets = [0, 0], sizes = [2, 32], strides = [1, 1]} : vector<2x64xf32> to vector<2x32xf32>
    %506 = vector.extract_strided_slice %504 {offsets = [0, 32], sizes = [2, 32], strides = [1, 1]} : vector<2x64xf32> to vector<2x32xf32>
    %507 = vector.extract_strided_slice %496 {offsets = [0, 64], sizes = [2, 32], strides = [1, 1]} : vector<2x96xf32> to vector<2x32xf32>
    %508 = vector.extract_strided_slice %495 {offsets = [0, 64], sizes = [2, 32], strides = [1, 1]} : vector<2x96xf32> to vector<2x32xf32>
    %509 = arith.mulf %505, %508 : vector<2x32xf32>
    %510 = arith.addf %507, %509 : vector<2x32xf32>
    %511 = math.tanh %510 : vector<2x32xf32>
    %cst_102 = arith.constant 1.000000e+00 : f32
    %512 = vector.broadcast %cst_102 : f32 to vector<2x32xf32>
    %513 = arith.subf %512, %506 : vector<2x32xf32>
    %514 = arith.mulf %513, %511 : vector<2x32xf32>
    %515 = arith.mulf %506, %472 : vector<2x32xf32>
    %516 = arith.addf %514, %515 : vector<2x32xf32>
    %517 = tpu.concatenate %516, %494 in 1 : vector<2x32xf32>, vector<2x32xf32> -> vector<2x64xf32>
    %cst_103 = arith.constant dense<0.000000e+00> : vector<2x224xf32>
    %518 = tpu.matmul %517, %49, %cst_103 {dimension_numbers = #tpu.dot_dimension_numbers<[1], [0], [0], [1], [0, 0, 1, 1], [], []>} : vector<2x64xf32>, vector<64x224xf32>, vector<2x224xf32> -> vector<2x224xf32>
    %519 = vector.broadcast %50 : vector<1x224xf32> to vector<2x224xf32>
    %520 = arith.addf %518, %519 : vector<2x224xf32>
    %521 = vector.extract_strided_slice %520 {offsets = [0, 0], sizes = [2, 64], strides = [1, 1]} : vector<2x224xf32> to vector<2x64xf32>
    %522 = arith.negf %521 : vector<2x64xf32>
    %523 = math.exp %522 : vector<2x64xf32>
    %cst_104 = arith.constant 1.000000e+00 : f32
    %524 = vector.broadcast %cst_104 : f32 to vector<2x64xf32>
    %525 = arith.addf %524, %523 : vector<2x64xf32>
    %526 = arith.divf %524, %525 : vector<2x64xf32>
    %527 = vector.extract_strided_slice %526 {offsets = [0, 0], sizes = [2, 32], strides = [1, 1]} : vector<2x64xf32> to vector<2x32xf32>
    %528 = vector.extract_strided_slice %526 {offsets = [0, 32], sizes = [2, 32], strides = [1, 1]} : vector<2x64xf32> to vector<2x32xf32>
    %529 = vector.extract_strided_slice %520 {offsets = [0, 64], sizes = [2, 32], strides = [1, 1]} : vector<2x224xf32> to vector<2x32xf32>
    %530 = vector.extract_strided_slice %520 {offsets = [0, 96], sizes = [2, 32], strides = [1, 1]} : vector<2x224xf32> to vector<2x32xf32>
    %531 = arith.mulf %527, %530 : vector<2x32xf32>
    %532 = arith.addf %529, %531 : vector<2x32xf32>
    %533 = math.tanh %532 : vector<2x32xf32>
    %cst_105 = arith.constant 1.000000e+00 : f32
    %534 = vector.broadcast %cst_105 : f32 to vector<2x32xf32>
    %535 = arith.subf %534, %528 : vector<2x32xf32>
    %536 = arith.mulf %535, %533 : vector<2x32xf32>
    %537 = arith.mulf %528, %494 : vector<2x32xf32>
    %538 = arith.addf %536, %537 : vector<2x32xf32>
    %539 = vector.extract_strided_slice %520 {offsets = [0, 128], sizes = [2, 96], strides = [1, 1]} : vector<2x224xf32> to vector<2x96xf32>
    %c22 = arith.constant 22 : index
    %c0_106 = arith.constant 0 : index
    %540 = vector.load %arg5[%c22, %c0_106] : memref<48x96xf32, #tpu.memory_space<vmem>>, vector<2x96xf32>
    %541 = vector.extract_strided_slice %540 {offsets = [0, 0], sizes = [2, 64], strides = [1, 1]} : vector<2x96xf32> to vector<2x64xf32>
    %542 = vector.extract_strided_slice %539 {offsets = [0, 0], sizes = [2, 64], strides = [1, 1]} : vector<2x96xf32> to vector<2x64xf32>
    %543 = arith.addf %541, %542 : vector<2x64xf32>
    %544 = arith.negf %543 : vector<2x64xf32>
    %545 = math.exp %544 : vector<2x64xf32>
    %cst_107 = arith.constant 1.000000e+00 : f32
    %546 = vector.broadcast %cst_107 : f32 to vector<2x64xf32>
    %547 = arith.addf %546, %545 : vector<2x64xf32>
    %548 = arith.divf %546, %547 : vector<2x64xf32>
    %549 = vector.extract_strided_slice %548 {offsets = [0, 0], sizes = [2, 32], strides = [1, 1]} : vector<2x64xf32> to vector<2x32xf32>
    %550 = vector.extract_strided_slice %548 {offsets = [0, 32], sizes = [2, 32], strides = [1, 1]} : vector<2x64xf32> to vector<2x32xf32>
    %551 = vector.extract_strided_slice %540 {offsets = [0, 64], sizes = [2, 32], strides = [1, 1]} : vector<2x96xf32> to vector<2x32xf32>
    %552 = vector.extract_strided_slice %539 {offsets = [0, 64], sizes = [2, 32], strides = [1, 1]} : vector<2x96xf32> to vector<2x32xf32>
    %553 = arith.mulf %549, %552 : vector<2x32xf32>
    %554 = arith.addf %551, %553 : vector<2x32xf32>
    %555 = math.tanh %554 : vector<2x32xf32>
    %cst_108 = arith.constant 1.000000e+00 : f32
    %556 = vector.broadcast %cst_108 : f32 to vector<2x32xf32>
    %557 = arith.subf %556, %550 : vector<2x32xf32>
    %558 = arith.mulf %557, %555 : vector<2x32xf32>
    %559 = arith.mulf %550, %516 : vector<2x32xf32>
    %560 = arith.addf %558, %559 : vector<2x32xf32>
    %561 = tpu.concatenate %560, %538 in 1 : vector<2x32xf32>, vector<2x32xf32> -> vector<2x64xf32>
    %cst_109 = arith.constant dense<0.000000e+00> : vector<2x224xf32>
    %562 = tpu.matmul %561, %49, %cst_109 {dimension_numbers = #tpu.dot_dimension_numbers<[1], [0], [0], [1], [0, 0, 1, 1], [], []>} : vector<2x64xf32>, vector<64x224xf32>, vector<2x224xf32> -> vector<2x224xf32>
    %563 = vector.broadcast %50 : vector<1x224xf32> to vector<2x224xf32>
    %564 = arith.addf %562, %563 : vector<2x224xf32>
    %565 = vector.extract_strided_slice %564 {offsets = [0, 0], sizes = [2, 64], strides = [1, 1]} : vector<2x224xf32> to vector<2x64xf32>
    %566 = arith.negf %565 : vector<2x64xf32>
    %567 = math.exp %566 : vector<2x64xf32>
    %cst_110 = arith.constant 1.000000e+00 : f32
    %568 = vector.broadcast %cst_110 : f32 to vector<2x64xf32>
    %569 = arith.addf %568, %567 : vector<2x64xf32>
    %570 = arith.divf %568, %569 : vector<2x64xf32>
    %571 = vector.extract_strided_slice %570 {offsets = [0, 0], sizes = [2, 32], strides = [1, 1]} : vector<2x64xf32> to vector<2x32xf32>
    %572 = vector.extract_strided_slice %570 {offsets = [0, 32], sizes = [2, 32], strides = [1, 1]} : vector<2x64xf32> to vector<2x32xf32>
    %573 = vector.extract_strided_slice %564 {offsets = [0, 64], sizes = [2, 32], strides = [1, 1]} : vector<2x224xf32> to vector<2x32xf32>
    %574 = vector.extract_strided_slice %564 {offsets = [0, 96], sizes = [2, 32], strides = [1, 1]} : vector<2x224xf32> to vector<2x32xf32>
    %575 = arith.mulf %571, %574 : vector<2x32xf32>
    %576 = arith.addf %573, %575 : vector<2x32xf32>
    %577 = math.tanh %576 : vector<2x32xf32>
    %cst_111 = arith.constant 1.000000e+00 : f32
    %578 = vector.broadcast %cst_111 : f32 to vector<2x32xf32>
    %579 = arith.subf %578, %572 : vector<2x32xf32>
    %580 = arith.mulf %579, %577 : vector<2x32xf32>
    %581 = arith.mulf %572, %538 : vector<2x32xf32>
    %582 = arith.addf %580, %581 : vector<2x32xf32>
    %583 = vector.extract_strided_slice %564 {offsets = [0, 128], sizes = [2, 96], strides = [1, 1]} : vector<2x224xf32> to vector<2x96xf32>
    %c24_112 = arith.constant 24 : index
    %c0_113 = arith.constant 0 : index
    %584 = vector.load %arg5[%c24_112, %c0_113] : memref<48x96xf32, #tpu.memory_space<vmem>>, vector<2x96xf32>
    %585 = vector.extract_strided_slice %584 {offsets = [0, 0], sizes = [2, 64], strides = [1, 1]} : vector<2x96xf32> to vector<2x64xf32>
    %586 = vector.extract_strided_slice %583 {offsets = [0, 0], sizes = [2, 64], strides = [1, 1]} : vector<2x96xf32> to vector<2x64xf32>
    %587 = arith.addf %585, %586 : vector<2x64xf32>
    %588 = arith.negf %587 : vector<2x64xf32>
    %589 = math.exp %588 : vector<2x64xf32>
    %cst_114 = arith.constant 1.000000e+00 : f32
    %590 = vector.broadcast %cst_114 : f32 to vector<2x64xf32>
    %591 = arith.addf %590, %589 : vector<2x64xf32>
    %592 = arith.divf %590, %591 : vector<2x64xf32>
    %593 = vector.extract_strided_slice %592 {offsets = [0, 0], sizes = [2, 32], strides = [1, 1]} : vector<2x64xf32> to vector<2x32xf32>
    %594 = vector.extract_strided_slice %592 {offsets = [0, 32], sizes = [2, 32], strides = [1, 1]} : vector<2x64xf32> to vector<2x32xf32>
    %595 = vector.extract_strided_slice %584 {offsets = [0, 64], sizes = [2, 32], strides = [1, 1]} : vector<2x96xf32> to vector<2x32xf32>
    %596 = vector.extract_strided_slice %583 {offsets = [0, 64], sizes = [2, 32], strides = [1, 1]} : vector<2x96xf32> to vector<2x32xf32>
    %597 = arith.mulf %593, %596 : vector<2x32xf32>
    %598 = arith.addf %595, %597 : vector<2x32xf32>
    %599 = math.tanh %598 : vector<2x32xf32>
    %cst_115 = arith.constant 1.000000e+00 : f32
    %600 = vector.broadcast %cst_115 : f32 to vector<2x32xf32>
    %601 = arith.subf %600, %594 : vector<2x32xf32>
    %602 = arith.mulf %601, %599 : vector<2x32xf32>
    %603 = arith.mulf %594, %560 : vector<2x32xf32>
    %604 = arith.addf %602, %603 : vector<2x32xf32>
    %605 = tpu.concatenate %604, %582 in 1 : vector<2x32xf32>, vector<2x32xf32> -> vector<2x64xf32>
    %cst_116 = arith.constant dense<0.000000e+00> : vector<2x224xf32>
    %606 = tpu.matmul %605, %49, %cst_116 {dimension_numbers = #tpu.dot_dimension_numbers<[1], [0], [0], [1], [0, 0, 1, 1], [], []>} : vector<2x64xf32>, vector<64x224xf32>, vector<2x224xf32> -> vector<2x224xf32>
    %607 = vector.broadcast %50 : vector<1x224xf32> to vector<2x224xf32>
    %608 = arith.addf %606, %607 : vector<2x224xf32>
    %609 = vector.extract_strided_slice %608 {offsets = [0, 0], sizes = [2, 64], strides = [1, 1]} : vector<2x224xf32> to vector<2x64xf32>
    %610 = arith.negf %609 : vector<2x64xf32>
    %611 = math.exp %610 : vector<2x64xf32>
    %cst_117 = arith.constant 1.000000e+00 : f32
    %612 = vector.broadcast %cst_117 : f32 to vector<2x64xf32>
    %613 = arith.addf %612, %611 : vector<2x64xf32>
    %614 = arith.divf %612, %613 : vector<2x64xf32>
    %615 = vector.extract_strided_slice %614 {offsets = [0, 0], sizes = [2, 32], strides = [1, 1]} : vector<2x64xf32> to vector<2x32xf32>
    %616 = vector.extract_strided_slice %614 {offsets = [0, 32], sizes = [2, 32], strides = [1, 1]} : vector<2x64xf32> to vector<2x32xf32>
    %617 = vector.extract_strided_slice %608 {offsets = [0, 64], sizes = [2, 32], strides = [1, 1]} : vector<2x224xf32> to vector<2x32xf32>
    %618 = vector.extract_strided_slice %608 {offsets = [0, 96], sizes = [2, 32], strides = [1, 1]} : vector<2x224xf32> to vector<2x32xf32>
    %619 = arith.mulf %615, %618 : vector<2x32xf32>
    %620 = arith.addf %617, %619 : vector<2x32xf32>
    %621 = math.tanh %620 : vector<2x32xf32>
    %cst_118 = arith.constant 1.000000e+00 : f32
    %622 = vector.broadcast %cst_118 : f32 to vector<2x32xf32>
    %623 = arith.subf %622, %616 : vector<2x32xf32>
    %624 = arith.mulf %623, %621 : vector<2x32xf32>
    %625 = arith.mulf %616, %582 : vector<2x32xf32>
    %626 = arith.addf %624, %625 : vector<2x32xf32>
    %627 = vector.extract_strided_slice %608 {offsets = [0, 128], sizes = [2, 96], strides = [1, 1]} : vector<2x224xf32> to vector<2x96xf32>
    %c26 = arith.constant 26 : index
    %c0_119 = arith.constant 0 : index
    %628 = vector.load %arg5[%c26, %c0_119] : memref<48x96xf32, #tpu.memory_space<vmem>>, vector<2x96xf32>
    %629 = vector.extract_strided_slice %628 {offsets = [0, 0], sizes = [2, 64], strides = [1, 1]} : vector<2x96xf32> to vector<2x64xf32>
    %630 = vector.extract_strided_slice %627 {offsets = [0, 0], sizes = [2, 64], strides = [1, 1]} : vector<2x96xf32> to vector<2x64xf32>
    %631 = arith.addf %629, %630 : vector<2x64xf32>
    %632 = arith.negf %631 : vector<2x64xf32>
    %633 = math.exp %632 : vector<2x64xf32>
    %cst_120 = arith.constant 1.000000e+00 : f32
    %634 = vector.broadcast %cst_120 : f32 to vector<2x64xf32>
    %635 = arith.addf %634, %633 : vector<2x64xf32>
    %636 = arith.divf %634, %635 : vector<2x64xf32>
    %637 = vector.extract_strided_slice %636 {offsets = [0, 0], sizes = [2, 32], strides = [1, 1]} : vector<2x64xf32> to vector<2x32xf32>
    %638 = vector.extract_strided_slice %636 {offsets = [0, 32], sizes = [2, 32], strides = [1, 1]} : vector<2x64xf32> to vector<2x32xf32>
    %639 = vector.extract_strided_slice %628 {offsets = [0, 64], sizes = [2, 32], strides = [1, 1]} : vector<2x96xf32> to vector<2x32xf32>
    %640 = vector.extract_strided_slice %627 {offsets = [0, 64], sizes = [2, 32], strides = [1, 1]} : vector<2x96xf32> to vector<2x32xf32>
    %641 = arith.mulf %637, %640 : vector<2x32xf32>
    %642 = arith.addf %639, %641 : vector<2x32xf32>
    %643 = math.tanh %642 : vector<2x32xf32>
    %cst_121 = arith.constant 1.000000e+00 : f32
    %644 = vector.broadcast %cst_121 : f32 to vector<2x32xf32>
    %645 = arith.subf %644, %638 : vector<2x32xf32>
    %646 = arith.mulf %645, %643 : vector<2x32xf32>
    %647 = arith.mulf %638, %604 : vector<2x32xf32>
    %648 = arith.addf %646, %647 : vector<2x32xf32>
    %649 = tpu.concatenate %648, %626 in 1 : vector<2x32xf32>, vector<2x32xf32> -> vector<2x64xf32>
    %cst_122 = arith.constant dense<0.000000e+00> : vector<2x224xf32>
    %650 = tpu.matmul %649, %49, %cst_122 {dimension_numbers = #tpu.dot_dimension_numbers<[1], [0], [0], [1], [0, 0, 1, 1], [], []>} : vector<2x64xf32>, vector<64x224xf32>, vector<2x224xf32> -> vector<2x224xf32>
    %651 = vector.broadcast %50 : vector<1x224xf32> to vector<2x224xf32>
    %652 = arith.addf %650, %651 : vector<2x224xf32>
    %653 = vector.extract_strided_slice %652 {offsets = [0, 0], sizes = [2, 64], strides = [1, 1]} : vector<2x224xf32> to vector<2x64xf32>
    %654 = arith.negf %653 : vector<2x64xf32>
    %655 = math.exp %654 : vector<2x64xf32>
    %cst_123 = arith.constant 1.000000e+00 : f32
    %656 = vector.broadcast %cst_123 : f32 to vector<2x64xf32>
    %657 = arith.addf %656, %655 : vector<2x64xf32>
    %658 = arith.divf %656, %657 : vector<2x64xf32>
    %659 = vector.extract_strided_slice %658 {offsets = [0, 0], sizes = [2, 32], strides = [1, 1]} : vector<2x64xf32> to vector<2x32xf32>
    %660 = vector.extract_strided_slice %658 {offsets = [0, 32], sizes = [2, 32], strides = [1, 1]} : vector<2x64xf32> to vector<2x32xf32>
    %661 = vector.extract_strided_slice %652 {offsets = [0, 64], sizes = [2, 32], strides = [1, 1]} : vector<2x224xf32> to vector<2x32xf32>
    %662 = vector.extract_strided_slice %652 {offsets = [0, 96], sizes = [2, 32], strides = [1, 1]} : vector<2x224xf32> to vector<2x32xf32>
    %663 = arith.mulf %659, %662 : vector<2x32xf32>
    %664 = arith.addf %661, %663 : vector<2x32xf32>
    %665 = math.tanh %664 : vector<2x32xf32>
    %cst_124 = arith.constant 1.000000e+00 : f32
    %666 = vector.broadcast %cst_124 : f32 to vector<2x32xf32>
    %667 = arith.subf %666, %660 : vector<2x32xf32>
    %668 = arith.mulf %667, %665 : vector<2x32xf32>
    %669 = arith.mulf %660, %626 : vector<2x32xf32>
    %670 = arith.addf %668, %669 : vector<2x32xf32>
    %671 = vector.extract_strided_slice %652 {offsets = [0, 128], sizes = [2, 96], strides = [1, 1]} : vector<2x224xf32> to vector<2x96xf32>
    %c28 = arith.constant 28 : index
    %c0_125 = arith.constant 0 : index
    %672 = vector.load %arg5[%c28, %c0_125] : memref<48x96xf32, #tpu.memory_space<vmem>>, vector<2x96xf32>
    %673 = vector.extract_strided_slice %672 {offsets = [0, 0], sizes = [2, 64], strides = [1, 1]} : vector<2x96xf32> to vector<2x64xf32>
    %674 = vector.extract_strided_slice %671 {offsets = [0, 0], sizes = [2, 64], strides = [1, 1]} : vector<2x96xf32> to vector<2x64xf32>
    %675 = arith.addf %673, %674 : vector<2x64xf32>
    %676 = arith.negf %675 : vector<2x64xf32>
    %677 = math.exp %676 : vector<2x64xf32>
    %cst_126 = arith.constant 1.000000e+00 : f32
    %678 = vector.broadcast %cst_126 : f32 to vector<2x64xf32>
    %679 = arith.addf %678, %677 : vector<2x64xf32>
    %680 = arith.divf %678, %679 : vector<2x64xf32>
    %681 = vector.extract_strided_slice %680 {offsets = [0, 0], sizes = [2, 32], strides = [1, 1]} : vector<2x64xf32> to vector<2x32xf32>
    %682 = vector.extract_strided_slice %680 {offsets = [0, 32], sizes = [2, 32], strides = [1, 1]} : vector<2x64xf32> to vector<2x32xf32>
    %683 = vector.extract_strided_slice %672 {offsets = [0, 64], sizes = [2, 32], strides = [1, 1]} : vector<2x96xf32> to vector<2x32xf32>
    %684 = vector.extract_strided_slice %671 {offsets = [0, 64], sizes = [2, 32], strides = [1, 1]} : vector<2x96xf32> to vector<2x32xf32>
    %685 = arith.mulf %681, %684 : vector<2x32xf32>
    %686 = arith.addf %683, %685 : vector<2x32xf32>
    %687 = math.tanh %686 : vector<2x32xf32>
    %cst_127 = arith.constant 1.000000e+00 : f32
    %688 = vector.broadcast %cst_127 : f32 to vector<2x32xf32>
    %689 = arith.subf %688, %682 : vector<2x32xf32>
    %690 = arith.mulf %689, %687 : vector<2x32xf32>
    %691 = arith.mulf %682, %648 : vector<2x32xf32>
    %692 = arith.addf %690, %691 : vector<2x32xf32>
    %693 = tpu.concatenate %692, %670 in 1 : vector<2x32xf32>, vector<2x32xf32> -> vector<2x64xf32>
    %cst_128 = arith.constant dense<0.000000e+00> : vector<2x224xf32>
    %694 = tpu.matmul %693, %49, %cst_128 {dimension_numbers = #tpu.dot_dimension_numbers<[1], [0], [0], [1], [0, 0, 1, 1], [], []>} : vector<2x64xf32>, vector<64x224xf32>, vector<2x224xf32> -> vector<2x224xf32>
    %695 = vector.broadcast %50 : vector<1x224xf32> to vector<2x224xf32>
    %696 = arith.addf %694, %695 : vector<2x224xf32>
    %697 = vector.extract_strided_slice %696 {offsets = [0, 0], sizes = [2, 64], strides = [1, 1]} : vector<2x224xf32> to vector<2x64xf32>
    %698 = arith.negf %697 : vector<2x64xf32>
    %699 = math.exp %698 : vector<2x64xf32>
    %cst_129 = arith.constant 1.000000e+00 : f32
    %700 = vector.broadcast %cst_129 : f32 to vector<2x64xf32>
    %701 = arith.addf %700, %699 : vector<2x64xf32>
    %702 = arith.divf %700, %701 : vector<2x64xf32>
    %703 = vector.extract_strided_slice %702 {offsets = [0, 0], sizes = [2, 32], strides = [1, 1]} : vector<2x64xf32> to vector<2x32xf32>
    %704 = vector.extract_strided_slice %702 {offsets = [0, 32], sizes = [2, 32], strides = [1, 1]} : vector<2x64xf32> to vector<2x32xf32>
    %705 = vector.extract_strided_slice %696 {offsets = [0, 64], sizes = [2, 32], strides = [1, 1]} : vector<2x224xf32> to vector<2x32xf32>
    %706 = vector.extract_strided_slice %696 {offsets = [0, 96], sizes = [2, 32], strides = [1, 1]} : vector<2x224xf32> to vector<2x32xf32>
    %707 = arith.mulf %703, %706 : vector<2x32xf32>
    %708 = arith.addf %705, %707 : vector<2x32xf32>
    %709 = math.tanh %708 : vector<2x32xf32>
    %cst_130 = arith.constant 1.000000e+00 : f32
    %710 = vector.broadcast %cst_130 : f32 to vector<2x32xf32>
    %711 = arith.subf %710, %704 : vector<2x32xf32>
    %712 = arith.mulf %711, %709 : vector<2x32xf32>
    %713 = arith.mulf %704, %670 : vector<2x32xf32>
    %714 = arith.addf %712, %713 : vector<2x32xf32>
    %715 = vector.extract_strided_slice %696 {offsets = [0, 128], sizes = [2, 96], strides = [1, 1]} : vector<2x224xf32> to vector<2x96xf32>
    %c30 = arith.constant 30 : index
    %c0_131 = arith.constant 0 : index
    %716 = vector.load %arg5[%c30, %c0_131] : memref<48x96xf32, #tpu.memory_space<vmem>>, vector<2x96xf32>
    %717 = vector.extract_strided_slice %716 {offsets = [0, 0], sizes = [2, 64], strides = [1, 1]} : vector<2x96xf32> to vector<2x64xf32>
    %718 = vector.extract_strided_slice %715 {offsets = [0, 0], sizes = [2, 64], strides = [1, 1]} : vector<2x96xf32> to vector<2x64xf32>
    %719 = arith.addf %717, %718 : vector<2x64xf32>
    %720 = arith.negf %719 : vector<2x64xf32>
    %721 = math.exp %720 : vector<2x64xf32>
    %cst_132 = arith.constant 1.000000e+00 : f32
    %722 = vector.broadcast %cst_132 : f32 to vector<2x64xf32>
    %723 = arith.addf %722, %721 : vector<2x64xf32>
    %724 = arith.divf %722, %723 : vector<2x64xf32>
    %725 = vector.extract_strided_slice %724 {offsets = [0, 0], sizes = [2, 32], strides = [1, 1]} : vector<2x64xf32> to vector<2x32xf32>
    %726 = vector.extract_strided_slice %724 {offsets = [0, 32], sizes = [2, 32], strides = [1, 1]} : vector<2x64xf32> to vector<2x32xf32>
    %727 = vector.extract_strided_slice %716 {offsets = [0, 64], sizes = [2, 32], strides = [1, 1]} : vector<2x96xf32> to vector<2x32xf32>
    %728 = vector.extract_strided_slice %715 {offsets = [0, 64], sizes = [2, 32], strides = [1, 1]} : vector<2x96xf32> to vector<2x32xf32>
    %729 = arith.mulf %725, %728 : vector<2x32xf32>
    %730 = arith.addf %727, %729 : vector<2x32xf32>
    %731 = math.tanh %730 : vector<2x32xf32>
    %cst_133 = arith.constant 1.000000e+00 : f32
    %732 = vector.broadcast %cst_133 : f32 to vector<2x32xf32>
    %733 = arith.subf %732, %726 : vector<2x32xf32>
    %734 = arith.mulf %733, %731 : vector<2x32xf32>
    %735 = arith.mulf %726, %692 : vector<2x32xf32>
    %736 = arith.addf %734, %735 : vector<2x32xf32>
    %737 = tpu.concatenate %736, %714 in 1 : vector<2x32xf32>, vector<2x32xf32> -> vector<2x64xf32>
    %cst_134 = arith.constant dense<0.000000e+00> : vector<2x224xf32>
    %738 = tpu.matmul %737, %49, %cst_134 {dimension_numbers = #tpu.dot_dimension_numbers<[1], [0], [0], [1], [0, 0, 1, 1], [], []>} : vector<2x64xf32>, vector<64x224xf32>, vector<2x224xf32> -> vector<2x224xf32>
    %739 = vector.broadcast %50 : vector<1x224xf32> to vector<2x224xf32>
    %740 = arith.addf %738, %739 : vector<2x224xf32>
    %741 = vector.extract_strided_slice %740 {offsets = [0, 0], sizes = [2, 64], strides = [1, 1]} : vector<2x224xf32> to vector<2x64xf32>
    %742 = arith.negf %741 : vector<2x64xf32>
    %743 = math.exp %742 : vector<2x64xf32>
    %cst_135 = arith.constant 1.000000e+00 : f32
    %744 = vector.broadcast %cst_135 : f32 to vector<2x64xf32>
    %745 = arith.addf %744, %743 : vector<2x64xf32>
    %746 = arith.divf %744, %745 : vector<2x64xf32>
    %747 = vector.extract_strided_slice %746 {offsets = [0, 0], sizes = [2, 32], strides = [1, 1]} : vector<2x64xf32> to vector<2x32xf32>
    %748 = vector.extract_strided_slice %746 {offsets = [0, 32], sizes = [2, 32], strides = [1, 1]} : vector<2x64xf32> to vector<2x32xf32>
    %749 = vector.extract_strided_slice %740 {offsets = [0, 64], sizes = [2, 32], strides = [1, 1]} : vector<2x224xf32> to vector<2x32xf32>
    %750 = vector.extract_strided_slice %740 {offsets = [0, 96], sizes = [2, 32], strides = [1, 1]} : vector<2x224xf32> to vector<2x32xf32>
    %751 = arith.mulf %747, %750 : vector<2x32xf32>
    %752 = arith.addf %749, %751 : vector<2x32xf32>
    %753 = math.tanh %752 : vector<2x32xf32>
    %cst_136 = arith.constant 1.000000e+00 : f32
    %754 = vector.broadcast %cst_136 : f32 to vector<2x32xf32>
    %755 = arith.subf %754, %748 : vector<2x32xf32>
    %756 = arith.mulf %755, %753 : vector<2x32xf32>
    %757 = arith.mulf %748, %714 : vector<2x32xf32>
    %758 = arith.addf %756, %757 : vector<2x32xf32>
    %759 = vector.extract_strided_slice %740 {offsets = [0, 128], sizes = [2, 96], strides = [1, 1]} : vector<2x224xf32> to vector<2x96xf32>
    %c32_137 = arith.constant 32 : index
    %c0_138 = arith.constant 0 : index
    %760 = vector.load %arg5[%c32_137, %c0_138] : memref<48x96xf32, #tpu.memory_space<vmem>>, vector<2x96xf32>
    %761 = vector.extract_strided_slice %760 {offsets = [0, 0], sizes = [2, 64], strides = [1, 1]} : vector<2x96xf32> to vector<2x64xf32>
    %762 = vector.extract_strided_slice %759 {offsets = [0, 0], sizes = [2, 64], strides = [1, 1]} : vector<2x96xf32> to vector<2x64xf32>
    %763 = arith.addf %761, %762 : vector<2x64xf32>
    %764 = arith.negf %763 : vector<2x64xf32>
    %765 = math.exp %764 : vector<2x64xf32>
    %cst_139 = arith.constant 1.000000e+00 : f32
    %766 = vector.broadcast %cst_139 : f32 to vector<2x64xf32>
    %767 = arith.addf %766, %765 : vector<2x64xf32>
    %768 = arith.divf %766, %767 : vector<2x64xf32>
    %769 = vector.extract_strided_slice %768 {offsets = [0, 0], sizes = [2, 32], strides = [1, 1]} : vector<2x64xf32> to vector<2x32xf32>
    %770 = vector.extract_strided_slice %768 {offsets = [0, 32], sizes = [2, 32], strides = [1, 1]} : vector<2x64xf32> to vector<2x32xf32>
    %771 = vector.extract_strided_slice %760 {offsets = [0, 64], sizes = [2, 32], strides = [1, 1]} : vector<2x96xf32> to vector<2x32xf32>
    %772 = vector.extract_strided_slice %759 {offsets = [0, 64], sizes = [2, 32], strides = [1, 1]} : vector<2x96xf32> to vector<2x32xf32>
    %773 = arith.mulf %769, %772 : vector<2x32xf32>
    %774 = arith.addf %771, %773 : vector<2x32xf32>
    %775 = math.tanh %774 : vector<2x32xf32>
    %cst_140 = arith.constant 1.000000e+00 : f32
    %776 = vector.broadcast %cst_140 : f32 to vector<2x32xf32>
    %777 = arith.subf %776, %770 : vector<2x32xf32>
    %778 = arith.mulf %777, %775 : vector<2x32xf32>
    %779 = arith.mulf %770, %736 : vector<2x32xf32>
    %780 = arith.addf %778, %779 : vector<2x32xf32>
    %781 = tpu.concatenate %780, %758 in 1 : vector<2x32xf32>, vector<2x32xf32> -> vector<2x64xf32>
    %cst_141 = arith.constant dense<0.000000e+00> : vector<2x224xf32>
    %782 = tpu.matmul %781, %49, %cst_141 {dimension_numbers = #tpu.dot_dimension_numbers<[1], [0], [0], [1], [0, 0, 1, 1], [], []>} : vector<2x64xf32>, vector<64x224xf32>, vector<2x224xf32> -> vector<2x224xf32>
    %783 = vector.broadcast %50 : vector<1x224xf32> to vector<2x224xf32>
    %784 = arith.addf %782, %783 : vector<2x224xf32>
    %785 = vector.extract_strided_slice %784 {offsets = [0, 0], sizes = [2, 64], strides = [1, 1]} : vector<2x224xf32> to vector<2x64xf32>
    %786 = arith.negf %785 : vector<2x64xf32>
    %787 = math.exp %786 : vector<2x64xf32>
    %cst_142 = arith.constant 1.000000e+00 : f32
    %788 = vector.broadcast %cst_142 : f32 to vector<2x64xf32>
    %789 = arith.addf %788, %787 : vector<2x64xf32>
    %790 = arith.divf %788, %789 : vector<2x64xf32>
    %791 = vector.extract_strided_slice %790 {offsets = [0, 0], sizes = [2, 32], strides = [1, 1]} : vector<2x64xf32> to vector<2x32xf32>
    %792 = vector.extract_strided_slice %790 {offsets = [0, 32], sizes = [2, 32], strides = [1, 1]} : vector<2x64xf32> to vector<2x32xf32>
    %793 = vector.extract_strided_slice %784 {offsets = [0, 64], sizes = [2, 32], strides = [1, 1]} : vector<2x224xf32> to vector<2x32xf32>
    %794 = vector.extract_strided_slice %784 {offsets = [0, 96], sizes = [2, 32], strides = [1, 1]} : vector<2x224xf32> to vector<2x32xf32>
    %795 = arith.mulf %791, %794 : vector<2x32xf32>
    %796 = arith.addf %793, %795 : vector<2x32xf32>
    %797 = math.tanh %796 : vector<2x32xf32>
    %cst_143 = arith.constant 1.000000e+00 : f32
    %798 = vector.broadcast %cst_143 : f32 to vector<2x32xf32>
    %799 = arith.subf %798, %792 : vector<2x32xf32>
    %800 = arith.mulf %799, %797 : vector<2x32xf32>
    %801 = arith.mulf %792, %758 : vector<2x32xf32>
    %802 = arith.addf %800, %801 : vector<2x32xf32>
    %803 = vector.extract_strided_slice %784 {offsets = [0, 128], sizes = [2, 96], strides = [1, 1]} : vector<2x224xf32> to vector<2x96xf32>
    %c34 = arith.constant 34 : index
    %c0_144 = arith.constant 0 : index
    %804 = vector.load %arg5[%c34, %c0_144] : memref<48x96xf32, #tpu.memory_space<vmem>>, vector<2x96xf32>
    %805 = vector.extract_strided_slice %804 {offsets = [0, 0], sizes = [2, 64], strides = [1, 1]} : vector<2x96xf32> to vector<2x64xf32>
    %806 = vector.extract_strided_slice %803 {offsets = [0, 0], sizes = [2, 64], strides = [1, 1]} : vector<2x96xf32> to vector<2x64xf32>
    %807 = arith.addf %805, %806 : vector<2x64xf32>
    %808 = arith.negf %807 : vector<2x64xf32>
    %809 = math.exp %808 : vector<2x64xf32>
    %cst_145 = arith.constant 1.000000e+00 : f32
    %810 = vector.broadcast %cst_145 : f32 to vector<2x64xf32>
    %811 = arith.addf %810, %809 : vector<2x64xf32>
    %812 = arith.divf %810, %811 : vector<2x64xf32>
    %813 = vector.extract_strided_slice %812 {offsets = [0, 0], sizes = [2, 32], strides = [1, 1]} : vector<2x64xf32> to vector<2x32xf32>
    %814 = vector.extract_strided_slice %812 {offsets = [0, 32], sizes = [2, 32], strides = [1, 1]} : vector<2x64xf32> to vector<2x32xf32>
    %815 = vector.extract_strided_slice %804 {offsets = [0, 64], sizes = [2, 32], strides = [1, 1]} : vector<2x96xf32> to vector<2x32xf32>
    %816 = vector.extract_strided_slice %803 {offsets = [0, 64], sizes = [2, 32], strides = [1, 1]} : vector<2x96xf32> to vector<2x32xf32>
    %817 = arith.mulf %813, %816 : vector<2x32xf32>
    %818 = arith.addf %815, %817 : vector<2x32xf32>
    %819 = math.tanh %818 : vector<2x32xf32>
    %cst_146 = arith.constant 1.000000e+00 : f32
    %820 = vector.broadcast %cst_146 : f32 to vector<2x32xf32>
    %821 = arith.subf %820, %814 : vector<2x32xf32>
    %822 = arith.mulf %821, %819 : vector<2x32xf32>
    %823 = arith.mulf %814, %780 : vector<2x32xf32>
    %824 = arith.addf %822, %823 : vector<2x32xf32>
    %825 = tpu.concatenate %824, %802 in 1 : vector<2x32xf32>, vector<2x32xf32> -> vector<2x64xf32>
    %cst_147 = arith.constant dense<0.000000e+00> : vector<2x224xf32>
    %826 = tpu.matmul %825, %49, %cst_147 {dimension_numbers = #tpu.dot_dimension_numbers<[1], [0], [0], [1], [0, 0, 1, 1], [], []>} : vector<2x64xf32>, vector<64x224xf32>, vector<2x224xf32> -> vector<2x224xf32>
    %827 = vector.broadcast %50 : vector<1x224xf32> to vector<2x224xf32>
    %828 = arith.addf %826, %827 : vector<2x224xf32>
    %829 = vector.extract_strided_slice %828 {offsets = [0, 0], sizes = [2, 64], strides = [1, 1]} : vector<2x224xf32> to vector<2x64xf32>
    %830 = arith.negf %829 : vector<2x64xf32>
    %831 = math.exp %830 : vector<2x64xf32>
    %cst_148 = arith.constant 1.000000e+00 : f32
    %832 = vector.broadcast %cst_148 : f32 to vector<2x64xf32>
    %833 = arith.addf %832, %831 : vector<2x64xf32>
    %834 = arith.divf %832, %833 : vector<2x64xf32>
    %835 = vector.extract_strided_slice %834 {offsets = [0, 0], sizes = [2, 32], strides = [1, 1]} : vector<2x64xf32> to vector<2x32xf32>
    %836 = vector.extract_strided_slice %834 {offsets = [0, 32], sizes = [2, 32], strides = [1, 1]} : vector<2x64xf32> to vector<2x32xf32>
    %837 = vector.extract_strided_slice %828 {offsets = [0, 64], sizes = [2, 32], strides = [1, 1]} : vector<2x224xf32> to vector<2x32xf32>
    %838 = vector.extract_strided_slice %828 {offsets = [0, 96], sizes = [2, 32], strides = [1, 1]} : vector<2x224xf32> to vector<2x32xf32>
    %839 = arith.mulf %835, %838 : vector<2x32xf32>
    %840 = arith.addf %837, %839 : vector<2x32xf32>
    %841 = math.tanh %840 : vector<2x32xf32>
    %cst_149 = arith.constant 1.000000e+00 : f32
    %842 = vector.broadcast %cst_149 : f32 to vector<2x32xf32>
    %843 = arith.subf %842, %836 : vector<2x32xf32>
    %844 = arith.mulf %843, %841 : vector<2x32xf32>
    %845 = arith.mulf %836, %802 : vector<2x32xf32>
    %846 = arith.addf %844, %845 : vector<2x32xf32>
    %847 = vector.extract_strided_slice %828 {offsets = [0, 128], sizes = [2, 96], strides = [1, 1]} : vector<2x224xf32> to vector<2x96xf32>
    %c36 = arith.constant 36 : index
    %c0_150 = arith.constant 0 : index
    %848 = vector.load %arg5[%c36, %c0_150] : memref<48x96xf32, #tpu.memory_space<vmem>>, vector<2x96xf32>
    %849 = vector.extract_strided_slice %848 {offsets = [0, 0], sizes = [2, 64], strides = [1, 1]} : vector<2x96xf32> to vector<2x64xf32>
    %850 = vector.extract_strided_slice %847 {offsets = [0, 0], sizes = [2, 64], strides = [1, 1]} : vector<2x96xf32> to vector<2x64xf32>
    %851 = arith.addf %849, %850 : vector<2x64xf32>
    %852 = arith.negf %851 : vector<2x64xf32>
    %853 = math.exp %852 : vector<2x64xf32>
    %cst_151 = arith.constant 1.000000e+00 : f32
    %854 = vector.broadcast %cst_151 : f32 to vector<2x64xf32>
    %855 = arith.addf %854, %853 : vector<2x64xf32>
    %856 = arith.divf %854, %855 : vector<2x64xf32>
    %857 = vector.extract_strided_slice %856 {offsets = [0, 0], sizes = [2, 32], strides = [1, 1]} : vector<2x64xf32> to vector<2x32xf32>
    %858 = vector.extract_strided_slice %856 {offsets = [0, 32], sizes = [2, 32], strides = [1, 1]} : vector<2x64xf32> to vector<2x32xf32>
    %859 = vector.extract_strided_slice %848 {offsets = [0, 64], sizes = [2, 32], strides = [1, 1]} : vector<2x96xf32> to vector<2x32xf32>
    %860 = vector.extract_strided_slice %847 {offsets = [0, 64], sizes = [2, 32], strides = [1, 1]} : vector<2x96xf32> to vector<2x32xf32>
    %861 = arith.mulf %857, %860 : vector<2x32xf32>
    %862 = arith.addf %859, %861 : vector<2x32xf32>
    %863 = math.tanh %862 : vector<2x32xf32>
    %cst_152 = arith.constant 1.000000e+00 : f32
    %864 = vector.broadcast %cst_152 : f32 to vector<2x32xf32>
    %865 = arith.subf %864, %858 : vector<2x32xf32>
    %866 = arith.mulf %865, %863 : vector<2x32xf32>
    %867 = arith.mulf %858, %824 : vector<2x32xf32>
    %868 = arith.addf %866, %867 : vector<2x32xf32>
    %869 = tpu.concatenate %868, %846 in 1 : vector<2x32xf32>, vector<2x32xf32> -> vector<2x64xf32>
    %cst_153 = arith.constant dense<0.000000e+00> : vector<2x224xf32>
    %870 = tpu.matmul %869, %49, %cst_153 {dimension_numbers = #tpu.dot_dimension_numbers<[1], [0], [0], [1], [0, 0, 1, 1], [], []>} : vector<2x64xf32>, vector<64x224xf32>, vector<2x224xf32> -> vector<2x224xf32>
    %871 = vector.broadcast %50 : vector<1x224xf32> to vector<2x224xf32>
    %872 = arith.addf %870, %871 : vector<2x224xf32>
    %873 = vector.extract_strided_slice %872 {offsets = [0, 0], sizes = [2, 64], strides = [1, 1]} : vector<2x224xf32> to vector<2x64xf32>
    %874 = arith.negf %873 : vector<2x64xf32>
    %875 = math.exp %874 : vector<2x64xf32>
    %cst_154 = arith.constant 1.000000e+00 : f32
    %876 = vector.broadcast %cst_154 : f32 to vector<2x64xf32>
    %877 = arith.addf %876, %875 : vector<2x64xf32>
    %878 = arith.divf %876, %877 : vector<2x64xf32>
    %879 = vector.extract_strided_slice %878 {offsets = [0, 0], sizes = [2, 32], strides = [1, 1]} : vector<2x64xf32> to vector<2x32xf32>
    %880 = vector.extract_strided_slice %878 {offsets = [0, 32], sizes = [2, 32], strides = [1, 1]} : vector<2x64xf32> to vector<2x32xf32>
    %881 = vector.extract_strided_slice %872 {offsets = [0, 64], sizes = [2, 32], strides = [1, 1]} : vector<2x224xf32> to vector<2x32xf32>
    %882 = vector.extract_strided_slice %872 {offsets = [0, 96], sizes = [2, 32], strides = [1, 1]} : vector<2x224xf32> to vector<2x32xf32>
    %883 = arith.mulf %879, %882 : vector<2x32xf32>
    %884 = arith.addf %881, %883 : vector<2x32xf32>
    %885 = math.tanh %884 : vector<2x32xf32>
    %cst_155 = arith.constant 1.000000e+00 : f32
    %886 = vector.broadcast %cst_155 : f32 to vector<2x32xf32>
    %887 = arith.subf %886, %880 : vector<2x32xf32>
    %888 = arith.mulf %887, %885 : vector<2x32xf32>
    %889 = arith.mulf %880, %846 : vector<2x32xf32>
    %890 = arith.addf %888, %889 : vector<2x32xf32>
    %c152 = arith.constant 152 : index
    %c0_156 = arith.constant 0 : index
    %891 = vector.load %arg2[%c152, %c0_156] : memref<192x224xf32, #tpu.memory_space<vmem>>, vector<32x60xf32>
    %cst_157 = arith.constant dense<0.000000e+00> : vector<2x60xf32>
    %892 = tpu.matmul %890, %891, %cst_157 {dimension_numbers = #tpu.dot_dimension_numbers<[1], [0], [0], [1], [0, 0, 1, 1], [], []>} : vector<2x32xf32>, vector<32x60xf32>, vector<2x60xf32> -> vector<2x60xf32>
    %c184 = arith.constant 184 : index
    %c0_158 = arith.constant 0 : index
    %893 = vector.load %arg2[%c184, %c0_158] : memref<192x224xf32, #tpu.memory_space<vmem>>, vector<1x60xf32>
    %894 = vector.broadcast %893 : vector<1x60xf32> to vector<2x60xf32>
    %895 = arith.addf %892, %894 : vector<2x60xf32>
    %c0_159 = arith.constant 0 : index
    %c0_160 = arith.constant 0 : index
    %896 = vector.load %arg3[%c0_159, %c0_160] : memref<2x60xf32, #tpu.memory_space<vmem>>, vector<2x60xf32>
    tpu.vector_store %arg3[%c0_159, %c0_160], %895 {strides = array<i32>} : memref<2x60xf32, #tpu.memory_space<vmem>>, vector<2x60xf32>,
    return
  }
  func.func @transform_0(%arg0: i32) -> (i32, i32) {
    %c0_i32 = arith.constant 0 : i32
    %c0_i32_0 = arith.constant 0 : i32
    %c0_i32_1 = arith.constant 0 : i32
    return %c0_i32, %c0_i32_0 : i32, i32
  }
  func.func @transform_1(%arg0: i32) -> (i32, i32) {
    %c0_i32 = arith.constant 0 : i32
    %c0_i32_0 = arith.constant 0 : i32
    %c0_i32_1 = arith.constant 0 : i32
    return %c0_i32, %c0_i32_0 : i32, i32
  }
  func.func @transform_2(%arg0: i32) -> (i32, i32) {
    %c0_i32 = arith.constant 0 : i32
    %c0_i32_0 = arith.constant 0 : i32
    %c0_i32_1 = arith.constant 0 : i32
    return %c0_i32, %c0_i32_0 : i32, i32
  }
}

</mosaic_0001>

<llo_original>
// kernel: tcn_gru_forward.1
$region0: #{tcn_gru_forward.1}
  #allocation0 [shape = 'u32[]', space=smem, size = 0x4, offset = 0x4, fixed_abs, tag = 'smem constant byte address 0x4 - core index']
  #allocation1 [shape = 'u32[144,128]{1,0:T(1,128)}', space=vmem, size = 0x12000, scoped, tag = 'internal scratch']
  #allocation2 [shape = 'f32[56,8]{1,0:T(8,128)}', space=vmem, size = 0x7000, scoped, tag = 'scratch operand']
  #allocation3 [shape = 'f32[48,96]{1,0:T(8,128)}', space=vmem, size = 0x6000, scoped, tag = 'scratch operand']
  %s0 = inlined_call_operand.vmem [shape: f32[56,4], index: 0, kind: input, shape index: {}]
  %s1 = inlined_call_operand.hbm [shape: f32[192,224], index: 1, kind: input, shape index: {}]
  %s2 = inlined_call_operand.hbm [shape: f32[2,60], index: 2, kind: output, shape index: {}]
  %s3 = sld [smem:[#allocation0]]
  $region22: #{tcn_gru_forward.1} parent=0
    _
  %s5 = ssub.s32 1, %s3
  %s6 = scalar_select 0, %s5, %s3
  $region1: #{tcn_gru_forward.1} parent=0
    #allocation4 [shape = 'u8[196608]{0}', space=vmem, size = 0x30000, scoped, tag = 'input window, operand 1, single buffered']
    #allocation5 [shape = 's32[1]{0}', space=sflag, size = 0x4, scoped, tag = 'scoped memory for tcn_gru_forward.1']
    #allocation6 [shape = 's32[1]{0}', space=sflag, size = 0x4, scoped, tag = 'scoped memory for tcn_gru_forward.1']
    #allocation7 [shape = 'u8[1024]{0}', space=vmem, size = 0x400, scoped, tag = 'output window, operand 0, single buffered']
    %7 = vsyncpa [#allocation5], 0
    %8 = vsyncpa [#allocation6], 0
    // Predicated region
    $region2: #{tcn_gru_forward.1} parent=1 // pred_check
      _
    $region3: #{tcn_gru_forward.1} parent=1 // pred_check_branch
      %10 = sbr.rel (0) target = $region5
    $region4: #{tcn_gru_forward.1} parent=1 // pred_region
      _
    $region5: #{tcn_gru_forward.1} parent=1 // pred_fallthru
      _
    // Predicated region
    $region6: #{tcn_gru_forward.1} parent=1 // pred_check
      _
    $region7: #{tcn_gru_forward.1} parent=1 // pred_check_branch
      %12 = sbr.rel (0) target = $region9
    $region8: #{tcn_gru_forward.1} parent=1 // pred_region
      %s14 = ssub.s32 6144, 6144
      %15 = vsyncadd [#allocation5], %s14
      %s16 = sshll.u32 [#allocation4], 4
      %s17 = int_to_ptr.vmem [resolvable:$true] %s16
      %22 = dma.hbm_to_vmem [thread:$0]  %s1, 6144, %s17, [#allocation5], 256, 256, 16
    $region9: #{tcn_gru_forward.1} parent=1 // pred_fallthru
      _
    // Predicated region
    $region10: #{tcn_gru_forward.1} parent=1 // pred_check
      _
    $region11: #{tcn_gru_forward.1} parent=1 // pred_check_branch
      %24 = sbr.rel (0) target = $region13
    $region12: #{tcn_gru_forward.1} parent=1 // pred_region
      %25 = dma.done [#allocation5], 6144
    $region13: #{tcn_gru_forward.1} parent=1 // pred_fallthru
      _
    %vm26 = vcmask 64512
    %27 = vst.msk [vmem:[#allocation2 + $0x30] sm:$0xff] %vm26, 0.0
    %v28 = vld [vmem:[#allocation4] sm:$0xf]
    %v29 = vld [vmem:[#allocation4 + $0x10] sm:$0xf]
    %v30 = vld [vmem:[#allocation4 + $0x20] ss:$0 sm:$0xff]
    %v31 = vld [vmem:[%s0] sm:$0xff]
    %v32 = vld [vmem:[%s0 + $0x8] sm:$0xff]
    %v33 = vld [vmem:[%s0 + $0x10] sm:$0xff]
    %v34 = vld [vmem:[%s0 + $0x18] sm:$0xff]
    %v35 = vld [vmem:[%s0 + $0x20] sm:$0xff]
    %v36 = vld [vmem:[%s0 + $0x28] sm:$0xff]
    %v37 = vld [vmem:[%s0 + $0x2] sm:$0xff]
    %v38 = vld [vmem:[%s0 + $0xa] sm:$0xff]
    %v39 = vld [vmem:[%s0 + $0x12] sm:$0xff]
    %v40 = vld [vmem:[%s0 + $0x1a] sm:$0xff]
    %v41 = vld [vmem:[%s0 + $0x22] sm:$0xff]
    %v42 = vld [vmem:[%s0 + $0x2a] sm:$0xff]
    %vm43 = vcmask 31744
    %v45 = vsel %vm43, %v37, 0
    %v48 = vsel %vm43, %v38, 0
    %v51 = vsel %vm43, %v39, 0
    %v54 = vsel %vm43, %v40, 0
    %v57 = vsel %vm43, %v41, 0
    %v60 = vsel %vm43, %v42, 0
    %vm62 = vcmask 1043456
    %v64 = vsel %vm62, %v29, 0
    %66 = vmatprep.subr.mxu0 0.0
    %67 = vmatpush1.msra.mxu0 %v64
    %68 = vmatprep.subr.mxu0 0.0
    %69 = vmatpush1.msra.mxu0 0.0
    %70 = vmatprep.subr.mxu0 0.0
    %71 = vmatpush1.msra.mxu0 0.0
    %72 = vmatprep.subr.mxu0 0.0
    %73 = vmatpush1.msra.mxu0 0.0
    %74 = vmatprep.subr.mxu0 0.0
    %75 = vmatpush1.msra.mxu0 0.0
    %76 = vmatprep.subr.mxu0 0.0
    %77 = vmatpush1.msra.mxu0 0.0
    %78 = vmatprep.subr.mxu0 0.0
    %79 = vmatpush1.msra.mxu0 0.0
    %80 = vmatprep.subr.mxu0 0.0
    %81 = vmatpush1.msra.mxu0 0.0
    %82 = vmatprep.subr.mxu0 0.0
    %83 = vmatpush1.msra.mxu0 0.0
    %84 = vmatprep.subr.mxu0 0.0
    %85 = vmatpush1.msra.mxu0 0.0
    %86 = vmatprep.subr.mxu0 0.0
    %87 = vmatpush1.msra.mxu0 0.0
    %88 = vmatprep.subr.mxu0 0.0
    %89 = vmatpush1.msra.mxu0 0.0
    %90 = vmatprep.subr.mxu0 0.0
    %91 = vmatpush1.msra.mxu0 0.0
    %92 = vmatprep.subr.mxu0 0.0
    %93 = vmatpush1.msra.mxu0 0.0
    %94 = vmatprep.subr.mxu0 0.0
    %95 = vmatpush1.msra.mxu0 0.0
    %96 = vmatprep.subr.mxu0 0.0
    %97 = vmatpush1.msra.mxu0 0.0
    %98 = vmatprep.subr.mxu0 0.0
    %99 = vmatpush1.msra.mxu0 0.0
    %100 = vmatprep.subr.mxu0 0.0
    %101 = vmatpush1.msra.mxu0 0.0
    %102 = vmatprep.subr.mxu0 0.0
    %103 = vmatpush1.msra.mxu0 0.0
    %104 = vmatprep.subr.mxu0 0.0
    %105 = vmatpush1.msra.mxu0 0.0
    %106 = vmatprep.subr.mxu0 0.0
    %107 = vmatpush1.msra.mxu0 0.0
    %108 = vmatprep.subr.mxu0 0.0
    %109 = vmatpush1.msra.mxu0 0.0
    %110 = vmatprep.subr.mxu0 0.0
    %111 = vmatpush1.msra.mxu0 0.0
    %112 = vmatprep.subr.mxu0 0.0
    %113 = vmatpush1.msra.mxu0 0.0
    %114 = vmatprep.subr.mxu0 0.0
    %115 = vmatpush1.msra.mxu0 0.0
    %116 = vmatprep.subr.mxu0 0.0
    %117 = vmatpush1.msra.mxu0 0.0
    %118 = vmatprep.subr.mxu0 0.0
    %119 = vmatpush1.msra.mxu0 0.0
    %120 = vmatprep.subr.mxu0 0.0
    %121 = vmatpush1.msra.mxu0 0.0
    %122 = vmatprep.subr.mxu0 0.0
    %123 = vmatpush1.msra.mxu0 0.0
    %124 = vmatprep.subr.mxu0 0.0
    %125 = vmatpush1.msra.mxu0 0.0
    %126 = vmatprep.subr.mxu0 0.0
    %127 = vmatpush1.msra.mxu0 0.0
    %128 = vmatprep.subr.mxu0 0.0
    %129 = vmatpush1.msra.mxu0 0.0
    %130 = vmatprep.mubr.f32.mxu0 0.0
    %131 = vmatmul.mubr.f32.gmra.mrb[0].mxu0 %v45
    %v132 = vpop.f32.mrb[0].mxu0
    %v133 = vadd.f32 0.0, %v132
    %v134 = vpop.f32.mrb[0].mxu0
    %135 = vmatprep.mubr.f32.mxu0 0.0
    %136 = vmatmul.mubr.f32.gmra.mrb[0].mxu0 %v48
    %v137 = vpop.f32.mrb[0].mxu0
    %v138 = vadd.f32 0.0, %v137
    %v139 = vpop.f32.mrb[0].mxu0
    %140 = vmatprep.mubr.f32.mxu0 0.0
    %141 = vmatmul.mubr.f32.gmra.mrb[0].mxu0 %v51
    %v142 = vpop.f32.mrb[0].mxu0
    %v143 = vadd.f32 0.0, %v142
    %v144 = vpop.f32.mrb[0].mxu0
    %145 = vmatprep.mubr.f32.mxu0 0.0
    %146 = vmatmul.mubr.f32.gmra.mrb[0].mxu0 %v54
    %v147 = vpop.f32.mrb[0].mxu0
    %v148 = vadd.f32 0.0, %v147
    %v149 = vpop.f32.mrb[0].mxu0
    %150 = vmatprep.mubr.f32.mxu0 0.0
    %151 = vmatmul.mubr.f32.gmra.mrb[0].mxu0 %v57
    %v152 = vpop.f32.mrb[0].mxu0
    %v153 = vadd.f32 0.0, %v152
    %v154 = vpop.f32.mrb[0].mxu0
    %155 = vmatprep.mubr.f32.mxu0 0.0
    %156 = vmatmul.mubr.f32.gmra.mrb[0].mxu0 %v60
    %v157 = vpop.f32.mrb[0].mxu0
    %v158 = vadd.f32 0.0, %v157
    %v159 = vpop.f32.mrb[0].mxu0
    %160 = vdwg.mxu0
    %v162 = vsel %vm43, %v31, 0
    %v165 = vsel %vm43, %v32, 0
    %v168 = vsel %vm43, %v33, 0
    %v171 = vsel %vm43, %v34, 0
    %v174 = vsel %vm43, %v35, 0
    %v177 = vsel %vm43, %v36, 0
    %v180 = vsel %vm62, %v28, 0
    %182 = vmatprep.subr.mxu0 0.0
    %183 = vmatpush1.msra.mxu0 %v180
    %184 = vmatprep.subr.mxu0 0.0
    %185 = vmatpush1.msra.mxu0 0.0
    %186 = vmatprep.subr.mxu0 0.0
    %187 = vmatpush1.msra.mxu0 0.0
    %188 = vmatprep.subr.mxu0 0.0
    %189 = vmatpush1.msra.mxu0 0.0
    %190 = vmatprep.subr.mxu0 0.0
    %191 = vmatpush1.msra.mxu0 0.0
    %192 = vmatprep.subr.mxu0 0.0
    %193 = vmatpush1.msra.mxu0 0.0
    %194 = vmatprep.subr.mxu0 0.0
    %195 = vmatpush1.msra.mxu0 0.0
    %196 = vmatprep.subr.mxu0 0.0
    %197 = vmatpush1.msra.mxu0 0.0
    %198 = vmatprep.subr.mxu0 0.0
    %199 = vmatpush1.msra.mxu0 0.0
    %200 = vmatprep.subr.mxu0 0.0
    %201 = vmatpush1.msra.mxu0 0.0
    %202 = vmatprep.subr.mxu0 0.0
    %203 = vmatpush1.msra.mxu0 0.0
    %204 = vmatprep.subr.mxu0 0.0
    %205 = vmatpush1.msra.mxu0 0.0
    %206 = vmatprep.subr.mxu0 0.0
    %207 = vmatpush1.msra.mxu0 0.0
    %208 = vmatprep.subr.mxu0 0.0
    %209 = vmatpush1.msra.mxu0 0.0
    %210 = vmatprep.subr.mxu0 0.0
    %211 = vmatpush1.msra.mxu0 0.0
    %212 = vmatprep.subr.mxu0 0.0
    %213 = vmatpush1.msra.mxu0 0.0
    %214 = vmatprep.subr.mxu0 0.0
    %215 = vmatpush1.msra.mxu0 0.0
    %216 = vmatprep.subr.mxu0 0.0
    %217 = vmatpush1.msra.mxu0 0.0
    %218 = vmatprep.subr.mxu0 0.0
    %219 = vmatpush1.msra.mxu0 0.0
    %220 = vmatprep.subr.mxu0 0.0
    %221 = vmatpush1.msra.mxu0 0.0
    %222 = vmatprep.subr.mxu0 0.0
    %223 = vmatpush1.msra.mxu0 0.0
    %224 = vmatprep.subr.mxu0 0.0
    %225 = vmatpush1.msra.mxu0 0.0
    %226 = vmatprep.subr.mxu0 0.0
    %227 = vmatpush1.msra.mxu0 0.0
    %228 = vmatprep.subr.mxu0 0.0
    %229 = vmatpush1.msra.mxu0 0.0
    %230 = vmatprep.subr.mxu0 0.0
    %231 = vmatpush1.msra.mxu0 0.0
    %232 = vmatprep.subr.mxu0 0.0
    %233 = vmatpush1.msra.mxu0 0.0
    %234 = vmatprep.subr.mxu0 0.0
    %235 = vmatpush1.msra.mxu0 0.0
    %236 = vmatprep.subr.mxu0 0.0
    %237 = vmatpush1.msra.mxu0 0.0
    %238 = vmatprep.subr.mxu0 0.0
    %239 = vmatpush1.msra.mxu0 0.0
    %240 = vmatprep.subr.mxu0 0.0
    %241 = vmatpush1.msra.mxu0 0.0
    %242 = vmatprep.subr.mxu0 0.0
    %243 = vmatpush1.msra.mxu0 0.0
    %244 = vmatprep.subr.mxu0 0.0
    %245 = vmatpush1.msra.mxu0 0.0
    %246 = vmatprep.mubr.f32.mxu0 0.0
    %247 = vmatmul.mubr.f32.gmra.mrb[0].mxu0 %v162
    %v248 = vpop.f32.mrb[0].mxu0
    %v249 = vadd.f32 %v133, %v248
    %v250 = vpop.f32.mrb[0].mxu0
    %251 = vmatprep.mubr.f32.mxu0 0.0
    %252 = vmatmul.mubr.f32.gmra.mrb[0].mxu0 %v165
    %v253 = vpop.f32.mrb[0].mxu0
    %v254 = vadd.f32 %v138, %v253
    %v255 = vpop.f32.mrb[0].mxu0
    %256 = vmatprep.mubr.f32.mxu0 0.0
    %257 = vmatmul.mubr.f32.gmra.mrb[0].mxu0 %v168
    %v258 = vpop.f32.mrb[0].mxu0
    %v259 = vadd.f32 %v143, %v258
    %v260 = vpop.f32.mrb[0].mxu0
    %261 = vmatprep.mubr.f32.mxu0 0.0
    %262 = vmatmul.mubr.f32.gmra.mrb[0].mxu0 %v171
    %v263 = vpop.f32.mrb[0].mxu0
    %v264 = vadd.f32 %v148, %v263
    %v265 = vpop.f32.mrb[0].mxu0
    %266 = vmatprep.mubr.f32.mxu0 0.0
    %267 = vmatmul.mubr.f32.gmra.mrb[0].mxu0 %v174
    %v268 = vpop.f32.mrb[0].mxu0
    %v269 = vadd.f32 %v153, %v268
    %v270 = vpop.f32.mrb[0].mxu0
    %271 = vmatprep.mubr.f32.mxu0 0.0
    %272 = vmatmul.mubr.f32.gmra.mrb[0].mxu0 %v177
    %v273 = vpop.f32.mrb[0].mxu0
    %v274 = vadd.f32 %v158, %v273
    %v275 = vpop.f32.mrb[0].mxu0
    %276 = vdwg.mxu0
    %v277 = vadd.f32 %v249, %v30
    %v278 = vadd.f32 %v254, %v30
    %v279 = vadd.f32 %v259, %v30
    %v280 = vadd.f32 %v264, %v30
    %v281 = vadd.f32 %v269, %v30
    %v282 = vadd.f32 %v274, %v30
    %v283 = vlaneseq
    %v284 = vshrl.u32 %v283, 7
    %v285 = vadd.s32 %v284, 8
    %v286 = vadd.s32 %v284, 16
    %v287 = vadd.s32 %v284, 24
    %v288 = vadd.s32 %v284, 32
    %v289 = vadd.s32 %v284, 40
    %vm290 = vcmp.ge.s32.totalorder %v284, 4
    %vm291 = vcmp.ge.s32.totalorder %v285, 4
    %vm292 = vcmp.ge.s32.totalorder %v286, 4
    %vm293 = vcmp.ge.s32.totalorder %v287, 4
    %vm294 = vcmp.ge.s32.totalorder %v288, 4
    %vm295 = vcmp.ge.s32.totalorder %v289, 4
    %vm296 = vcmp.lt.s32.totalorder %v284, 38
    %vm297 = vcmp.lt.s32.totalorder %v285, 38
    %vm298 = vcmp.lt.s32.totalorder %v286, 38
    %vm299 = vcmp.lt.s32.totalorder %v287, 38
    %vm300 = vcmp.lt.s32.totalorder %v288, 38
    %vm301 = vcmp.lt.s32.totalorder %v289, 38
    %vm302 = vmand %vm290, %vm296
    %vm303 = vmand %vm291, %vm297
    %vm304 = vmand %vm292, %vm298
    %vm305 = vmand %vm293, %vm299
    %vm306 = vmand %vm294, %vm300
    %vm307 = vmand %vm295, %vm301
    %v308 = vmax.f32 %v277, 0.0
    %v309 = vmax.f32 %v278, 0.0
    %v310 = vmax.f32 %v279, 0.0
    %v311 = vmax.f32 %v280, 0.0
    %v312 = vmax.f32 %v281, 0.0
    %v313 = vmax.f32 %v282, 0.0
    %v314 = vsel %vm302, %v308, 0.0
    %v315 = vsel %vm303, %v309, 0.0
    %v316 = vsel %vm304, %v310, 0.0
    %v317 = vsel %vm305, %v311, 0.0
    %v318 = vsel %vm306, %v312, 0.0
    %v319 = vsel %vm307, %v313, 0.0
    %320 = vst.msk [vmem:[#allocation2] sm:$0xff] %vm26, %v314
    %321 = vst.msk [vmem:[#allocation2 + $0x8] sm:$0xff] %vm26, %v315
    %322 = vst.msk [vmem:[#allocation2 + $0x10] sm:$0xff] %vm26, %v316
    %323 = vst.msk [vmem:[#allocation2 + $0x18] sm:$0xff] %vm26, %v317
    %324 = vst.msk [vmem:[#allocation2 + $0x20] sm:$0xff] %vm26, %v318
    %325 = vst.msk [vmem:[#allocation2 + $0x28] sm:$0xff] %vm26, %v319
    %v326 = vld [vmem:[#allocation4 + $0x30] sm:$0xff]
    %v327 = vld [vmem:[#allocation4 + $0x40] sm:$0xff]
    %v328 = vld [vmem:[#allocation4 + $0x50] ss:$0 sm:$0xff]
    %v329 = vld [vmem:[#allocation2] sm:$0xff]
    %v330 = vld [vmem:[#allocation2 + $0x8] sm:$0xff]
    %v331 = vld [vmem:[#allocation2 + $0x10] sm:$0xff]
    %v332 = vld [vmem:[#allocation2 + $0x18] sm:$0xff]
    %v333 = vld [vmem:[#allocation2 + $0x20] sm:$0xff]
    %v334 = vld [vmem:[#allocation2 + $0x28] sm:$0xff]
    %v335 = vld [vmem:[#allocation2 + $0x4] sm:$0xff]
    %v336 = vld [vmem:[#allocation2 + $0xc] sm:$0xff]
    %v337 = vld [vmem:[#allocation2 + $0x14] sm:$0xff]
    %v338 = vld [vmem:[#allocation2 + $0x1c] sm:$0xff]
    %v339 = vld [vmem:[#allocation2 + $0x24] sm:$0xff]
    %v340 = vld [vmem:[#allocation2 + $0x2c] sm:$0xff]
    %v342 = vsel %vm26, %v335, 0
    %v345 = vsel %vm26, %v336, 0
    %v348 = vsel %vm26, %v337, 0
    %v351 = vsel %vm26, %v338, 0
    %v354 = vsel %vm26, %v339, 0
    %v357 = vsel %vm26, %v340, 0
    %359 = vmatprep.subr.mxu0 0.0
    %360 = vmatpush1.msra.mxu0 %v327
    %361 = vmatprep.subr.mxu0 0.0
    %362 = vmatpush1.msra.mxu0 0.0
    %363 = vmatprep.subr.mxu0 0.0
    %364 = vmatpush1.msra.mxu0 0.0
    %365 = vmatprep.subr.mxu0 0.0
    %366 = vmatpush1.msra.mxu0 0.0
    %367 = vmatprep.subr.mxu0 0.0
    %368 = vmatpush1.msra.mxu0 0.0
    %369 = vmatprep.subr.mxu0 0.0
    %370 = vmatpush1.msra.mxu0 0.0
    %371 = vmatprep.subr.mxu0 0.0
    %372 = vmatpush1.msra.mxu0 0.0
    %373 = vmatprep.subr.mxu0 0.0
    %374 = vmatpush1.msra.mxu0 0.0
    %375 = vmatprep.subr.mxu0 0.0
    %376 = vmatpush1.msra.mxu0 0.0
    %377 = vmatprep.subr.mxu0 0.0
    %378 = vmatpush1.msra.mxu0 0.0
    %379 = vmatprep.subr.mxu0 0.0
    %380 = vmatpush1.msra.mxu0 0.0
    %381 = vmatprep.subr.mxu0 0.0
    %382 = vmatpush1.msra.mxu0 0.0
    %383 = vmatprep.subr.mxu0 0.0
    %384 = vmatpush1.msra.mxu0 0.0
    %385 = vmatprep.subr.mxu0 0.0
    %386 = vmatpush1.msra.mxu0 0.0
    %387 = vmatprep.subr.mxu0 0.0
    %388 = vmatpush1.msra.mxu0 0.0
    %389 = vmatprep.subr.mxu0 0.0
    %390 = vmatpush1.msra.mxu0 0.0
    %391 = vmatprep.subr.mxu0 0.0
    %392 = vmatpush1.msra.mxu0 0.0
    %393 = vmatprep.subr.mxu0 0.0
    %394 = vmatpush1.msra.mxu0 0.0
    %395 = vmatprep.subr.mxu0 0.0
    %396 = vmatpush1.msra.mxu0 0.0
    %397 = vmatprep.subr.mxu0 0.0
    %398 = vmatpush1.msra.mxu0 0.0
    %399 = vmatprep.subr.mxu0 0.0
    %400 = vmatpush1.msra.mxu0 0.0
    %401 = vmatprep.subr.mxu0 0.0
    %402 = vmatpush1.msra.mxu0 0.0
    %403 = vmatprep.subr.mxu0 0.0
    %404 = vmatpush1.msra.mxu0 0.0
    %405 = vmatprep.subr.mxu0 0.0
    %406 = vmatpush1.msra.mxu0 0.0
    %407 = vmatprep.subr.mxu0 0.0
    %408 = vmatpush1.msra.mxu0 0.0
    %409 = vmatprep.subr.mxu0 0.0
    %410 = vmatpush1.msra.mxu0 0.0
    %411 = vmatprep.subr.mxu0 0.0
    %412 = vmatpush1.msra.mxu0 0.0
    %413 = vmatprep.subr.mxu0 0.0
    %414 = vmatpush1.msra.mxu0 0.0
    %415 = vmatprep.subr.mxu0 0.0
    %416 = vmatpush1.msra.mxu0 0.0
    %417 = vmatprep.subr.mxu0 0.0
    %418 = vmatpush1.msra.mxu0 0.0
    %419 = vmatprep.subr.mxu0 0.0
    %420 = vmatpush1.msra.mxu0 0.0
    %421 = vmatprep.subr.mxu0 0.0
    %422 = vmatpush1.msra.mxu0 0.0
    %423 = vmatprep.mubr.f32.mxu0 0.0
    %424 = vmatmul.mubr.f32.gmra.mrb[0].mxu0 %v342
    %v425 = vpop.f32.mrb[0].mxu0
    %v426 = vadd.f32 0.0, %v425
    %v427 = vpop.f32.mrb[0].mxu0
    %428 = vmatprep.mubr.f32.mxu0 0.0
    %429 = vmatmul.mubr.f32.gmra.mrb[0].mxu0 %v345
    %v430 = vpop.f32.mrb[0].mxu0
    %v431 = vadd.f32 0.0, %v430
    %v432 = vpop.f32.mrb[0].mxu0
    %433 = vmatprep.mubr.f32.mxu0 0.0
    %434 = vmatmul.mubr.f32.gmra.mrb[0].mxu0 %v348
    %v435 = vpop.f32.mrb[0].mxu0
    %v436 = vadd.f32 0.0, %v435
    %v437 = vpop.f32.mrb[0].mxu0
    %438 = vmatprep.mubr.f32.mxu0 0.0
    %439 = vmatmul.mubr.f32.gmra.mrb[0].mxu0 %v351
    %v440 = vpop.f32.mrb[0].mxu0
    %v441 = vadd.f32 0.0, %v440
    %v442 = vpop.f32.mrb[0].mxu0
    %443 = vmatprep.mubr.f32.mxu0 0.0
    %444 = vmatmul.mubr.f32.gmra.mrb[0].mxu0 %v354
    %v445 = vpop.f32.mrb[0].mxu0
    %v446 = vadd.f32 0.0, %v445
    %v447 = vpop.f32.mrb[0].mxu0
    %448 = vmatprep.mubr.f32.mxu0 0.0
    %449 = vmatmul.mubr.f32.gmra.mrb[0].mxu0 %v357
    %v450 = vpop.f32.mrb[0].mxu0
    %v451 = vadd.f32 0.0, %v450
    %v452 = vpop.f32.mrb[0].mxu0
    %453 = vdwg.mxu0
    %v455 = vsel %vm26, %v329, 0
    %v458 = vsel %vm26, %v330, 0
    %v461 = vsel %vm26, %v331, 0
    %v464 = vsel %vm26, %v332, 0
    %v467 = vsel %vm26, %v333, 0
    %v470 = vsel %vm26, %v334, 0
    %472 = vmatprep.subr.mxu0 0.0
    %473 = vmatpush1.msra.mxu0 %v326
    %474 = vmatprep.subr.mxu0 0.0
    %475 = vmatpush1.msra.mxu0 0.0
    %476 = vmatprep.subr.mxu0 0.0
    %477 = vmatpush1.msra.mxu0 0.0
    %478 = vmatprep.subr.mxu0 0.0
    %479 = vmatpush1.msra.mxu0 0.0
    %480 = vmatprep.subr.mxu0 0.0
    %481 = vmatpush1.msra.mxu0 0.0
    %482 = vmatprep.subr.mxu0 0.0
    %483 = vmatpush1.msra.mxu0 0.0
    %484 = vmatprep.subr.mxu0 0.0
    %485 = vmatpush1.msra.mxu0 0.0
    %486 = vmatprep.subr.mxu0 0.0
    %487 = vmatpush1.msra.mxu0 0.0
    %488 = vmatprep.subr.mxu0 0.0
    %489 = vmatpush1.msra.mxu0 0.0
    %490 = vmatprep.subr.mxu0 0.0
    %491 = vmatpush1.msra.mxu0 0.0
    %492 = vmatprep.subr.mxu0 0.0
    %493 = vmatpush1.msra.mxu0 0.0
    %494 = vmatprep.subr.mxu0 0.0
    %495 = vmatpush1.msra.mxu0 0.0
    %496 = vmatprep.subr.mxu0 0.0
    %497 = vmatpush1.msra.mxu0 0.0
    %498 = vmatprep.subr.mxu0 0.0
    %499 = vmatpush1.msra.mxu0 0.0
    %500 = vmatprep.subr.mxu0 0.0
    %501 = vmatpush1.msra.mxu0 0.0
    %502 = vmatprep.subr.mxu0 0.0
    %503 = vmatpush1.msra.mxu0 0.0
    %504 = vmatprep.subr.mxu0 0.0
    %505 = vmatpush1.msra.mxu0 0.0
    %506 = vmatprep.subr.mxu0 0.0
    %507 = vmatpush1.msra.mxu0 0.0
    %508 = vmatprep.subr.mxu0 0.0
    %509 = vmatpush1.msra.mxu0 0.0
    %510 = vmatprep.subr.mxu0 0.0
    %511 = vmatpush1.msra.mxu0 0.0
    %512 = vmatprep.subr.mxu0 0.0
    %513 = vmatpush1.msra.mxu0 0.0
    %514 = vmatprep.subr.mxu0 0.0
    %515 = vmatpush1.msra.mxu0 0.0
    %516 = vmatprep.subr.mxu0 0.0
    %517 = vmatpush1.msra.mxu0 0.0
    %518 = vmatprep.subr.mxu0 0.0
    %519 = vmatpush1.msra.mxu0 0.0
    %520 = vmatprep.subr.mxu0 0.0
    %521 = vmatpush1.msra.mxu0 0.0
    %522 = vmatprep.subr.mxu0 0.0
    %523 = vmatpush1.msra.mxu0 0.0
    %524 = vmatprep.subr.mxu0 0.0
    %525 = vmatpush1.msra.mxu0 0.0
    %526 = vmatprep.subr.mxu0 0.0
    %527 = vmatpush1.msra.mxu0 0.0
    %528 = vmatprep.subr.mxu0 0.0
    %529 = vmatpush1.msra.mxu0 0.0
    %530 = vmatprep.subr.mxu0 0.0
    %531 = vmatpush1.msra.mxu0 0.0
    %532 = vmatprep.subr.mxu0 0.0
    %533 = vmatpush1.msra.mxu0 0.0
    %534 = vmatprep.subr.mxu0 0.0
    %535 = vmatpush1.msra.mxu0 0.0
    %536 = vmatprep.mubr.f32.mxu0 0.0
    %537 = vmatmul.mubr.f32.gmra.mrb[0].mxu0 %v455
    %v538 = vpop.f32.mrb[0].mxu0
    %v539 = vadd.f32 %v426, %v538
    %v540 = vpop.f32.mrb[0].mxu0
    %541 = vmatprep.mubr.f32.mxu0 0.0
    %542 = vmatmul.mubr.f32.gmra.mrb[0].mxu0 %v458
    %v543 = vpop.f32.mrb[0].mxu0
    %v544 = vadd.f32 %v431, %v543
    %v545 = vpop.f32.mrb[0].mxu0
    %546 = vmatprep.mubr.f32.mxu0 0.0
    %547 = vmatmul.mubr.f32.gmra.mrb[0].mxu0 %v461
    %v548 = vpop.f32.mrb[0].mxu0
    %v549 = vadd.f32 %v436, %v548
    %v550 = vpop.f32.mrb[0].mxu0
    %551 = vmatprep.mubr.f32.mxu0 0.0
    %552 = vmatmul.mubr.f32.gmra.mrb[0].mxu0 %v464
    %v553 = vpop.f32.mrb[0].mxu0
    %v554 = vadd.f32 %v441, %v553
    %v555 = vpop.f32.mrb[0].mxu0
    %556 = vmatprep.mubr.f32.mxu0 0.0
    %557 = vmatmul.mubr.f32.gmra.mrb[0].mxu0 %v467
    %v558 = vpop.f32.mrb[0].mxu0
    %v559 = vadd.f32 %v446, %v558
    %v560 = vpop.f32.mrb[0].mxu0
    %561 = vmatprep.mubr.f32.mxu0 0.0
    %562 = vmatmul.mubr.f32.gmra.mrb[0].mxu0 %v470
    %v563 = vpop.f32.mrb[0].mxu0
    %v564 = vadd.f32 %v451, %v563
    %v565 = vpop.f32.mrb[0].mxu0
    %566 = vdwg.mxu0
    %v567 = vadd.f32 %v539, %v328
    %v568 = vadd.f32 %v544, %v328
    %v569 = vadd.f32 %v549, %v328
    %v570 = vadd.f32 %v554, %v328
    %v571 = vadd.f32 %v559, %v328
    %v572 = vadd.f32 %v564, %v328
    %vm573 = vcmp.ge.s32.totalorder %v284, 0
    %vm574 = vcmp.ge.s32.totalorder %v285, 0
    %vm575 = vcmp.ge.s32.totalorder %v286, 0
    %vm576 = vcmp.ge.s32.totalorder %v287, 0
    %vm577 = vcmp.ge.s32.totalorder %v288, 0
    %vm578 = vcmp.ge.s32.totalorder %v289, 0
    %vm579 = vmand %vm573, %vm296
    %vm580 = vmand %vm574, %vm297
    %vm581 = vmand %vm575, %vm298
    %vm582 = vmand %vm576, %vm299
    %vm583 = vmand %vm577, %vm300
    %vm584 = vmand %vm578, %vm301
    %v585 = vmax.f32 %v567, 0.0
    %v586 = vmax.f32 %v568, 0.0
    %v587 = vmax.f32 %v569, 0.0
    %v588 = vmax.f32 %v570, 0.0
    %v589 = vmax.f32 %v571, 0.0
    %v590 = vmax.f32 %v572, 0.0
    %v591 = vsel %vm579, %v585, 0.0
    %v592 = vsel %vm580, %v586, 0.0
    %v593 = vsel %vm581, %v587, 0.0
    %v594 = vsel %vm582, %v588, 0.0
    %v595 = vsel %vm583, %v589, 0.0
    %v596 = vsel %vm584, %v590, 0.0
    %v597 = vld [vmem:[#allocation4 + $0x60] sm:$0xff]
    %v598 = vld [vmem:[#allocation4 + $0x70] sm:$0xff]
    %v599 = vld [vmem:[#allocation4 + $0x80] ss:$0 sm:$0xff]
    %vm600 = vcmask 130048
    %v602 = vsel %vm600, %v591, 0
    %v605 = vsel %vm600, %v592, 0
    %v608 = vsel %vm600, %v593, 0
    %v611 = vsel %vm600, %v594, 0
    %v614 = vsel %vm600, %v595, 0
    %v617 = vsel %vm600, %v596, 0
    %619 = vmatprep.subr.mxu0 0.0
    %620 = vmatpush1.msra.mxu0 %v597
    %621 = vmatprep.subr.mxu0 0.0
    %622 = vmatpush1.msra.mxu0 %v598
    %623 = vmatprep.subr.mxu0 0.0
    %624 = vmatpush1.msra.mxu0 0.0
    %625 = vmatprep.subr.mxu0 0.0
    %626 = vmatpush1.msra.mxu0 0.0
    %627 = vmatprep.subr.mxu0 0.0
    %628 = vmatpush1.msra.mxu0 0.0
    %629 = vmatprep.subr.mxu0 0.0
    %630 = vmatpush1.msra.mxu0 0.0
    %631 = vmatprep.subr.mxu0 0.0
    %632 = vmatpush1.msra.mxu0 0.0
    %633 = vmatprep.subr.mxu0 0.0
    %634 = vmatpush1.msra.mxu0 0.0
    %635 = vmatprep.subr.mxu0 0.0
    %636 = vmatpush1.msra.mxu0 0.0
    %637 = vmatprep.subr.mxu0 0.0
    %638 = vmatpush1.msra.mxu0 0.0
    %639 = vmatprep.subr.mxu0 0.0
    %640 = vmatpush1.msra.mxu0 0.0
    %641 = vmatprep.subr.mxu0 0.0
    %642 = vmatpush1.msra.mxu0 0.0
    %643 = vmatprep.subr.mxu0 0.0
    %644 = vmatpush1.msra.mxu0 0.0
    %645 = vmatprep.subr.mxu0 0.0
    %646 = vmatpush1.msra.mxu0 0.0
    %647 = vmatprep.subr.mxu0 0.0
    %648 = vmatpush1.msra.mxu0 0.0
    %649 = vmatprep.subr.mxu0 0.0
    %650 = vmatpush1.msra.mxu0 0.0
    %651 = vmatprep.subr.mxu0 0.0
    %652 = vmatpush1.msra.mxu0 0.0
    %653 = vmatprep.subr.mxu0 0.0
    %654 = vmatpush1.msra.mxu0 0.0
    %655 = vmatprep.subr.mxu0 0.0
    %656 = vmatpush1.msra.mxu0 0.0
    %657 = vmatprep.subr.mxu0 0.0
    %658 = vmatpush1.msra.mxu0 0.0
    %659 = vmatprep.subr.mxu0 0.0
    %660 = vmatpush1.msra.mxu0 0.0
    %661 = vmatprep.subr.mxu0 0.0
    %662 = vmatpush1.msra.mxu0 0.0
    %663 = vmatprep.subr.mxu0 0.0
    %664 = vmatpush1.msra.mxu0 0.0
    %665 = vmatprep.subr.mxu0 0.0
    %666 = vmatpush1.msra.mxu0 0.0
    %667 = vmatprep.subr.mxu0 0.0
    %668 = vmatpush1.msra.mxu0 0.0
    %669 = vmatprep.subr.mxu0 0.0
    %670 = vmatpush1.msra.mxu0 0.0
    %671 = vmatprep.subr.mxu0 0.0
    %672 = vmatpush1.msra.mxu0 0.0
    %673 = vmatprep.subr.mxu0 0.0
    %674 = vmatpush1.msra.mxu0 0.0
    %675 = vmatprep.subr.mxu0 0.0
    %676 = vmatpush1.msra.mxu0 0.0
    %677 = vmatprep.subr.mxu0 0.0
    %678 = vmatpush1.msra.mxu0 0.0
    %679 = vmatprep.subr.mxu0 0.0
    %680 = vmatpush1.msra.mxu0 0.0
    %681 = vmatprep.subr.mxu0 0.0
    %682 = vmatpush1.msra.mxu0 0.0
    %683 = vmatprep.mubr.f32.mxu0 0.0
    %684 = vmatmul.mubr.f32.gmra.mrb[0].mxu0 %v602
    %v685 = vpop.f32.mrb[0].mxu0
    %v686 = vadd.f32 %v599, %v685
    %v687 = vpop.f32.mrb[0].mxu0
    %688 = vmatprep.mubr.f32.mxu0 0.0
    %689 = vmatmul.mubr.f32.gmra.mrb[0].mxu0 %v605
    %v690 = vpop.f32.mrb[0].mxu0
    %v691 = vadd.f32 %v599, %v690
    %v692 = vpop.f32.mrb[0].mxu0
    %693 = vmatprep.mubr.f32.mxu0 0.0
    %694 = vmatmul.mubr.f32.gmra.mrb[0].mxu0 %v608
    %v695 = vpop.f32.mrb[0].mxu0
    %v696 = vadd.f32 %v599, %v695
    %v697 = vpop.f32.mrb[0].mxu0
    %698 = vmatprep.mubr.f32.mxu0 0.0
    %699 = vmatmul.mubr.f32.gmra.mrb[0].mxu0 %v611
    %v700 = vpop.f32.mrb[0].mxu0
    %v701 = vadd.f32 %v599, %v700
    %v702 = vpop.f32.mrb[0].mxu0
    %703 = vmatprep.mubr.f32.mxu0 0.0
    %704 = vmatmul.mubr.f32.gmra.mrb[0].mxu0 %v614
    %v705 = vpop.f32.mrb[0].mxu0
    %v706 = vadd.f32 %v599, %v705
    %v707 = vpop.f32.mrb[0].mxu0
    %708 = vmatprep.mubr.f32.mxu0 0.0
    %709 = vmatmul.mubr.f32.gmra.mrb[0].mxu0 %v617
    %v710 = vpop.f32.mrb[0].mxu0
    %v711 = vadd.f32 %v599, %v710
    %v712 = vpop.f32.mrb[0].mxu0
    %713 = vdwg.mxu0
    %vm714 = vcmask 785408
    %715 = vst.msk [vmem:[#allocation3] sm:$0xff] %vm714, %v686
    %716 = vst.msk [vmem:[#allocation3 + $0x8] sm:$0xff] %vm714, %v691
    %717 = vst.msk [vmem:[#allocation3 + $0x10] sm:$0xff] %vm714, %v696
    %718 = vst.msk [vmem:[#allocation3 + $0x18] sm:$0xff] %vm714, %v701
    %719 = vst.msk [vmem:[#allocation3 + $0x20] sm:$0xff] %vm714, %v706
    %720 = vst.msk [vmem:[#allocation3 + $0x28] sm:$0xff] %vm714, %v711
    %v721 = vld [vmem:[#allocation4 + $0xa0] sm:$0xff]
    %v722 = vld [vmem:[#allocation4 + $0xa8] sm:$0xff]
    %v723 = vld [vmem:[#allocation4 + $0xb0] sm:$0xff]
    %v724 = vld [vmem:[#allocation4 + $0xb8] sm:$0xff]
    %v725 = vld [vmem:[#allocation4 + $0xc0] sm:$0xff]
    %v726 = vld [vmem:[#allocation4 + $0xc8] sm:$0xff]
    %v727 = vld [vmem:[#allocation4 + $0xd0] sm:$0xff]
    %v728 = vld [vmem:[#allocation4 + $0xd8] sm:$0xff]
    %v729 = vld [vmem:[#allocation4 + $0xe0] sm:$0xff]
    %v730 = vld [vmem:[#allocation4 + $0xe8] sm:$0xff]
    %v731 = vld [vmem:[#allocation4 + $0xf0] sm:$0xff]
    %v732 = vld [vmem:[#allocation4 + $0xf8] sm:$0xff]
    %v733 = vld [vmem:[#allocation4 + $0x100] sm:$0xff]
    %v734 = vld [vmem:[#allocation4 + $0x108] sm:$0xff]
    %v735 = vld [vmem:[#allocation4 + $0x110] sm:$0xff]
    %v736 = vld [vmem:[#allocation4 + $0x118] sm:$0xff]
    %s737 = scalar_lea.vmem [#allocation4], 288
    %v738 = vld [vmem:[%s737] ss:$8 sm:$0x3]
    %v739 = vld [vmem:[#allocation4 + $0x90] ss:$0 sm:$0xff]
    %v740 = vld [vmem:[#allocation3] sm:$0x3]
    %v741 = vadd.f32 %v740, %v739
    %v742 = vxor.u32 %v741, 2147483648
    %v743 = vmul.f32 %v742, 1.442695
    %v744 = vpow.pop %v743
    %v745 = vadd.f32 %v744, 1.0
    %v746 = vrcp.pop %v745
    %v747 = vmul.f32 1.0, %v746
    %749 = vrot.lane.b32.xlu0 %v739, 64
    %v750 = vpop.permute.xlu0 %749
    %v752 = vmul.f32 %v747, %v750
    %754 = vrot.lane.b32.xlu0 %v752, 64
    %v755 = vpop.permute.xlu0 %754
    %v757 = vadd.f32 %v740, %v755
    %v758 = vtanh.pop %v757
    %v759 = vsub.f32 1.0, %v747
    %761 = vrot.lane.b32.xlu0 %v758, 96
    %v762 = vpop.permute.xlu0 %761
    %v764 = vmul.f32 %v759, %v762
    %v765 = vmul.f32 %v747, 0.0
    %v766 = vadd.f32 %v764, %v765
    %768 = vrot.lane.b32.xlu0 %v766, 96
    %v769 = vpop.permute.xlu0 %768
    %vm771 = vcmask 261120
    %v772 = vsel %vm771, %v769, 0.0
    %v774 = vlaneseq
    %v775 = vshrl.u32 %v774, 7
    %v776 = vsub.s32 0, %v775
    %v777 = vrot.slane %v738, %v776
    %v778 = vlaneseq
    %v779 = vshrl.u32 %v778, 7
    %v780 = vsub.s32 1, %v779
    %v781 = vrot.slane %v738, %v780
    %vm784 = vcmask 523264
    %v786 = vsel %vm784, %v772, 0
    %788 = vmatprep.subr.mxu0 %v722
    %789 = vmatpush1.msra.mxu0 %v721
    %790 = vmatprep.subr.mxu0 %v724
    %791 = vmatpush1.msra.mxu0 %v723
    %792 = vmatprep.subr.mxu0 %v726
    %793 = vmatpush1.msra.mxu0 %v725
    %794 = vmatprep.subr.mxu0 %v728
    %795 = vmatpush1.msra.mxu0 %v727
    %796 = vmatprep.subr.mxu0 %v730
    %797 = vmatpush1.msra.mxu0 %v729
    %798 = vmatprep.subr.mxu0 %v732
    %799 = vmatpush1.msra.mxu0 %v731
    %800 = vmatprep.subr.mxu0 %v734
    %801 = vmatpush1.msra.mxu0 %v733
    %802 = vmatprep.subr.mxu0 %v736
    %803 = vmatpush1.msra.mxu0 %v735
    %804 = vmatprep.subr.mxu0 0.0
    %805 = vmatpush1.msra.mxu0 0.0
    %806 = vmatprep.subr.mxu0 0.0
    %807 = vmatpush1.msra.mxu0 0.0
    %808 = vmatprep.subr.mxu0 0.0
    %809 = vmatpush1.msra.mxu0 0.0
    %810 = vmatprep.subr.mxu0 0.0
    %811 = vmatpush1.msra.mxu0 0.0
    %812 = vmatprep.subr.mxu0 0.0
    %813 = vmatpush1.msra.mxu0 0.0
    %814 = vmatprep.subr.mxu0 0.0
    %815 = vmatpush1.msra.mxu0 0.0
    %816 = vmatprep.subr.mxu0 0.0
    %817 = vmatpush1.msra.mxu0 0.0
    %818 = vmatprep.subr.mxu0 0.0
    %819 = vmatpush1.msra.mxu0 0.0
    %820 = vmatprep.subr.mxu0 0.0
    %821 = vmatpush1.msra.mxu0 0.0
    %822 = vmatprep.subr.mxu0 0.0
    %823 = vmatpush1.msra.mxu0 0.0
    %824 = vmatprep.subr.mxu0 0.0
    %825 = vmatpush1.msra.mxu0 0.0
    %826 = vmatprep.subr.mxu0 0.0
    %827 = vmatpush1.msra.mxu0 0.0
    %828 = vmatprep.subr.mxu0 0.0
    %829 = vmatpush1.msra.mxu0 0.0
    %830 = vmatprep.subr.mxu0 0.0
    %831 = vmatpush1.msra.mxu0 0.0
    %832 = vmatprep.subr.mxu0 0.0
    %833 = vmatpush1.msra.mxu0 0.0
    %834 = vmatprep.subr.mxu0 0.0
    %835 = vmatpush1.msra.mxu0 0.0
    %836 = vmatprep.subr.mxu0 0.0
    %837 = vmatpush1.msra.mxu0 0.0
    %838 = vmatprep.subr.mxu0 0.0
    %839 = vmatpush1.msra.mxu0 0.0
    %840 = vmatprep.subr.mxu0 0.0
    %841 = vmatpush1.msra.mxu0 0.0
    %842 = vmatprep.subr.mxu0 0.0
    %843 = vmatpush1.msra.mxu0 0.0
    %844 = vmatprep.subr.mxu0 0.0
    %845 = vmatpush1.msra.mxu0 0.0
    %846 = vmatprep.subr.mxu0 0.0
    %847 = vmatpush1.msra.mxu0 0.0
    %848 = vmatprep.subr.mxu0 0.0
    %849 = vmatpush1.msra.mxu0 0.0
    %850 = vmatprep.subr.mxu0 0.0
    %851 = vmatpush1.msra.mxu0 0.0
    %852 = vmatprep.mubr.f32.mxu0 0.0
    %853 = vmatmul.mubr.f32.gmra.mrb[0].mxu0 %v786
    %v854 = vpop.f32.mrb[0].mxu0
    %v855 = vadd.f32 %v777, %v854
    %v856 = vpop.f32.mrb[0].mxu0
    %v857 = vadd.f32 %v781, %v856
    %858 = vdwg.mxu0
    %v859 = vxor.u32 %v855, 2147483648
    %v860 = vmul.f32 %v859, 1.442695
    %v861 = vpow.pop %v860
    %v862 = vadd.f32 %v861, 1.0
    %v863 = vrcp.pop %v862
    %v864 = vmul.f32 1.0, %v863
    %866 = vrot.lane.b32.xlu0 %v855, 32
    %v867 = vpop.permute.xlu0 %866
    %v869 = vmul.f32 %v864, %v867
    %871 = vrot.lane.b32.xlu0 %v869, 64
    %v872 = vpop.permute.xlu0 %871
    %v874 = vadd.f32 %v855, %v872
    %v875 = vtanh.pop %v874
    %v876 = vsub.f32 1.0, %v864
    %878 = vrot.lane.b32.xlu0 %v875, 96
    %v879 = vpop.permute.xlu0 %878
    %v881 = vmul.f32 %v876, %v879
    %v882 = vmul.f32 %v864, 0.0
    %v883 = vadd.f32 %v881, %v882
    %v884 = vld [vmem:[#allocation3 + $0x2] sm:$0x3]
    %v885 = vadd.f32 %v884, %v857
    %v886 = vxor.u32 %v885, 2147483648
    %v887 = vmul.f32 %v886, 1.442695
    %v888 = vpow.pop %v887
    %v889 = vadd.f32 %v888, 1.0
    %v890 = vrcp.pop %v889
    %v891 = vmul.f32 1.0, %v890
    %893 = vrot.lane.b32.xlu0 %v857, 64
    %v894 = vpop.permute.xlu0 %893
    %v896 = vmul.f32 %v891, %v894
    %898 = vrot.lane.b32.xlu0 %v896, 64
    %v899 = vpop.permute.xlu0 %898
    %v901 = vadd.f32 %v884, %v899
    %v902 = vtanh.pop %v901
    %v903 = vsub.f32 1.0, %v891
    %905 = vrot.lane.b32.xlu0 %v902, 96
    %v906 = vpop.permute.xlu0 %905
    %v908 = vmul.f32 %v903, %v906
    %v909 = vmul.f32 %v891, %v766
    %v910 = vadd.f32 %v908, %v909
    %912 = vrot.lane.b32.xlu0 %v910, 96
    %v913 = vpop.permute.xlu0 %912
    %v915 = vsel %vm771, %v913, %v883
    %v917 = vsel %vm784, %v915, 0
    %919 = vmatprep.subr.mxu0 %v722
    %920 = vmatpush1.msra.mxu0 %v721
    %921 = vmatprep.subr.mxu0 %v724
    %922 = vmatpush1.msra.mxu0 %v723
    %923 = vmatprep.subr.mxu0 %v726
    %924 = vmatpush1.msra.mxu0 %v725
    %925 = vmatprep.subr.mxu0 %v728
    %926 = vmatpush1.msra.mxu0 %v727
    %927 = vmatprep.subr.mxu0 %v730
    %928 = vmatpush1.msra.mxu0 %v729
    %929 = vmatprep.subr.mxu0 %v732
    %930 = vmatpush1.msra.mxu0 %v731
    %931 = vmatprep.subr.mxu0 %v734
    %932 = vmatpush1.msra.mxu0 %v733
    %933 = vmatprep.subr.mxu0 %v736
    %934 = vmatpush1.msra.mxu0 %v735
    %935 = vmatprep.subr.mxu0 0.0
    %936 = vmatpush1.msra.mxu0 0.0
    %937 = vmatprep.subr.mxu0 0.0
    %938 = vmatpush1.msra.mxu0 0.0
    %939 = vmatprep.subr.mxu0 0.0
    %940 = vmatpush1.msra.mxu0 0.0
    %941 = vmatprep.subr.mxu0 0.0
    %942 = vmatpush1.msra.mxu0 0.0
    %943 = vmatprep.subr.mxu0 0.0
    %944 = vmatpush1.msra.mxu0 0.0
    %945 = vmatprep.subr.mxu0 0.0
    %946 = vmatpush1.msra.mxu0 0.0
    %947 = vmatprep.subr.mxu0 0.0
    %948 = vmatpush1.msra.mxu0 0.0
    %949 = vmatprep.subr.mxu0 0.0
    %950 = vmatpush1.msra.mxu0 0.0
    %951 = vmatprep.subr.mxu0 0.0
    %952 = vmatpush1.msra.mxu0 0.0
    %953 = vmatprep.subr.mxu0 0.0
    %954 = vmatpush1.msra.mxu0 0.0
    %955 = vmatprep.subr.mxu0 0.0
    %956 = vmatpush1.msra.mxu0 0.0
    %957 = vmatprep.subr.mxu0 0.0
    %958 = vmatpush1.msra.mxu0 0.0
    %959 = vmatprep.subr.mxu0 0.0
    %960 = vmatpush1.msra.mxu0 0.0
    %961 = vmatprep.subr.mxu0 0.0
    %962 = vmatpush1.msra.mxu0 0.0
    %963 = vmatprep.subr.mxu0 0.0
    %964 = vmatpush1.msra.mxu0 0.0
    %965 = vmatprep.subr.mxu0 0.0
    %966 = vmatpush1.msra.mxu0 0.0
    %967 = vmatprep.subr.mxu0 0.0
    %968 = vmatpush1.msra.mxu0 0.0
    %969 = vmatprep.subr.mxu0 0.0
    %970 = vmatpush1.msra.mxu0 0.0
    %971 = vmatprep.subr.mxu0 0.0
    %972 = vmatpush1.msra.mxu0 0.0
    %973 = vmatprep.subr.mxu0 0.0
    %974 = vmatpush1.msra.mxu0 0.0
    %975 = vmatprep.subr.mxu0 0.0
    %976 = vmatpush1.msra.mxu0 0.0
    %977 = vmatprep.subr.mxu0 0.0
    %978 = vmatpush1.msra.mxu0 0.0
    %979 = vmatprep.subr.mxu0 0.0
    %980 = vmatpush1.msra.mxu0 0.0
    %981 = vmatprep.subr.mxu0 0.0
    %982 = vmatpush1.msra.mxu0 0.0
    %983 = vmatprep.mubr.f32.mxu0 0.0
    %984 = vmatmul.mubr.f32.gmra.mrb[0].mxu0 %v917
    %v985 = vpop.f32.mrb[0].mxu0
    %v986 = vadd.f32 %v777, %v985
    %v987 = vpop.f32.mrb[0].mxu0
    %v988 = vadd.f32 %v781, %v987
    %989 = vdwg.mxu0
    %v990 = vxor.u32 %v986, 2147483648
    %v991 = vmul.f32 %v990, 1.442695
    %v992 = vpow.pop %v991
    %v993 = vadd.f32 %v992, 1.0
    %v994 = vrcp.pop %v993
    %v995 = vmul.f32 1.0, %v994
    %997 = vrot.lane.b32.xlu0 %v986, 32
    %v998 = vpop.permute.xlu0 %997
    %v1000 = vmul.f32 %v995, %v998
    %1002 = vrot.lane.b32.xlu0 %v1000, 64
    %v1003 = vpop.permute.xlu0 %1002
    %v1005 = vadd.f32 %v986, %v1003
    %v1006 = vtanh.pop %v1005
    %v1007 = vsub.f32 1.0, %v995
    %1009 = vrot.lane.b32.xlu0 %v1006, 96
    %v1010 = vpop.permute.xlu0 %1009
    %v1012 = vmul.f32 %v1007, %v1010
    %v1013 = vmul.f32 %v995, %v883
    %v1014 = vadd.f32 %v1012, %v1013
    %v1015 = vld [vmem:[#allocation3 + $0x4] sm:$0x3]
    %v1016 = vadd.f32 %v1015, %v988
    %v1017 = vxor.u32 %v1016, 2147483648
    %v1018 = vmul.f32 %v1017, 1.442695
    %v1019 = vpow.pop %v1018
    %v1020 = vadd.f32 %v1019, 1.0
    %v1021 = vrcp.pop %v1020
    %v1022 = vmul.f32 1.0, %v1021
    %1024 = vrot.lane.b32.xlu0 %v988, 64
    %v1025 = vpop.permute.xlu0 %1024
    %v1027 = vmul.f32 %v1022, %v1025
    %1029 = vrot.lane.b32.xlu0 %v1027, 64
    %v1030 = vpop.permute.xlu0 %1029
    %v1032 = vadd.f32 %v1015, %v1030
    %v1033 = vtanh.pop %v1032
    %v1034 = vsub.f32 1.0, %v1022
    %1036 = vrot.lane.b32.xlu0 %v1033, 96
    %v1037 = vpop.permute.xlu0 %1036
    %v1039 = vmul.f32 %v1034, %v1037
    %v1040 = vmul.f32 %v1022, %v910
    %v1041 = vadd.f32 %v1039, %v1040
    %1043 = vrot.lane.b32.xlu0 %v1041, 96
    %v1044 = vpop.permute.xlu0 %1043
    %v1046 = vsel %vm771, %v1044, %v1014
    %v1048 = vsel %vm784, %v1046, 0
    %1050 = vmatprep.subr.mxu0 %v722
    %1051 = vmatpush1.msra.mxu0 %v721
    %1052 = vmatprep.subr.mxu0 %v724
    %1053 = vmatpush1.msra.mxu0 %v723
    %1054 = vmatprep.subr.mxu0 %v726
    %1055 = vmatpush1.msra.mxu0 %v725
    %1056 = vmatprep.subr.mxu0 %v728
    %1057 = vmatpush1.msra.mxu0 %v727
    %1058 = vmatprep.subr.mxu0 %v730
    %1059 = vmatpush1.msra.mxu0 %v729
    %1060 = vmatprep.subr.mxu0 %v732
    %1061 = vmatpush1.msra.mxu0 %v731
    %1062 = vmatprep.subr.mxu0 %v734
    %1063 = vmatpush1.msra.mxu0 %v733
    %1064 = vmatprep.subr.mxu0 %v736
    %1065 = vmatpush1.msra.mxu0 %v735
    %1066 = vmatprep.subr.mxu0 0.0
    %1067 = vmatpush1.msra.mxu0 0.0
    %1068 = vmatprep.subr.mxu0 0.0
    %1069 = vmatpush1.msra.mxu0 0.0
    %1070 = vmatprep.subr.mxu0 0.0
    %1071 = vmatpush1.msra.mxu0 0.0
    %1072 = vmatprep.subr.mxu0 0.0
    %1073 = vmatpush1.msra.mxu0 0.0
    %1074 = vmatprep.subr.mxu0 0.0
    %1075 = vmatpush1.msra.mxu0 0.0
    %1076 = vmatprep.subr.mxu0 0.0
    %1077 = vmatpush1.msra.mxu0 0.0
    %1078 = vmatprep.subr.mxu0 0.0
    %1079 = vmatpush1.msra.mxu0 0.0
    %1080 = vmatprep.subr.mxu0 0.0
    %1081 = vmatpush1.msra.mxu0 0.0
    %1082 = vmatprep.subr.mxu0 0.0
    %1083 = vmatpush1.msra.mxu0 0.0
    %1084 = vmatprep.subr.mxu0 0.0
    %1085 = vmatpush1.msra.mxu0 0.0
    %1086 = vmatprep.subr.mxu0 0.0
    %1087 = vmatpush1.msra.mxu0 0.0
    %1088 = vmatprep.subr.mxu0 0.0
    %1089 = vmatpush1.msra.mxu0 0.0
    %1090 = vmatprep.subr.mxu0 0.0
    %1091 = vmatpush1.msra.mxu0 0.0
    %1092 = vmatprep.subr.mxu0 0.0
    %1093 = vmatpush1.msra.mxu0 0.0
    %1094 = vmatprep.subr.mxu0 0.0
    %1095 = vmatpush1.msra.mxu0 0.0
    %1096 = vmatprep.subr.mxu0 0.0
    %1097 = vmatpush1.msra.mxu0 0.0
    %1098 = vmatprep.subr.mxu0 0.0
    %1099 = vmatpush1.msra.mxu0 0.0
    %1100 = vmatprep.subr.mxu0 0.0
    %1101 = vmatpush1.msra.mxu0 0.0
    %1102 = vmatprep.subr.mxu0 0.0
    %1103 = vmatpush1.msra.mxu0 0.0
    %1104 = vmatprep.subr.mxu0 0.0
    %1105 = vmatpush1.msra.mxu0 0.0
    %1106 = vmatprep.subr.mxu0 0.0
    %1107 = vmatpush1.msra.mxu0 0.0
    %1108 = vmatprep.subr.mxu0 0.0
    %1109 = vmatpush1.msra.mxu0 0.0
    %1110 = vmatprep.subr.mxu0 0.0
    %1111 = vmatpush1.msra.mxu0 0.0
    %1112 = vmatprep.subr.mxu0 0.0
    %1113 = vmatpush1.msra.mxu0 0.0
    %1114 = vmatprep.mubr.f32.mxu0 0.0
    %1115 = vmatmul.mubr.f32.gmra.mrb[0].mxu0 %v1048
    %v1116 = vpop.f32.mrb[0].mxu0
    %v1117 = vadd.f32 %v777, %v1116
    %v1118 = vpop.f32.mrb[0].mxu0
    %v1119 = vadd.f32 %v781, %v1118
    %1120 = vdwg.mxu0
    %v1121 = vxor.u32 %v1117, 2147483648
    %v1122 = vmul.f32 %v1121, 1.442695
    %v1123 = vpow.pop %v1122
    %v1124 = vadd.f32 %v1123, 1.0
    %v1125 = vrcp.pop %v1124
    %v1126 = vmul.f32 1.0, %v1125
    %1128 = vrot.lane.b32.xlu0 %v1117, 32
    %v1129 = vpop.permute.xlu0 %1128
    %v1131 = vmul.f32 %v1126, %v1129
    %1133 = vrot.lane.b32.xlu0 %v1131, 64
    %v1134 = vpop.permute.xlu0 %1133
    %v1136 = vadd.f32 %v1117, %v1134
    %v1137 = vtanh.pop %v1136
    %v1138 = vsub.f32 1.0, %v1126
    %1140 = vrot.lane.b32.xlu0 %v1137, 96
    %v1141 = vpop.permute.xlu0 %1140
    %v1143 = vmul.f32 %v1138, %v1141
    %v1144 = vmul.f32 %v1126, %v1014
    %v1145 = vadd.f32 %v1143, %v1144
    %v1146 = vld [vmem:[#allocation3 + $0x6] sm:$0x3]
    %v1147 = vadd.f32 %v1146, %v1119
    %v1148 = vxor.u32 %v1147, 2147483648
    %v1149 = vmul.f32 %v1148, 1.442695
    %v1150 = vpow.pop %v1149
    %v1151 = vadd.f32 %v1150, 1.0
    %v1152 = vrcp.pop %v1151
    %v1153 = vmul.f32 1.0, %v1152
    %1155 = vrot.lane.b32.xlu0 %v1119, 64
    %v1156 = vpop.permute.xlu0 %1155
    %v1158 = vmul.f32 %v1153, %v1156
    %1160 = vrot.lane.b32.xlu0 %v1158, 64
    %v1161 = vpop.permute.xlu0 %1160
    %v1163 = vadd.f32 %v1146, %v1161
    %v1164 = vtanh.pop %v1163
    %v1165 = vsub.f32 1.0, %v1153
    %1167 = vrot.lane.b32.xlu0 %v1164, 96
    %v1168 = vpop.permute.xlu0 %1167
    %v1170 = vmul.f32 %v1165, %v1168
    %v1171 = vmul.f32 %v1153, %v1041
    %v1172 = vadd.f32 %v1170, %v1171
    %1174 = vrot.lane.b32.xlu0 %v1172, 96
    %v1175 = vpop.permute.xlu0 %1174
    %v1177 = vsel %vm771, %v1175, %v1145
    %v1179 = vsel %vm784, %v1177, 0
    %1181 = vmatprep.subr.mxu0 %v722
    %1182 = vmatpush1.msra.mxu0 %v721
    %1183 = vmatprep.subr.mxu0 %v724
    %1184 = vmatpush1.msra.mxu0 %v723
    %1185 = vmatprep.subr.mxu0 %v726
    %1186 = vmatpush1.msra.mxu0 %v725
    %1187 = vmatprep.subr.mxu0 %v728
    %1188 = vmatpush1.msra.mxu0 %v727
    %1189 = vmatprep.subr.mxu0 %v730
    %1190 = vmatpush1.msra.mxu0 %v729
    %1191 = vmatprep.subr.mxu0 %v732
    %1192 = vmatpush1.msra.mxu0 %v731
    %1193 = vmatprep.subr.mxu0 %v734
    %1194 = vmatpush1.msra.mxu0 %v733
    %1195 = vmatprep.subr.mxu0 %v736
    %1196 = vmatpush1.msra.mxu0 %v735
    %1197 = vmatprep.subr.mxu0 0.0
    %1198 = vmatpush1.msra.mxu0 0.0
    %1199 = vmatprep.subr.mxu0 0.0
    %1200 = vmatpush1.msra.mxu0 0.0
    %1201 = vmatprep.subr.mxu0 0.0
    %1202 = vmatpush1.msra.mxu0 0.0
    %1203 = vmatprep.subr.mxu0 0.0
    %1204 = vmatpush1.msra.mxu0 0.0
    %1205 = vmatprep.subr.mxu0 0.0
    %1206 = vmatpush1.msra.mxu0 0.0
    %1207 = vmatprep.subr.mxu0 0.0
    %1208 = vmatpush1.msra.mxu0 0.0
    %1209 = vmatprep.subr.mxu0 0.0
    %1210 = vmatpush1.msra.mxu0 0.0
    %1211 = vmatprep.subr.mxu0 0.0
    %1212 = vmatpush1.msra.mxu0 0.0
    %1213 = vmatprep.subr.mxu0 0.0
    %1214 = vmatpush1.msra.mxu0 0.0
    %1215 = vmatprep.subr.mxu0 0.0
    %1216 = vmatpush1.msra.mxu0 0.0
    %1217 = vmatprep.subr.mxu0 0.0
    %1218 = vmatpush1.msra.mxu0 0.0
    %1219 = vmatprep.subr.mxu0 0.0
    %1220 = vmatpush1.msra.mxu0 0.0
    %1221 = vmatprep.subr.mxu0 0.0
    %1222 = vmatpush1.msra.mxu0 0.0
    %1223 = vmatprep.subr.mxu0 0.0
    %1224 = vmatpush1.msra.mxu0 0.0
    %1225 = vmatprep.subr.mxu0 0.0
    %1226 = vmatpush1.msra.mxu0 0.0
    %1227 = vmatprep.subr.mxu0 0.0
    %1228 = vmatpush1.msra.mxu0 0.0
    %1229 = vmatprep.subr.mxu0 0.0
    %1230 = vmatpush1.msra.mxu0 0.0
    %1231 = vmatprep.subr.mxu0 0.0
    %1232 = vmatpush1.msra.mxu0 0.0
    %1233 = vmatprep.subr.mxu0 0.0
    %1234 = vmatpush1.msra.mxu0 0.0
    %1235 = vmatprep.subr.mxu0 0.0
    %1236 = vmatpush1.msra.mxu0 0.0
    %1237 = vmatprep.subr.mxu0 0.0
    %1238 = vmatpush1.msra.mxu0 0.0
    %1239 = vmatprep.subr.mxu0 0.0
    %1240 = vmatpush1.msra.mxu0 0.0
    %1241 = vmatprep.subr.mxu0 0.0
    %1242 = vmatpush1.msra.mxu0 0.0
    %1243 = vmatprep.subr.mxu0 0.0
    %1244 = vmatpush1.msra.mxu0 0.0
    %1245 = vmatprep.mubr.f32.mxu0 0.0
    %1246 = vmatmul.mubr.f32.gmra.mrb[0].mxu0 %v1179
    %v1247 = vpop.f32.mrb[0].mxu0
    %v1248 = vadd.f32 %v777, %v1247
    %v1249 = vpop.f32.mrb[0].mxu0
    %v1250 = vadd.f32 %v781, %v1249
    %1251 = vdwg.mxu0
    %v1252 = vxor.u32 %v1248, 2147483648
    %v1253 = vmul.f32 %v1252, 1.442695
    %v1254 = vpow.pop %v1253
    %v1255 = vadd.f32 %v1254, 1.0
    %v1256 = vrcp.pop %v1255
    %v1257 = vmul.f32 1.0, %v1256
    %1259 = vrot.lane.b32.xlu0 %v1248, 32
    %v1260 = vpop.permute.xlu0 %1259
    %v1262 = vmul.f32 %v1257, %v1260
    %1264 = vrot.lane.b32.xlu0 %v1262, 64
    %v1265 = vpop.permute.xlu0 %1264
    %v1267 = vadd.f32 %v1248, %v1265
    %v1268 = vtanh.pop %v1267
    %v1269 = vsub.f32 1.0, %v1257
    %1271 = vrot.lane.b32.xlu0 %v1268, 96
    %v1272 = vpop.permute.xlu0 %1271
    %v1274 = vmul.f32 %v1269, %v1272
    %v1275 = vmul.f32 %v1257, %v1145
    %v1276 = vadd.f32 %v1274, %v1275
    %v1277 = vld [vmem:[#allocation3 + $0x8] sm:$0x3]
    %v1278 = vadd.f32 %v1277, %v1250
    %v1279 = vxor.u32 %v1278, 2147483648
    %v1280 = vmul.f32 %v1279, 1.442695
    %v1281 = vpow.pop %v1280
    %v1282 = vadd.f32 %v1281, 1.0
    %v1283 = vrcp.pop %v1282
    %v1284 = vmul.f32 1.0, %v1283
    %1286 = vrot.lane.b32.xlu0 %v1250, 64
    %v1287 = vpop.permute.xlu0 %1286
    %v1289 = vmul.f32 %v1284, %v1287
    %1291 = vrot.lane.b32.xlu0 %v1289, 64
    %v1292 = vpop.permute.xlu0 %1291
    %v1294 = vadd.f32 %v1277, %v1292
    %v1295 = vtanh.pop %v1294
    %v1296 = vsub.f32 1.0, %v1284
    %1298 = vrot.lane.b32.xlu0 %v1295, 96
    %v1299 = vpop.permute.xlu0 %1298
    %v1301 = vmul.f32 %v1296, %v1299
    %v1302 = vmul.f32 %v1284, %v1172
    %v1303 = vadd.f32 %v1301, %v1302
    %1305 = vrot.lane.b32.xlu0 %v1303, 96
    %v1306 = vpop.permute.xlu0 %1305
    %v1308 = vsel %vm771, %v1306, %v1276
    %v1310 = vsel %vm784, %v1308, 0
    %1312 = vmatprep.subr.mxu0 %v722
    %1313 = vmatpush1.msra.mxu0 %v721
    %1314 = vmatprep.subr.mxu0 %v724
    %1315 = vmatpush1.msra.mxu0 %v723
    %1316 = vmatprep.subr.mxu0 %v726
    %1317 = vmatpush1.msra.mxu0 %v725
    %1318 = vmatprep.subr.mxu0 %v728
    %1319 = vmatpush1.msra.mxu0 %v727
    %1320 = vmatprep.subr.mxu0 %v730
    %1321 = vmatpush1.msra.mxu0 %v729
    %1322 = vmatprep.subr.mxu0 %v732
    %1323 = vmatpush1.msra.mxu0 %v731
    %1324 = vmatprep.subr.mxu0 %v734
    %1325 = vmatpush1.msra.mxu0 %v733
    %1326 = vmatprep.subr.mxu0 %v736
    %1327 = vmatpush1.msra.mxu0 %v735
    %1328 = vmatprep.subr.mxu0 0.0
    %1329 = vmatpush1.msra.mxu0 0.0
    %1330 = vmatprep.subr.mxu0 0.0
    %1331 = vmatpush1.msra.mxu0 0.0
    %1332 = vmatprep.subr.mxu0 0.0
    %1333 = vmatpush1.msra.mxu0 0.0
    %1334 = vmatprep.subr.mxu0 0.0
    %1335 = vmatpush1.msra.mxu0 0.0
    %1336 = vmatprep.subr.mxu0 0.0
    %1337 = vmatpush1.msra.mxu0 0.0
    %1338 = vmatprep.subr.mxu0 0.0
    %1339 = vmatpush1.msra.mxu0 0.0
    %1340 = vmatprep.subr.mxu0 0.0
    %1341 = vmatpush1.msra.mxu0 0.0
    %1342 = vmatprep.subr.mxu0 0.0
    %1343 = vmatpush1.msra.mxu0 0.0
    %1344 = vmatprep.subr.mxu0 0.0
    %1345 = vmatpush1.msra.mxu0 0.0
    %1346 = vmatprep.subr.mxu0 0.0
    %1347 = vmatpush1.msra.mxu0 0.0
    %1348 = vmatprep.subr.mxu0 0.0
    %1349 = vmatpush1.msra.mxu0 0.0
    %1350 = vmatprep.subr.mxu0 0.0
    %1351 = vmatpush1.msra.mxu0 0.0
    %1352 = vmatprep.subr.mxu0 0.0
    %1353 = vmatpush1.msra.mxu0 0.0
    %1354 = vmatprep.subr.mxu0 0.0
    %1355 = vmatpush1.msra.mxu0 0.0
    %1356 = vmatprep.subr.mxu0 0.0
    %1357 = vmatpush1.msra.mxu0 0.0
    %1358 = vmatprep.subr.mxu0 0.0
    %1359 = vmatpush1.msra.mxu0 0.0
    %1360 = vmatprep.subr.mxu0 0.0
    %1361 = vmatpush1.msra.mxu0 0.0
    %1362 = vmatprep.subr.mxu0 0.0
    %1363 = vmatpush1.msra.mxu0 0.0
    %1364 = vmatprep.subr.mxu0 0.0
    %1365 = vmatpush1.msra.mxu0 0.0
    %1366 = vmatprep.subr.mxu0 0.0
    %1367 = vmatpush1.msra.mxu0 0.0
    %1368 = vmatprep.subr.mxu0 0.0
    %1369 = vmatpush1.msra.mxu0 0.0
    %1370 = vmatprep.subr.mxu0 0.0
    %1371 = vmatpush1.msra.mxu0 0.0
    %1372 = vmatprep.subr.mxu0 0.0
    %1373 = vmatpush1.msra.mxu0 0.0
    %1374 = vmatprep.subr.mxu0 0.0
    %1375 = vmatpush1.msra.mxu0 0.0
    %1376 = vmatprep.mubr.f32.mxu0 0.0
    %1377 = vmatmul.mubr.f32.gmra.mrb[0].mxu0 %v1310
    %v1378 = vpop.f32.mrb[0].mxu0
    %v1379 = vadd.f32 %v777, %v1378
    %v1380 = vpop.f32.mrb[0].mxu0
    %v1381 = vadd.f32 %v781, %v1380
    %1382 = vdwg.mxu0
    %v1383 = vxor.u32 %v1379, 2147483648
    %v1384 = vmul.f32 %v1383, 1.442695
    %v1385 = vpow.pop %v1384
    %v1386 = vadd.f32 %v1385, 1.0
    %v1387 = vrcp.pop %v1386
    %v1388 = vmul.f32 1.0, %v1387
    %1390 = vrot.lane.b32.xlu0 %v1379, 32
    %v1391 = vpop.permute.xlu0 %1390
    %v1393 = vmul.f32 %v1388, %v1391
    %1395 = vrot.lane.b32.xlu0 %v1393, 64
    %v1396 = vpop.permute.xlu0 %1395
    %v1398 = vadd.f32 %v1379, %v1396
    %v1399 = vtanh.pop %v1398
    %v1400 = vsub.f32 1.0, %v1388
    %1402 = vrot.lane.b32.xlu0 %v1399, 96
    %v1403 = vpop.permute.xlu0 %1402
    %v1405 = vmul.f32 %v1400, %v1403
    %v1406 = vmul.f32 %v1388, %v1276
    %v1407 = vadd.f32 %v1405, %v1406
    %v1408 = vld [vmem:[#allocation3 + $0xa] sm:$0x3]
    %v1409 = vadd.f32 %v1408, %v1381
    %v1410 = vxor.u32 %v1409, 2147483648
    %v1411 = vmul.f32 %v1410, 1.442695
    %v1412 = vpow.pop %v1411
    %v1413 = vadd.f32 %v1412, 1.0
    %v1414 = vrcp.pop %v1413
    %v1415 = vmul.f32 1.0, %v1414
    %1417 = vrot.lane.b32.xlu0 %v1381, 64
    %v1418 = vpop.permute.xlu0 %1417
    %v1420 = vmul.f32 %v1415, %v1418
    %1422 = vrot.lane.b32.xlu0 %v1420, 64
    %v1423 = vpop.permute.xlu0 %1422
    %v1425 = vadd.f32 %v1408, %v1423
    %v1426 = vtanh.pop %v1425
    %v1427 = vsub.f32 1.0, %v1415
    %1429 = vrot.lane.b32.xlu0 %v1426, 96
    %v1430 = vpop.permute.xlu0 %1429
    %v1432 = vmul.f32 %v1427, %v1430
    %v1433 = vmul.f32 %v1415, %v1303
    %v1434 = vadd.f32 %v1432, %v1433
    %1436 = vrot.lane.b32.xlu0 %v1434, 96
    %v1437 = vpop.permute.xlu0 %1436
    %v1439 = vsel %vm771, %v1437, %v1407
    %v1441 = vsel %vm784, %v1439, 0
    %1443 = vmatprep.subr.mxu0 %v722
    %1444 = vmatpush1.msra.mxu0 %v721
    %1445 = vmatprep.subr.mxu0 %v724
    %1446 = vmatpush1.msra.mxu0 %v723
    %1447 = vmatprep.subr.mxu0 %v726
    %1448 = vmatpush1.msra.mxu0 %v725
    %1449 = vmatprep.subr.mxu0 %v728
    %1450 = vmatpush1.msra.mxu0 %v727
    %1451 = vmatprep.subr.mxu0 %v730
    %1452 = vmatpush1.msra.mxu0 %v729
    %1453 = vmatprep.subr.mxu0 %v732
    %1454 = vmatpush1.msra.mxu0 %v731
    %1455 = vmatprep.subr.mxu0 %v734
    %1456 = vmatpush1.msra.mxu0 %v733
    %1457 = vmatprep.subr.mxu0 %v736
    %1458 = vmatpush1.msra.mxu0 %v735
    %1459 = vmatprep.subr.mxu0 0.0
    %1460 = vmatpush1.msra.mxu0 0.0
    %1461 = vmatprep.subr.mxu0 0.0
    %1462 = vmatpush1.msra.mxu0 0.0
    %1463 = vmatprep.subr.mxu0 0.0
    %1464 = vmatpush1.msra.mxu0 0.0
    %1465 = vmatprep.subr.mxu0 0.0
    %1466 = vmatpush1.msra.mxu0 0.0
    %1467 = vmatprep.subr.mxu0 0.0
    %1468 = vmatpush1.msra.mxu0 0.0
    %1469 = vmatprep.subr.mxu0 0.0
    %1470 = vmatpush1.msra.mxu0 0.0
    %1471 = vmatprep.subr.mxu0 0.0
    %1472 = vmatpush1.msra.mxu0 0.0
    %1473 = vmatprep.subr.mxu0 0.0
    %1474 = vmatpush1.msra.mxu0 0.0
    %1475 = vmatprep.subr.mxu0 0.0
    %1476 = vmatpush1.msra.mxu0 0.0
    %1477 = vmatprep.subr.mxu0 0.0
    %1478 = vmatpush1.msra.mxu0 0.0
    %1479 = vmatprep.subr.mxu0 0.0
    %1480 = vmatpush1.msra.mxu0 0.0
    %1481 = vmatprep.subr.mxu0 0.0
    %1482 = vmatpush1.msra.mxu0 0.0
    %1483 = vmatprep.subr.mxu0 0.0
    %1484 = vmatpush1.msra.mxu0 0.0
    %1485 = vmatprep.subr.mxu0 0.0
    %1486 = vmatpush1.msra.mxu0 0.0
    %1487 = vmatprep.subr.mxu0 0.0
    %1488 = vmatpush1.msra.mxu0 0.0
    %1489 = vmatprep.subr.mxu0 0.0
    %1490 = vmatpush1.msra.mxu0 0.0
    %1491 = vmatprep.subr.mxu0 0.0
    %1492 = vmatpush1.msra.mxu0 0.0
    %1493 = vmatprep.subr.mxu0 0.0
    %1494 = vmatpush1.msra.mxu0 0.0
    %1495 = vmatprep.subr.mxu0 0.0
    %1496 = vmatpush1.msra.mxu0 0.0
    %1497 = vmatprep.subr.mxu0 0.0
    %1498 = vmatpush1.msra.mxu0 0.0
    %1499 = vmatprep.subr.mxu0 0.0
    %1500 = vmatpush1.msra.mxu0 0.0
    %1501 = vmatprep.subr.mxu0 0.0
    %1502 = vmatpush1.msra.mxu0 0.0
    %1503 = vmatprep.subr.mxu0 0.0
    %1504 = vmatpush1.msra.mxu0 0.0
    %1505 = vmatprep.subr.mxu0 0.0
    %1506 = vmatpush1.msra.mxu0 0.0
    %1507 = vmatprep.mubr.f32.mxu0 0.0
    %1508 = vmatmul.mubr.f32.gmra.mrb[0].mxu0 %v1441
    %v1509 = vpop.f32.mrb[0].mxu0
    %v1510 = vadd.f32 %v777, %v1509
    %v1511 = vpop.f32.mrb[0].mxu0
    %v1512 = vadd.f32 %v781, %v1511
    %1513 = vdwg.mxu0
    %v1514 = vxor.u32 %v1510, 2147483648
    %v1515 = vmul.f32 %v1514, 1.442695
    %v1516 = vpow.pop %v1515
    %v1517 = vadd.f32 %v1516, 1.0
    %v1518 = vrcp.pop %v1517
    %v1519 = vmul.f32 1.0, %v1518
    %1521 = vrot.lane.b32.xlu0 %v1510, 32
    %v1522 = vpop.permute.xlu0 %1521
    %v1524 = vmul.f32 %v1519, %v1522
    %1526 = vrot.lane.b32.xlu0 %v1524, 64
    %v1527 = vpop.permute.xlu0 %1526
    %v1529 = vadd.f32 %v1510, %v1527
    %v1530 = vtanh.pop %v1529
    %v1531 = vsub.f32 1.0, %v1519
    %1533 = vrot.lane.b32.xlu0 %v1530, 96
    %v1534 = vpop.permute.xlu0 %1533
    %v1536 = vmul.f32 %v1531, %v1534
    %v1537 = vmul.f32 %v1519, %v1407
    %v1538 = vadd.f32 %v1536, %v1537
    %v1539 = vld [vmem:[#allocation3 + $0xc] sm:$0x3]
    %v1540 = vadd.f32 %v1539, %v1512
    %v1541 = vxor.u32 %v1540, 2147483648
    %v1542 = vmul.f32 %v1541, 1.442695
    %v1543 = vpow.pop %v1542
    %v1544 = vadd.f32 %v1543, 1.0
    %v1545 = vrcp.pop %v1544
    %v1546 = vmul.f32 1.0, %v1545
    %1548 = vrot.lane.b32.xlu0 %v1512, 64
    %v1549 = vpop.permute.xlu0 %1548
    %v1551 = vmul.f32 %v1546, %v1549
    %1553 = vrot.lane.b32.xlu0 %v1551, 64
    %v1554 = vpop.permute.xlu0 %1553
    %v1556 = vadd.f32 %v1539, %v1554
    %v1557 = vtanh.pop %v1556
    %v1558 = vsub.f32 1.0, %v1546
    %1560 = vrot.lane.b32.xlu0 %v1557, 96
    %v1561 = vpop.permute.xlu0 %1560
    %v1563 = vmul.f32 %v1558, %v1561
    %v1564 = vmul.f32 %v1546, %v1434
    %v1565 = vadd.f32 %v1563, %v1564
    %1567 = vrot.lane.b32.xlu0 %v1565, 96
    %v1568 = vpop.permute.xlu0 %1567
    %v1570 = vsel %vm771, %v1568, %v1538
    %v1572 = vsel %vm784, %v1570, 0
    %1574 = vmatprep.subr.mxu0 %v722
    %1575 = vmatpush1.msra.mxu0 %v721
    %1576 = vmatprep.subr.mxu0 %v724
    %1577 = vmatpush1.msra.mxu0 %v723
    %1578 = vmatprep.subr.mxu0 %v726
    %1579 = vmatpush1.msra.mxu0 %v725
    %1580 = vmatprep.subr.mxu0 %v728
    %1581 = vmatpush1.msra.mxu0 %v727
    %1582 = vmatprep.subr.mxu0 %v730
    %1583 = vmatpush1.msra.mxu0 %v729
    %1584 = vmatprep.subr.mxu0 %v732
    %1585 = vmatpush1.msra.mxu0 %v731
    %1586 = vmatprep.subr.mxu0 %v734
    %1587 = vmatpush1.msra.mxu0 %v733
    %1588 = vmatprep.subr.mxu0 %v736
    %1589 = vmatpush1.msra.mxu0 %v735
    %1590 = vmatprep.subr.mxu0 0.0
    %1591 = vmatpush1.msra.mxu0 0.0
    %1592 = vmatprep.subr.mxu0 0.0
    %1593 = vmatpush1.msra.mxu0 0.0
    %1594 = vmatprep.subr.mxu0 0.0
    %1595 = vmatpush1.msra.mxu0 0.0
    %1596 = vmatprep.subr.mxu0 0.0
    %1597 = vmatpush1.msra.mxu0 0.0
    %1598 = vmatprep.subr.mxu0 0.0
    %1599 = vmatpush1.msra.mxu0 0.0
    %1600 = vmatprep.subr.mxu0 0.0
    %1601 = vmatpush1.msra.mxu0 0.0
    %1602 = vmatprep.subr.mxu0 0.0
    %1603 = vmatpush1.msra.mxu0 0.0
    %1604 = vmatprep.subr.mxu0 0.0
    %1605 = vmatpush1.msra.mxu0 0.0
    %1606 = vmatprep.subr.mxu0 0.0
    %1607 = vmatpush1.msra.mxu0 0.0
    %1608 = vmatprep.subr.mxu0 0.0
    %1609 = vmatpush1.msra.mxu0 0.0
    %1610 = vmatprep.subr.mxu0 0.0
    %1611 = vmatpush1.msra.mxu0 0.0
    %1612 = vmatprep.subr.mxu0 0.0
    %1613 = vmatpush1.msra.mxu0 0.0
    %1614 = vmatprep.subr.mxu0 0.0
    %1615 = vmatpush1.msra.mxu0 0.0
    %1616 = vmatprep.subr.mxu0 0.0
    %1617 = vmatpush1.msra.mxu0 0.0
    %1618 = vmatprep.subr.mxu0 0.0
    %1619 = vmatpush1.msra.mxu0 0.0
    %1620 = vmatprep.subr.mxu0 0.0
    %1621 = vmatpush1.msra.mxu0 0.0
    %1622 = vmatprep.subr.mxu0 0.0
    %1623 = vmatpush1.msra.mxu0 0.0
    %1624 = vmatprep.subr.mxu0 0.0
    %1625 = vmatpush1.msra.mxu0 0.0
    %1626 = vmatprep.subr.mxu0 0.0
    %1627 = vmatpush1.msra.mxu0 0.0
    %1628 = vmatprep.subr.mxu0 0.0
    %1629 = vmatpush1.msra.mxu0 0.0
    %1630 = vmatprep.subr.mxu0 0.0
    %1631 = vmatpush1.msra.mxu0 0.0
    %1632 = vmatprep.subr.mxu0 0.0
    %1633 = vmatpush1.msra.mxu0 0.0
    %1634 = vmatprep.subr.mxu0 0.0
    %1635 = vmatpush1.msra.mxu0 0.0
    %1636 = vmatprep.subr.mxu0 0.0
    %1637 = vmatpush1.msra.mxu0 0.0
    %1638 = vmatprep.mubr.f32.mxu0 0.0
    %1639 = vmatmul.mubr.f32.gmra.mrb[0].mxu0 %v1572
    %v1640 = vpop.f32.mrb[0].mxu0
    %v1641 = vadd.f32 %v777, %v1640
    %v1642 = vpop.f32.mrb[0].mxu0
    %v1643 = vadd.f32 %v781, %v1642
    %1644 = vdwg.mxu0
    %v1645 = vxor.u32 %v1641, 2147483648
    %v1646 = vmul.f32 %v1645, 1.442695
    %v1647 = vpow.pop %v1646
    %v1648 = vadd.f32 %v1647, 1.0
    %v1649 = vrcp.pop %v1648
    %v1650 = vmul.f32 1.0, %v1649
    %1652 = vrot.lane.b32.xlu0 %v1641, 32
    %v1653 = vpop.permute.xlu0 %1652
    %v1655 = vmul.f32 %v1650, %v1653
    %1657 = vrot.lane.b32.xlu0 %v1655, 64
    %v1658 = vpop.permute.xlu0 %1657
    %v1660 = vadd.f32 %v1641, %v1658
    %v1661 = vtanh.pop %v1660
    %v1662 = vsub.f32 1.0, %v1650
    %1664 = vrot.lane.b32.xlu0 %v1661, 96
    %v1665 = vpop.permute.xlu0 %1664
    %v1667 = vmul.f32 %v1662, %v1665
    %v1668 = vmul.f32 %v1650, %v1538
    %v1669 = vadd.f32 %v1667, %v1668
    %v1670 = vld [vmem:[#allocation3 + $0xe] sm:$0x3]
    %v1671 = vadd.f32 %v1670, %v1643
    %v1672 = vxor.u32 %v1671, 2147483648
    %v1673 = vmul.f32 %v1672, 1.442695
    %v1674 = vpow.pop %v1673
    %v1675 = vadd.f32 %v1674, 1.0
    %v1676 = vrcp.pop %v1675
    %v1677 = vmul.f32 1.0, %v1676
    %1679 = vrot.lane.b32.xlu0 %v1643, 64
    %v1680 = vpop.permute.xlu0 %1679
    %v1682 = vmul.f32 %v1677, %v1680
    %1684 = vrot.lane.b32.xlu0 %v1682, 64
    %v1685 = vpop.permute.xlu0 %1684
    %v1687 = vadd.f32 %v1670, %v1685
    %v1688 = vtanh.pop %v1687
    %v1689 = vsub.f32 1.0, %v1677
    %1691 = vrot.lane.b32.xlu0 %v1688, 96
    %v1692 = vpop.permute.xlu0 %1691
    %v1694 = vmul.f32 %v1689, %v1692
    %v1695 = vmul.f32 %v1677, %v1565
    %v1696 = vadd.f32 %v1694, %v1695
    %1698 = vrot.lane.b32.xlu0 %v1696, 96
    %v1699 = vpop.permute.xlu0 %1698
    %v1701 = vsel %vm771, %v1699, %v1669
    %v1703 = vsel %vm784, %v1701, 0
    %1705 = vmatprep.subr.mxu0 %v722
    %1706 = vmatpush1.msra.mxu0 %v721
    %1707 = vmatprep.subr.mxu0 %v724
    %1708 = vmatpush1.msra.mxu0 %v723
    %1709 = vmatprep.subr.mxu0 %v726
    %1710 = vmatpush1.msra.mxu0 %v725
    %1711 = vmatprep.subr.mxu0 %v728
    %1712 = vmatpush1.msra.mxu0 %v727
    %1713 = vmatprep.subr.mxu0 %v730
    %1714 = vmatpush1.msra.mxu0 %v729
    %1715 = vmatprep.subr.mxu0 %v732
    %1716 = vmatpush1.msra.mxu0 %v731
    %1717 = vmatprep.subr.mxu0 %v734
    %1718 = vmatpush1.msra.mxu0 %v733
    %1719 = vmatprep.subr.mxu0 %v736
    %1720 = vmatpush1.msra.mxu0 %v735
    %1721 = vmatprep.subr.mxu0 0.0
    %1722 = vmatpush1.msra.mxu0 0.0
    %1723 = vmatprep.subr.mxu0 0.0
    %1724 = vmatpush1.msra.mxu0 0.0
    %1725 = vmatprep.subr.mxu0 0.0
    %1726 = vmatpush1.msra.mxu0 0.0
    %1727 = vmatprep.subr.mxu0 0.0
    %1728 = vmatpush1.msra.mxu0 0.0
    %1729 = vmatprep.subr.mxu0 0.0
    %1730 = vmatpush1.msra.mxu0 0.0
    %1731 = vmatprep.subr.mxu0 0.0
    %1732 = vmatpush1.msra.mxu0 0.0
    %1733 = vmatprep.subr.mxu0 0.0
    %1734 = vmatpush1.msra.mxu0 0.0
    %1735 = vmatprep.subr.mxu0 0.0
    %1736 = vmatpush1.msra.mxu0 0.0
    %1737 = vmatprep.subr.mxu0 0.0
    %1738 = vmatpush1.msra.mxu0 0.0
    %1739 = vmatprep.subr.mxu0 0.0
    %1740 = vmatpush1.msra.mxu0 0.0
    %1741 = vmatprep.subr.mxu0 0.0
    %1742 = vmatpush1.msra.mxu0 0.0
    %1743 = vmatprep.subr.mxu0 0.0
    %1744 = vmatpush1.msra.mxu0 0.0
    %1745 = vmatprep.subr.mxu0 0.0
    %1746 = vmatpush1.msra.mxu0 0.0
    %1747 = vmatprep.subr.mxu0 0.0
    %1748 = vmatpush1.msra.mxu0 0.0
    %1749 = vmatprep.subr.mxu0 0.0
    %1750 = vmatpush1.msra.mxu0 0.0
    %1751 = vmatprep.subr.mxu0 0.0
    %1752 = vmatpush1.msra.mxu0 0.0
    %1753 = vmatprep.subr.mxu0 0.0
    %1754 = vmatpush1.msra.mxu0 0.0
    %1755 = vmatprep.subr.mxu0 0.0
    %1756 = vmatpush1.msra.mxu0 0.0
    %1757 = vmatprep.subr.mxu0 0.0
    %1758 = vmatpush1.msra.mxu0 0.0
    %1759 = vmatprep.subr.mxu0 0.0
    %1760 = vmatpush1.msra.mxu0 0.0
    %1761 = vmatprep.subr.mxu0 0.0
    %1762 = vmatpush1.msra.mxu0 0.0
    %1763 = vmatprep.subr.mxu0 0.0
    %1764 = vmatpush1.msra.mxu0 0.0
    %1765 = vmatprep.subr.mxu0 0.0
    %1766 = vmatpush1.msra.mxu0 0.0
    %1767 = vmatprep.subr.mxu0 0.0
    %1768 = vmatpush1.msra.mxu0 0.0
    %1769 = vmatprep.mubr.f32.mxu0 0.0
    %1770 = vmatmul.mubr.f32.gmra.mrb[0].mxu0 %v1703
    %v1771 = vpop.f32.mrb[0].mxu0
    %v1772 = vadd.f32 %v777, %v1771
    %v1773 = vpop.f32.mrb[0].mxu0
    %v1774 = vadd.f32 %v781, %v1773
    %1775 = vdwg.mxu0
    %v1776 = vxor.u32 %v1772, 2147483648
    %v1777 = vmul.f32 %v1776, 1.442695
    %v1778 = vpow.pop %v1777
    %v1779 = vadd.f32 %v1778, 1.0
    %v1780 = vrcp.pop %v1779
    %v1781 = vmul.f32 1.0, %v1780
    %1783 = vrot.lane.b32.xlu0 %v1772, 32
    %v1784 = vpop.permute.xlu0 %1783
    %v1786 = vmul.f32 %v1781, %v1784
    %1788 = vrot.lane.b32.xlu0 %v1786, 64
    %v1789 = vpop.permute.xlu0 %1788
    %v1791 = vadd.f32 %v1772, %v1789
    %v1792 = vtanh.pop %v1791
    %v1793 = vsub.f32 1.0, %v1781
    %1795 = vrot.lane.b32.xlu0 %v1792, 96
    %v1796 = vpop.permute.xlu0 %1795
    %v1798 = vmul.f32 %v1793, %v1796
    %v1799 = vmul.f32 %v1781, %v1669
    %v1800 = vadd.f32 %v1798, %v1799
    %v1801 = vld [vmem:[#allocation3 + $0x10] sm:$0x3]
    %v1802 = vadd.f32 %v1801, %v1774
    %v1803 = vxor.u32 %v1802, 2147483648
    %v1804 = vmul.f32 %v1803, 1.442695
    %v1805 = vpow.pop %v1804
    %v1806 = vadd.f32 %v1805, 1.0
    %v1807 = vrcp.pop %v1806
    %v1808 = vmul.f32 1.0, %v1807
    %1810 = vrot.lane.b32.xlu0 %v1774, 64
    %v1811 = vpop.permute.xlu0 %1810
    %v1813 = vmul.f32 %v1808, %v1811
    %1815 = vrot.lane.b32.xlu0 %v1813, 64
    %v1816 = vpop.permute.xlu0 %1815
    %v1818 = vadd.f32 %v1801, %v1816
    %v1819 = vtanh.pop %v1818
    %v1820 = vsub.f32 1.0, %v1808
    %1822 = vrot.lane.b32.xlu0 %v1819, 96
    %v1823 = vpop.permute.xlu0 %1822
    %v1825 = vmul.f32 %v1820, %v1823
    %v1826 = vmul.f32 %v1808, %v1696
    %v1827 = vadd.f32 %v1825, %v1826
    %1829 = vrot.lane.b32.xlu0 %v1827, 96
    %v1830 = vpop.permute.xlu0 %1829
    %v1832 = vsel %vm771, %v1830, %v1800
    %v1834 = vsel %vm784, %v1832, 0
    %1836 = vmatprep.subr.mxu0 %v722
    %1837 = vmatpush1.msra.mxu0 %v721
    %1838 = vmatprep.subr.mxu0 %v724
    %1839 = vmatpush1.msra.mxu0 %v723
    %1840 = vmatprep.subr.mxu0 %v726
    %1841 = vmatpush1.msra.mxu0 %v725
    %1842 = vmatprep.subr.mxu0 %v728
    %1843 = vmatpush1.msra.mxu0 %v727
    %1844 = vmatprep.subr.mxu0 %v730
    %1845 = vmatpush1.msra.mxu0 %v729
    %1846 = vmatprep.subr.mxu0 %v732
    %1847 = vmatpush1.msra.mxu0 %v731
    %1848 = vmatprep.subr.mxu0 %v734
    %1849 = vmatpush1.msra.mxu0 %v733
    %1850 = vmatprep.subr.mxu0 %v736
    %1851 = vmatpush1.msra.mxu0 %v735
    %1852 = vmatprep.subr.mxu0 0.0
    %1853 = vmatpush1.msra.mxu0 0.0
    %1854 = vmatprep.subr.mxu0 0.0
    %1855 = vmatpush1.msra.mxu0 0.0
    %1856 = vmatprep.subr.mxu0 0.0
    %1857 = vmatpush1.msra.mxu0 0.0
    %1858 = vmatprep.subr.mxu0 0.0
    %1859 = vmatpush1.msra.mxu0 0.0
    %1860 = vmatprep.subr.mxu0 0.0
    %1861 = vmatpush1.msra.mxu0 0.0
    %1862 = vmatprep.subr.mxu0 0.0
    %1863 = vmatpush1.msra.mxu0 0.0
    %1864 = vmatprep.subr.mxu0 0.0
    %1865 = vmatpush1.msra.mxu0 0.0
    %1866 = vmatprep.subr.mxu0 0.0
    %1867 = vmatpush1.msra.mxu0 0.0
    %1868 = vmatprep.subr.mxu0 0.0
    %1869 = vmatpush1.msra.mxu0 0.0
    %1870 = vmatprep.subr.mxu0 0.0
    %1871 = vmatpush1.msra.mxu0 0.0
    %1872 = vmatprep.subr.mxu0 0.0
    %1873 = vmatpush1.msra.mxu0 0.0
    %1874 = vmatprep.subr.mxu0 0.0
    %1875 = vmatpush1.msra.mxu0 0.0
    %1876 = vmatprep.subr.mxu0 0.0
    %1877 = vmatpush1.msra.mxu0 0.0
    %1878 = vmatprep.subr.mxu0 0.0
    %1879 = vmatpush1.msra.mxu0 0.0
    %1880 = vmatprep.subr.mxu0 0.0
    %1881 = vmatpush1.msra.mxu0 0.0
    %1882 = vmatprep.subr.mxu0 0.0
    %1883 = vmatpush1.msra.mxu0 0.0
    %1884 = vmatprep.subr.mxu0 0.0
    %1885 = vmatpush1.msra.mxu0 0.0
    %1886 = vmatprep.subr.mxu0 0.0
    %1887 = vmatpush1.msra.mxu0 0.0
    %1888 = vmatprep.subr.mxu0 0.0
    %1889 = vmatpush1.msra.mxu0 0.0
    %1890 = vmatprep.subr.mxu0 0.0
    %1891 = vmatpush1.msra.mxu0 0.0
    %1892 = vmatprep.subr.mxu0 0.0
    %1893 = vmatpush1.msra.mxu0 0.0
    %1894 = vmatprep.subr.mxu0 0.0
    %1895 = vmatpush1.msra.mxu0 0.0
    %1896 = vmatprep.subr.mxu0 0.0
    %1897 = vmatpush1.msra.mxu0 0.0
    %1898 = vmatprep.subr.mxu0 0.0
    %1899 = vmatpush1.msra.mxu0 0.0
    %1900 = vmatprep.mubr.f32.mxu0 0.0
    %1901 = vmatmul.mubr.f32.gmra.mrb[0].mxu0 %v1834
    %v1902 = vpop.f32.mrb[0].mxu0
    %v1903 = vadd.f32 %v777, %v1902
    %v1904 = vpop.f32.mrb[0].mxu0
    %v1905 = vadd.f32 %v781, %v1904
    %1906 = vdwg.mxu0
    %v1907 = vxor.u32 %v1903, 2147483648
    %v1908 = vmul.f32 %v1907, 1.442695
    %v1909 = vpow.pop %v1908
    %v1910 = vadd.f32 %v1909, 1.0
    %v1911 = vrcp.pop %v1910
    %v1912 = vmul.f32 1.0, %v1911
    %1914 = vrot.lane.b32.xlu0 %v1903, 32
    %v1915 = vpop.permute.xlu0 %1914
    %v1917 = vmul.f32 %v1912, %v1915
    %1919 = vrot.lane.b32.xlu0 %v1917, 64
    %v1920 = vpop.permute.xlu0 %1919
    %v1922 = vadd.f32 %v1903, %v1920
    %v1923 = vtanh.pop %v1922
    %v1924 = vsub.f32 1.0, %v1912
    %1926 = vrot.lane.b32.xlu0 %v1923, 96
    %v1927 = vpop.permute.xlu0 %1926
    %v1929 = vmul.f32 %v1924, %v1927
    %v1930 = vmul.f32 %v1912, %v1800
    %v1931 = vadd.f32 %v1929, %v1930
    %v1932 = vld [vmem:[#allocation3 + $0x12] sm:$0x3]
    %v1933 = vadd.f32 %v1932, %v1905
    %v1934 = vxor.u32 %v1933, 2147483648
    %v1935 = vmul.f32 %v1934, 1.442695
    %v1936 = vpow.pop %v1935
    %v1937 = vadd.f32 %v1936, 1.0
    %v1938 = vrcp.pop %v1937
    %v1939 = vmul.f32 1.0, %v1938
    %1941 = vrot.lane.b32.xlu0 %v1905, 64
    %v1942 = vpop.permute.xlu0 %1941
    %v1944 = vmul.f32 %v1939, %v1942
    %1946 = vrot.lane.b32.xlu0 %v1944, 64
    %v1947 = vpop.permute.xlu0 %1946
    %v1949 = vadd.f32 %v1932, %v1947
    %v1950 = vtanh.pop %v1949
    %v1951 = vsub.f32 1.0, %v1939
    %1953 = vrot.lane.b32.xlu0 %v1950, 96
    %v1954 = vpop.permute.xlu0 %1953
    %v1956 = vmul.f32 %v1951, %v1954
    %v1957 = vmul.f32 %v1939, %v1827
    %v1958 = vadd.f32 %v1956, %v1957
    %1960 = vrot.lane.b32.xlu0 %v1958, 96
    %v1961 = vpop.permute.xlu0 %1960
    %v1963 = vsel %vm771, %v1961, %v1931
    %v1965 = vsel %vm784, %v1963, 0
    %1967 = vmatprep.subr.mxu0 %v722
    %1968 = vmatpush1.msra.mxu0 %v721
    %1969 = vmatprep.subr.mxu0 %v724
    %1970 = vmatpush1.msra.mxu0 %v723
    %1971 = vmatprep.subr.mxu0 %v726
    %1972 = vmatpush1.msra.mxu0 %v725
    %1973 = vmatprep.subr.mxu0 %v728
    %1974 = vmatpush1.msra.mxu0 %v727
    %1975 = vmatprep.subr.mxu0 %v730
    %1976 = vmatpush1.msra.mxu0 %v729
    %1977 = vmatprep.subr.mxu0 %v732
    %1978 = vmatpush1.msra.mxu0 %v731
    %1979 = vmatprep.subr.mxu0 %v734
    %1980 = vmatpush1.msra.mxu0 %v733
    %1981 = vmatprep.subr.mxu0 %v736
    %1982 = vmatpush1.msra.mxu0 %v735
    %1983 = vmatprep.subr.mxu0 0.0
    %1984 = vmatpush1.msra.mxu0 0.0
    %1985 = vmatprep.subr.mxu0 0.0
    %1986 = vmatpush1.msra.mxu0 0.0
    %1987 = vmatprep.subr.mxu0 0.0
    %1988 = vmatpush1.msra.mxu0 0.0
    %1989 = vmatprep.subr.mxu0 0.0
    %1990 = vmatpush1.msra.mxu0 0.0
    %1991 = vmatprep.subr.mxu0 0.0
    %1992 = vmatpush1.msra.mxu0 0.0
    %1993 = vmatprep.subr.mxu0 0.0
    %1994 = vmatpush1.msra.mxu0 0.0
    %1995 = vmatprep.subr.mxu0 0.0
    %1996 = vmatpush1.msra.mxu0 0.0
    %1997 = vmatprep.subr.mxu0 0.0
    %1998 = vmatpush1.msra.mxu0 0.0
    %1999 = vmatprep.subr.mxu0 0.0
    %2000 = vmatpush1.msra.mxu0 0.0
    %2001 = vmatprep.subr.mxu0 0.0
    %2002 = vmatpush1.msra.mxu0 0.0
    %2003 = vmatprep.subr.mxu0 0.0
    %2004 = vmatpush1.msra.mxu0 0.0
    %2005 = vmatprep.subr.mxu0 0.0
    %2006 = vmatpush1.msra.mxu0 0.0
    %2007 = vmatprep.subr.mxu0 0.0
    %2008 = vmatpush1.msra.mxu0 0.0
    %2009 = vmatprep.subr.mxu0 0.0
    %2010 = vmatpush1.msra.mxu0 0.0
    %2011 = vmatprep.subr.mxu0 0.0
    %2012 = vmatpush1.msra.mxu0 0.0
    %2013 = vmatprep.subr.mxu0 0.0
    %2014 = vmatpush1.msra.mxu0 0.0
    %2015 = vmatprep.subr.mxu0 0.0
    %2016 = vmatpush1.msra.mxu0 0.0
    %2017 = vmatprep.subr.mxu0 0.0
    %2018 = vmatpush1.msra.mxu0 0.0
    %2019 = vmatprep.subr.mxu0 0.0
    %2020 = vmatpush1.msra.mxu0 0.0
    %2021 = vmatprep.subr.mxu0 0.0
    %2022 = vmatpush1.msra.mxu0 0.0
    %2023 = vmatprep.subr.mxu0 0.0
    %2024 = vmatpush1.msra.mxu0 0.0
    %2025 = vmatprep.subr.mxu0 0.0
    %2026 = vmatpush1.msra.mxu0 0.0
    %2027 = vmatprep.subr.mxu0 0.0
    %2028 = vmatpush1.msra.mxu0 0.0
    %2029 = vmatprep.subr.mxu0 0.0
    %2030 = vmatpush1.msra.mxu0 0.0
    %2031 = vmatprep.mubr.f32.mxu0 0.0
    %2032 = vmatmul.mubr.f32.gmra.mrb[0].mxu0 %v1965
    %v2033 = vpop.f32.mrb[0].mxu0
    %v2034 = vadd.f32 %v777, %v2033
    %v2035 = vpop.f32.mrb[0].mxu0
    %v2036 = vadd.f32 %v781, %v2035
    %2037 = vdwg.mxu0
    %v2038 = vxor.u32 %v2034, 2147483648
    %v2039 = vmul.f32 %v2038, 1.442695
    %v2040 = vpow.pop %v2039
    %v2041 = vadd.f32 %v2040, 1.0
    %v2042 = vrcp.pop %v2041
    %v2043 = vmul.f32 1.0, %v2042
    %2045 = vrot.lane.b32.xlu0 %v2034, 32
    %v2046 = vpop.permute.xlu0 %2045
    %v2048 = vmul.f32 %v2043, %v2046
    %2050 = vrot.lane.b32.xlu0 %v2048, 64
    %v2051 = vpop.permute.xlu0 %2050
    %v2053 = vadd.f32 %v2034, %v2051
    %v2054 = vtanh.pop %v2053
    %v2055 = vsub.f32 1.0, %v2043
    %2057 = vrot.lane.b32.xlu0 %v2054, 96
    %v2058 = vpop.permute.xlu0 %2057
    %v2060 = vmul.f32 %v2055, %v2058
    %v2061 = vmul.f32 %v2043, %v1931
    %v2062 = vadd.f32 %v2060, %v2061
    %v2063 = vld [vmem:[#allocation3 + $0x14] sm:$0x3]
    %v2064 = vadd.f32 %v2063, %v2036
    %v2065 = vxor.u32 %v2064, 2147483648
    %v2066 = vmul.f32 %v2065, 1.442695
    %v2067 = vpow.pop %v2066
    %v2068 = vadd.f32 %v2067, 1.0
    %v2069 = vrcp.pop %v2068
    %v2070 = vmul.f32 1.0, %v2069
    %2072 = vrot.lane.b32.xlu0 %v2036, 64
    %v2073 = vpop.permute.xlu0 %2072
    %v2075 = vmul.f32 %v2070, %v2073
    %2077 = vrot.lane.b32.xlu0 %v2075, 64
    %v2078 = vpop.permute.xlu0 %2077
    %v2080 = vadd.f32 %v2063, %v2078
    %v2081 = vtanh.pop %v2080
    %v2082 = vsub.f32 1.0, %v2070
    %2084 = vrot.lane.b32.xlu0 %v2081, 96
    %v2085 = vpop.permute.xlu0 %2084
    %v2087 = vmul.f32 %v2082, %v2085
    %v2088 = vmul.f32 %v2070, %v1958
    %v2089 = vadd.f32 %v2087, %v2088
    %2091 = vrot.lane.b32.xlu0 %v2089, 96
    %v2092 = vpop.permute.xlu0 %2091
    %v2094 = vsel %vm771, %v2092, %v2062
    %v2096 = vsel %vm784, %v2094, 0
    %2098 = vmatprep.subr.mxu0 %v722
    %2099 = vmatpush1.msra.mxu0 %v721
    %2100 = vmatprep.subr.mxu0 %v724
    %2101 = vmatpush1.msra.mxu0 %v723
    %2102 = vmatprep.subr.mxu0 %v726
    %2103 = vmatpush1.msra.mxu0 %v725
    %2104 = vmatprep.subr.mxu0 %v728
    %2105 = vmatpush1.msra.mxu0 %v727
    %2106 = vmatprep.subr.mxu0 %v730
    %2107 = vmatpush1.msra.mxu0 %v729
    %2108 = vmatprep.subr.mxu0 %v732
    %2109 = vmatpush1.msra.mxu0 %v731
    %2110 = vmatprep.subr.mxu0 %v734
    %2111 = vmatpush1.msra.mxu0 %v733
    %2112 = vmatprep.subr.mxu0 %v736
    %2113 = vmatpush1.msra.mxu0 %v735
    %2114 = vmatprep.subr.mxu0 0.0
    %2115 = vmatpush1.msra.mxu0 0.0
    %2116 = vmatprep.subr.mxu0 0.0
    %2117 = vmatpush1.msra.mxu0 0.0
    %2118 = vmatprep.subr.mxu0 0.0
    %2119 = vmatpush1.msra.mxu0 0.0
    %2120 = vmatprep.subr.mxu0 0.0
    %2121 = vmatpush1.msra.mxu0 0.0
    %2122 = vmatprep.subr.mxu0 0.0
    %2123 = vmatpush1.msra.mxu0 0.0
    %2124 = vmatprep.subr.mxu0 0.0
    %2125 = vmatpush1.msra.mxu0 0.0
    %2126 = vmatprep.subr.mxu0 0.0
    %2127 = vmatpush1.msra.mxu0 0.0
    %2128 = vmatprep.subr.mxu0 0.0
    %2129 = vmatpush1.msra.mxu0 0.0
    %2130 = vmatprep.subr.mxu0 0.0
    %2131 = vmatpush1.msra.mxu0 0.0
    %2132 = vmatprep.subr.mxu0 0.0
    %2133 = vmatpush1.msra.mxu0 0.0
    %2134 = vmatprep.subr.mxu0 0.0
    %2135 = vmatpush1.msra.mxu0 0.0
    %2136 = vmatprep.subr.mxu0 0.0
    %2137 = vmatpush1.msra.mxu0 0.0
    %2138 = vmatprep.subr.mxu0 0.0
    %2139 = vmatpush1.msra.mxu0 0.0
    %2140 = vmatprep.subr.mxu0 0.0
    %2141 = vmatpush1.msra.mxu0 0.0
    %2142 = vmatprep.subr.mxu0 0.0
    %2143 = vmatpush1.msra.mxu0 0.0
    %2144 = vmatprep.subr.mxu0 0.0
    %2145 = vmatpush1.msra.mxu0 0.0
    %2146 = vmatprep.subr.mxu0 0.0
    %2147 = vmatpush1.msra.mxu0 0.0
    %2148 = vmatprep.subr.mxu0 0.0
    %2149 = vmatpush1.msra.mxu0 0.0
    %2150 = vmatprep.subr.mxu0 0.0
    %2151 = vmatpush1.msra.mxu0 0.0
    %2152 = vmatprep.subr.mxu0 0.0
    %2153 = vmatpush1.msra.mxu0 0.0
    %2154 = vmatprep.subr.mxu0 0.0
    %2155 = vmatpush1.msra.mxu0 0.0
    %2156 = vmatprep.subr.mxu0 0.0
    %2157 = vmatpush1.msra.mxu0 0.0
    %2158 = vmatprep.subr.mxu0 0.0
    %2159 = vmatpush1.msra.mxu0 0.0
    %2160 = vmatprep.subr.mxu0 0.0
    %2161 = vmatpush1.msra.mxu0 0.0
    %2162 = vmatprep.mubr.f32.mxu0 0.0
    %2163 = vmatmul.mubr.f32.gmra.mrb[0].mxu0 %v2096
    %v2164 = vpop.f32.mrb[0].mxu0
    %v2165 = vadd.f32 %v777, %v2164
    %v2166 = vpop.f32.mrb[0].mxu0
    %v2167 = vadd.f32 %v781, %v2166
    %2168 = vdwg.mxu0
    %v2169 = vxor.u32 %v2165, 2147483648
    %v2170 = vmul.f32 %v2169, 1.442695
    %v2171 = vpow.pop %v2170
    %v2172 = vadd.f32 %v2171, 1.0
    %v2173 = vrcp.pop %v2172
    %v2174 = vmul.f32 1.0, %v2173
    %2176 = vrot.lane.b32.xlu0 %v2165, 32
    %v2177 = vpop.permute.xlu0 %2176
    %v2179 = vmul.f32 %v2174, %v2177
    %2181 = vrot.lane.b32.xlu0 %v2179, 64
    %v2182 = vpop.permute.xlu0 %2181
    %v2184 = vadd.f32 %v2165, %v2182
    %v2185 = vtanh.pop %v2184
    %v2186 = vsub.f32 1.0, %v2174
    %2188 = vrot.lane.b32.xlu0 %v2185, 96
    %v2189 = vpop.permute.xlu0 %2188
    %v2191 = vmul.f32 %v2186, %v2189
    %v2192 = vmul.f32 %v2174, %v2062
    %v2193 = vadd.f32 %v2191, %v2192
    %v2194 = vld [vmem:[#allocation3 + $0x16] sm:$0x3]
    %v2195 = vadd.f32 %v2194, %v2167
    %v2196 = vxor.u32 %v2195, 2147483648
    %v2197 = vmul.f32 %v2196, 1.442695
    %v2198 = vpow.pop %v2197
    %v2199 = vadd.f32 %v2198, 1.0
    %v2200 = vrcp.pop %v2199
    %v2201 = vmul.f32 1.0, %v2200
    %2203 = vrot.lane.b32.xlu0 %v2167, 64
    %v2204 = vpop.permute.xlu0 %2203
    %v2206 = vmul.f32 %v2201, %v2204
    %2208 = vrot.lane.b32.xlu0 %v2206, 64
    %v2209 = vpop.permute.xlu0 %2208
    %v2211 = vadd.f32 %v2194, %v2209
    %v2212 = vtanh.pop %v2211
    %v2213 = vsub.f32 1.0, %v2201
    %2215 = vrot.lane.b32.xlu0 %v2212, 96
    %v2216 = vpop.permute.xlu0 %2215
    %v2218 = vmul.f32 %v2213, %v2216
    %v2219 = vmul.f32 %v2201, %v2089
    %v2220 = vadd.f32 %v2218, %v2219
    %2222 = vrot.lane.b32.xlu0 %v2220, 96
    %v2223 = vpop.permute.xlu0 %2222
    %v2225 = vsel %vm771, %v2223, %v2193
    %v2227 = vsel %vm784, %v2225, 0
    %2229 = vmatprep.subr.mxu0 %v722
    %2230 = vmatpush1.msra.mxu0 %v721
    %2231 = vmatprep.subr.mxu0 %v724
    %2232 = vmatpush1.msra.mxu0 %v723
    %2233 = vmatprep.subr.mxu0 %v726
    %2234 = vmatpush1.msra.mxu0 %v725
    %2235 = vmatprep.subr.mxu0 %v728
    %2236 = vmatpush1.msra.mxu0 %v727
    %2237 = vmatprep.subr.mxu0 %v730
    %2238 = vmatpush1.msra.mxu0 %v729
    %2239 = vmatprep.subr.mxu0 %v732
    %2240 = vmatpush1.msra.mxu0 %v731
    %2241 = vmatprep.subr.mxu0 %v734
    %2242 = vmatpush1.msra.mxu0 %v733
    %2243 = vmatprep.subr.mxu0 %v736
    %2244 = vmatpush1.msra.mxu0 %v735
    %2245 = vmatprep.subr.mxu0 0.0
    %2246 = vmatpush1.msra.mxu0 0.0
    %2247 = vmatprep.subr.mxu0 0.0
    %2248 = vmatpush1.msra.mxu0 0.0
    %2249 = vmatprep.subr.mxu0 0.0
    %2250 = vmatpush1.msra.mxu0 0.0
    %2251 = vmatprep.subr.mxu0 0.0
    %2252 = vmatpush1.msra.mxu0 0.0
    %2253 = vmatprep.subr.mxu0 0.0
    %2254 = vmatpush1.msra.mxu0 0.0
    %2255 = vmatprep.subr.mxu0 0.0
    %2256 = vmatpush1.msra.mxu0 0.0
    %2257 = vmatprep.subr.mxu0 0.0
    %2258 = vmatpush1.msra.mxu0 0.0
    %2259 = vmatprep.subr.mxu0 0.0
    %2260 = vmatpush1.msra.mxu0 0.0
    %2261 = vmatprep.subr.mxu0 0.0
    %2262 = vmatpush1.msra.mxu0 0.0
    %2263 = vmatprep.subr.mxu0 0.0
    %2264 = vmatpush1.msra.mxu0 0.0
    %2265 = vmatprep.subr.mxu0 0.0
    %2266 = vmatpush1.msra.mxu0 0.0
    %2267 = vmatprep.subr.mxu0 0.0
    %2268 = vmatpush1.msra.mxu0 0.0
    %2269 = vmatprep.subr.mxu0 0.0
    %2270 = vmatpush1.msra.mxu0 0.0
    %2271 = vmatprep.subr.mxu0 0.0
    %2272 = vmatpush1.msra.mxu0 0.0
    %2273 = vmatprep.subr.mxu0 0.0
    %2274 = vmatpush1.msra.mxu0 0.0
    %2275 = vmatprep.subr.mxu0 0.0
    %2276 = vmatpush1.msra.mxu0 0.0
    %2277 = vmatprep.subr.mxu0 0.0
    %2278 = vmatpush1.msra.mxu0 0.0
    %2279 = vmatprep.subr.mxu0 0.0
    %2280 = vmatpush1.msra.mxu0 0.0
    %2281 = vmatprep.subr.mxu0 0.0
    %2282 = vmatpush1.msra.mxu0 0.0
    %2283 = vmatprep.subr.mxu0 0.0
    %2284 = vmatpush1.msra.mxu0 0.0
    %2285 = vmatprep.subr.mxu0 0.0
    %2286 = vmatpush1.msra.mxu0 0.0
    %2287 = vmatprep.subr.mxu0 0.0
    %2288 = vmatpush1.msra.mxu0 0.0
    %2289 = vmatprep.subr.mxu0 0.0
    %2290 = vmatpush1.msra.mxu0 0.0
    %2291 = vmatprep.subr.mxu0 0.0
    %2292 = vmatpush1.msra.mxu0 0.0
    %2293 = vmatprep.mubr.f32.mxu0 0.0
    %2294 = vmatmul.mubr.f32.gmra.mrb[0].mxu0 %v2227
    %v2295 = vpop.f32.mrb[0].mxu0
    %v2296 = vadd.f32 %v777, %v2295
    %v2297 = vpop.f32.mrb[0].mxu0
    %v2298 = vadd.f32 %v781, %v2297
    %2299 = vdwg.mxu0
    %v2300 = vxor.u32 %v2296, 2147483648
    %v2301 = vmul.f32 %v2300, 1.442695
    %v2302 = vpow.pop %v2301
    %v2303 = vadd.f32 %v2302, 1.0
    %v2304 = vrcp.pop %v2303
    %v2305 = vmul.f32 1.0, %v2304
    %2307 = vrot.lane.b32.xlu0 %v2296, 32
    %v2308 = vpop.permute.xlu0 %2307
    %v2310 = vmul.f32 %v2305, %v2308
    %2312 = vrot.lane.b32.xlu0 %v2310, 64
    %v2313 = vpop.permute.xlu0 %2312
    %v2315 = vadd.f32 %v2296, %v2313
    %v2316 = vtanh.pop %v2315
    %v2317 = vsub.f32 1.0, %v2305
    %2319 = vrot.lane.b32.xlu0 %v2316, 96
    %v2320 = vpop.permute.xlu0 %2319
    %v2322 = vmul.f32 %v2317, %v2320
    %v2323 = vmul.f32 %v2305, %v2193
    %v2324 = vadd.f32 %v2322, %v2323
    %v2325 = vld [vmem:[#allocation3 + $0x18] sm:$0x3]
    %v2326 = vadd.f32 %v2325, %v2298
    %v2327 = vxor.u32 %v2326, 2147483648
    %v2328 = vmul.f32 %v2327, 1.442695
    %v2329 = vpow.pop %v2328
    %v2330 = vadd.f32 %v2329, 1.0
    %v2331 = vrcp.pop %v2330
    %v2332 = vmul.f32 1.0, %v2331
    %2334 = vrot.lane.b32.xlu0 %v2298, 64
    %v2335 = vpop.permute.xlu0 %2334
    %v2337 = vmul.f32 %v2332, %v2335
    %2339 = vrot.lane.b32.xlu0 %v2337, 64
    %v2340 = vpop.permute.xlu0 %2339
    %v2342 = vadd.f32 %v2325, %v2340
    %v2343 = vtanh.pop %v2342
    %v2344 = vsub.f32 1.0, %v2332
    %2346 = vrot.lane.b32.xlu0 %v2343, 96
    %v2347 = vpop.permute.xlu0 %2346
    %v2349 = vmul.f32 %v2344, %v2347
    %v2350 = vmul.f32 %v2332, %v2220
    %v2351 = vadd.f32 %v2349, %v2350
    %2353 = vrot.lane.b32.xlu0 %v2351, 96
    %v2354 = vpop.permute.xlu0 %2353
    %v2356 = vsel %vm771, %v2354, %v2324
    %v2358 = vsel %vm784, %v2356, 0
    %2360 = vmatprep.subr.mxu0 %v722
    %2361 = vmatpush1.msra.mxu0 %v721
    %2362 = vmatprep.subr.mxu0 %v724
    %2363 = vmatpush1.msra.mxu0 %v723
    %2364 = vmatprep.subr.mxu0 %v726
    %2365 = vmatpush1.msra.mxu0 %v725
    %2366 = vmatprep.subr.mxu0 %v728
    %2367 = vmatpush1.msra.mxu0 %v727
    %2368 = vmatprep.subr.mxu0 %v730
    %2369 = vmatpush1.msra.mxu0 %v729
    %2370 = vmatprep.subr.mxu0 %v732
    %2371 = vmatpush1.msra.mxu0 %v731
    %2372 = vmatprep.subr.mxu0 %v734
    %2373 = vmatpush1.msra.mxu0 %v733
    %2374 = vmatprep.subr.mxu0 %v736
    %2375 = vmatpush1.msra.mxu0 %v735
    %2376 = vmatprep.subr.mxu0 0.0
    %2377 = vmatpush1.msra.mxu0 0.0
    %2378 = vmatprep.subr.mxu0 0.0
    %2379 = vmatpush1.msra.mxu0 0.0
    %2380 = vmatprep.subr.mxu0 0.0
    %2381 = vmatpush1.msra.mxu0 0.0
    %2382 = vmatprep.subr.mxu0 0.0
    %2383 = vmatpush1.msra.mxu0 0.0
    %2384 = vmatprep.subr.mxu0 0.0
    %2385 = vmatpush1.msra.mxu0 0.0
    %2386 = vmatprep.subr.mxu0 0.0
    %2387 = vmatpush1.msra.mxu0 0.0
    %2388 = vmatprep.subr.mxu0 0.0
    %2389 = vmatpush1.msra.mxu0 0.0
    %2390 = vmatprep.subr.mxu0 0.0
    %2391 = vmatpush1.msra.mxu0 0.0
    %2392 = vmatprep.subr.mxu0 0.0
    %2393 = vmatpush1.msra.mxu0 0.0
    %2394 = vmatprep.subr.mxu0 0.0
    %2395 = vmatpush1.msra.mxu0 0.0
    %2396 = vmatprep.subr.mxu0 0.0
    %2397 = vmatpush1.msra.mxu0 0.0
    %2398 = vmatprep.subr.mxu0 0.0
    %2399 = vmatpush1.msra.mxu0 0.0
    %2400 = vmatprep.subr.mxu0 0.0
    %2401 = vmatpush1.msra.mxu0 0.0
    %2402 = vmatprep.subr.mxu0 0.0
    %2403 = vmatpush1.msra.mxu0 0.0
    %2404 = vmatprep.subr.mxu0 0.0
    %2405 = vmatpush1.msra.mxu0 0.0
    %2406 = vmatprep.subr.mxu0 0.0
    %2407 = vmatpush1.msra.mxu0 0.0
    %2408 = vmatprep.subr.mxu0 0.0
    %2409 = vmatpush1.msra.mxu0 0.0
    %2410 = vmatprep.subr.mxu0 0.0
    %2411 = vmatpush1.msra.mxu0 0.0
    %2412 = vmatprep.subr.mxu0 0.0
    %2413 = vmatpush1.msra.mxu0 0.0
    %2414 = vmatprep.subr.mxu0 0.0
    %2415 = vmatpush1.msra.mxu0 0.0
    %2416 = vmatprep.subr.mxu0 0.0
    %2417 = vmatpush1.msra.mxu0 0.0
    %2418 = vmatprep.subr.mxu0 0.0
    %2419 = vmatpush1.msra.mxu0 0.0
    %2420 = vmatprep.subr.mxu0 0.0
    %2421 = vmatpush1.msra.mxu0 0.0
    %2422 = vmatprep.subr.mxu0 0.0
    %2423 = vmatpush1.msra.mxu0 0.0
    %2424 = vmatprep.mubr.f32.mxu0 0.0
    %2425 = vmatmul.mubr.f32.gmra.mrb[0].mxu0 %v2358
    %v2426 = vpop.f32.mrb[0].mxu0
    %v2427 = vadd.f32 %v777, %v2426
    %v2428 = vpop.f32.mrb[0].mxu0
    %v2429 = vadd.f32 %v781, %v2428
    %2430 = vdwg.mxu0
    %v2431 = vxor.u32 %v2427, 2147483648
    %v2432 = vmul.f32 %v2431, 1.442695
    %v2433 = vpow.pop %v2432
    %v2434 = vadd.f32 %v2433, 1.0
    %v2435 = vrcp.pop %v2434
    %v2436 = vmul.f32 1.0, %v2435
    %2438 = vrot.lane.b32.xlu0 %v2427, 32
    %v2439 = vpop.permute.xlu0 %2438
    %v2441 = vmul.f32 %v2436, %v2439
    %2443 = vrot.lane.b32.xlu0 %v2441, 64
    %v2444 = vpop.permute.xlu0 %2443
    %v2446 = vadd.f32 %v2427, %v2444
    %v2447 = vtanh.pop %v2446
    %v2448 = vsub.f32 1.0, %v2436
    %2450 = vrot.lane.b32.xlu0 %v2447, 96
    %v2451 = vpop.permute.xlu0 %2450
    %v2453 = vmul.f32 %v2448, %v2451
    %v2454 = vmul.f32 %v2436, %v2324
    %v2455 = vadd.f32 %v2453, %v2454
    %v2456 = vld [vmem:[#allocation3 + $0x1a] sm:$0x3]
    %v2457 = vadd.f32 %v2456, %v2429
    %v2458 = vxor.u32 %v2457, 2147483648
    %v2459 = vmul.f32 %v2458, 1.442695
    %v2460 = vpow.pop %v2459
    %v2461 = vadd.f32 %v2460, 1.0
    %v2462 = vrcp.pop %v2461
    %v2463 = vmul.f32 1.0, %v2462
    %2465 = vrot.lane.b32.xlu0 %v2429, 64
    %v2466 = vpop.permute.xlu0 %2465
    %v2468 = vmul.f32 %v2463, %v2466
    %2470 = vrot.lane.b32.xlu0 %v2468, 64
    %v2471 = vpop.permute.xlu0 %2470
    %v2473 = vadd.f32 %v2456, %v2471
    %v2474 = vtanh.pop %v2473
    %v2475 = vsub.f32 1.0, %v2463
    %2477 = vrot.lane.b32.xlu0 %v2474, 96
    %v2478 = vpop.permute.xlu0 %2477
    %v2480 = vmul.f32 %v2475, %v2478
    %v2481 = vmul.f32 %v2463, %v2351
    %v2482 = vadd.f32 %v2480, %v2481
    %2484 = vrot.lane.b32.xlu0 %v2482, 96
    %v2485 = vpop.permute.xlu0 %2484
    %v2487 = vsel %vm771, %v2485, %v2455
    %v2489 = vsel %vm784, %v2487, 0
    %2491 = vmatprep.subr.mxu0 %v722
    %2492 = vmatpush1.msra.mxu0 %v721
    %2493 = vmatprep.subr.mxu0 %v724
    %2494 = vmatpush1.msra.mxu0 %v723
    %2495 = vmatprep.subr.mxu0 %v726
    %2496 = vmatpush1.msra.mxu0 %v725
    %2497 = vmatprep.subr.mxu0 %v728
    %2498 = vmatpush1.msra.mxu0 %v727
    %2499 = vmatprep.subr.mxu0 %v730
    %2500 = vmatpush1.msra.mxu0 %v729
    %2501 = vmatprep.subr.mxu0 %v732
    %2502 = vmatpush1.msra.mxu0 %v731
    %2503 = vmatprep.subr.mxu0 %v734
    %2504 = vmatpush1.msra.mxu0 %v733
    %2505 = vmatprep.subr.mxu0 %v736
    %2506 = vmatpush1.msra.mxu0 %v735
    %2507 = vmatprep.subr.mxu0 0.0
    %2508 = vmatpush1.msra.mxu0 0.0
    %2509 = vmatprep.subr.mxu0 0.0
    %2510 = vmatpush1.msra.mxu0 0.0
    %2511 = vmatprep.subr.mxu0 0.0
    %2512 = vmatpush1.msra.mxu0 0.0
    %2513 = vmatprep.subr.mxu0 0.0
    %2514 = vmatpush1.msra.mxu0 0.0
    %2515 = vmatprep.subr.mxu0 0.0
    %2516 = vmatpush1.msra.mxu0 0.0
    %2517 = vmatprep.subr.mxu0 0.0
    %2518 = vmatpush1.msra.mxu0 0.0
    %2519 = vmatprep.subr.mxu0 0.0
    %2520 = vmatpush1.msra.mxu0 0.0
    %2521 = vmatprep.subr.mxu0 0.0
    %2522 = vmatpush1.msra.mxu0 0.0
    %2523 = vmatprep.subr.mxu0 0.0
    %2524 = vmatpush1.msra.mxu0 0.0
    %2525 = vmatprep.subr.mxu0 0.0
    %2526 = vmatpush1.msra.mxu0 0.0
    %2527 = vmatprep.subr.mxu0 0.0
    %2528 = vmatpush1.msra.mxu0 0.0
    %2529 = vmatprep.subr.mxu0 0.0
    %2530 = vmatpush1.msra.mxu0 0.0
    %2531 = vmatprep.subr.mxu0 0.0
    %2532 = vmatpush1.msra.mxu0 0.0
    %2533 = vmatprep.subr.mxu0 0.0
    %2534 = vmatpush1.msra.mxu0 0.0
    %2535 = vmatprep.subr.mxu0 0.0
    %2536 = vmatpush1.msra.mxu0 0.0
    %2537 = vmatprep.subr.mxu0 0.0
    %2538 = vmatpush1.msra.mxu0 0.0
    %2539 = vmatprep.subr.mxu0 0.0
    %2540 = vmatpush1.msra.mxu0 0.0
    %2541 = vmatprep.subr.mxu0 0.0
    %2542 = vmatpush1.msra.mxu0 0.0
    %2543 = vmatprep.subr.mxu0 0.0
    %2544 = vmatpush1.msra.mxu0 0.0
    %2545 = vmatprep.subr.mxu0 0.0
    %2546 = vmatpush1.msra.mxu0 0.0
    %2547 = vmatprep.subr.mxu0 0.0
    %2548 = vmatpush1.msra.mxu0 0.0
    %2549 = vmatprep.subr.mxu0 0.0
    %2550 = vmatpush1.msra.mxu0 0.0
    %2551 = vmatprep.subr.mxu0 0.0
    %2552 = vmatpush1.msra.mxu0 0.0
    %2553 = vmatprep.subr.mxu0 0.0
    %2554 = vmatpush1.msra.mxu0 0.0
    %2555 = vmatprep.mubr.f32.mxu0 0.0
    %2556 = vmatmul.mubr.f32.gmra.mrb[0].mxu0 %v2489
    %v2557 = vpop.f32.mrb[0].mxu0
    %v2558 = vadd.f32 %v777, %v2557
    %v2559 = vpop.f32.mrb[0].mxu0
    %v2560 = vadd.f32 %v781, %v2559
    %2561 = vdwg.mxu0
    %v2562 = vxor.u32 %v2558, 2147483648
    %v2563 = vmul.f32 %v2562, 1.442695
    %v2564 = vpow.pop %v2563
    %v2565 = vadd.f32 %v2564, 1.0
    %v2566 = vrcp.pop %v2565
    %v2567 = vmul.f32 1.0, %v2566
    %2569 = vrot.lane.b32.xlu0 %v2558, 32
    %v2570 = vpop.permute.xlu0 %2569
    %v2572 = vmul.f32 %v2567, %v2570
    %2574 = vrot.lane.b32.xlu0 %v2572, 64
    %v2575 = vpop.permute.xlu0 %2574
    %v2577 = vadd.f32 %v2558, %v2575
    %v2578 = vtanh.pop %v2577
    %v2579 = vsub.f32 1.0, %v2567
    %2581 = vrot.lane.b32.xlu0 %v2578, 96
    %v2582 = vpop.permute.xlu0 %2581
    %v2584 = vmul.f32 %v2579, %v2582
    %v2585 = vmul.f32 %v2567, %v2455
    %v2586 = vadd.f32 %v2584, %v2585
    %v2587 = vld [vmem:[#allocation3 + $0x1c] sm:$0x3]
    %v2588 = vadd.f32 %v2587, %v2560
    %v2589 = vxor.u32 %v2588, 2147483648
    %v2590 = vmul.f32 %v2589, 1.442695
    %v2591 = vpow.pop %v2590
    %v2592 = vadd.f32 %v2591, 1.0
    %v2593 = vrcp.pop %v2592
    %v2594 = vmul.f32 1.0, %v2593
    %2596 = vrot.lane.b32.xlu0 %v2560, 64
    %v2597 = vpop.permute.xlu0 %2596
    %v2599 = vmul.f32 %v2594, %v2597
    %2601 = vrot.lane.b32.xlu0 %v2599, 64
    %v2602 = vpop.permute.xlu0 %2601
    %v2604 = vadd.f32 %v2587, %v2602
    %v2605 = vtanh.pop %v2604
    %v2606 = vsub.f32 1.0, %v2594
    %2608 = vrot.lane.b32.xlu0 %v2605, 96
    %v2609 = vpop.permute.xlu0 %2608
    %v2611 = vmul.f32 %v2606, %v2609
    %v2612 = vmul.f32 %v2594, %v2482
    %v2613 = vadd.f32 %v2611, %v2612
    %2615 = vrot.lane.b32.xlu0 %v2613, 96
    %v2616 = vpop.permute.xlu0 %2615
    %v2618 = vsel %vm771, %v2616, %v2586
    %v2620 = vsel %vm784, %v2618, 0
    %2622 = vmatprep.subr.mxu0 %v722
    %2623 = vmatpush1.msra.mxu0 %v721
    %2624 = vmatprep.subr.mxu0 %v724
    %2625 = vmatpush1.msra.mxu0 %v723
    %2626 = vmatprep.subr.mxu0 %v726
    %2627 = vmatpush1.msra.mxu0 %v725
    %2628 = vmatprep.subr.mxu0 %v728
    %2629 = vmatpush1.msra.mxu0 %v727
    %2630 = vmatprep.subr.mxu0 %v730
    %2631 = vmatpush1.msra.mxu0 %v729
    %2632 = vmatprep.subr.mxu0 %v732
    %2633 = vmatpush1.msra.mxu0 %v731
    %2634 = vmatprep.subr.mxu0 %v734
    %2635 = vmatpush1.msra.mxu0 %v733
    %2636 = vmatprep.subr.mxu0 %v736
    %2637 = vmatpush1.msra.mxu0 %v735
    %2638 = vmatprep.subr.mxu0 0.0
    %2639 = vmatpush1.msra.mxu0 0.0
    %2640 = vmatprep.subr.mxu0 0.0
    %2641 = vmatpush1.msra.mxu0 0.0
    %2642 = vmatprep.subr.mxu0 0.0
    %2643 = vmatpush1.msra.mxu0 0.0
    %2644 = vmatprep.subr.mxu0 0.0
    %2645 = vmatpush1.msra.mxu0 0.0
    %2646 = vmatprep.subr.mxu0 0.0
    %2647 = vmatpush1.msra.mxu0 0.0
    %2648 = vmatprep.subr.mxu0 0.0
    %2649 = vmatpush1.msra.mxu0 0.0
    %2650 = vmatprep.subr.mxu0 0.0
    %2651 = vmatpush1.msra.mxu0 0.0
    %2652 = vmatprep.subr.mxu0 0.0
    %2653 = vmatpush1.msra.mxu0 0.0
    %2654 = vmatprep.subr.mxu0 0.0
    %2655 = vmatpush1.msra.mxu0 0.0
    %2656 = vmatprep.subr.mxu0 0.0
    %2657 = vmatpush1.msra.mxu0 0.0
    %2658 = vmatprep.subr.mxu0 0.0
    %2659 = vmatpush1.msra.mxu0 0.0
    %2660 = vmatprep.subr.mxu0 0.0
    %2661 = vmatpush1.msra.mxu0 0.0
    %2662 = vmatprep.subr.mxu0 0.0
    %2663 = vmatpush1.msra.mxu0 0.0
    %2664 = vmatprep.subr.mxu0 0.0
    %2665 = vmatpush1.msra.mxu0 0.0
    %2666 = vmatprep.subr.mxu0 0.0
    %2667 = vmatpush1.msra.mxu0 0.0
    %2668 = vmatprep.subr.mxu0 0.0
    %2669 = vmatpush1.msra.mxu0 0.0
    %2670 = vmatprep.subr.mxu0 0.0
    %2671 = vmatpush1.msra.mxu0 0.0
    %2672 = vmatprep.subr.mxu0 0.0
    %2673 = vmatpush1.msra.mxu0 0.0
    %2674 = vmatprep.subr.mxu0 0.0
    %2675 = vmatpush1.msra.mxu0 0.0
    %2676 = vmatprep.subr.mxu0 0.0
    %2677 = vmatpush1.msra.mxu0 0.0
    %2678 = vmatprep.subr.mxu0 0.0
    %2679 = vmatpush1.msra.mxu0 0.0
    %2680 = vmatprep.subr.mxu0 0.0
    %2681 = vmatpush1.msra.mxu0 0.0
    %2682 = vmatprep.subr.mxu0 0.0
    %2683 = vmatpush1.msra.mxu0 0.0
    %2684 = vmatprep.subr.mxu0 0.0
    %2685 = vmatpush1.msra.mxu0 0.0
    %2686 = vmatprep.mubr.f32.mxu0 0.0
    %2687 = vmatmul.mubr.f32.gmra.mrb[0].mxu0 %v2620
    %v2688 = vpop.f32.mrb[0].mxu0
    %v2689 = vadd.f32 %v777, %v2688
    %v2690 = vpop.f32.mrb[0].mxu0
    %v2691 = vadd.f32 %v781, %v2690
    %2692 = vdwg.mxu0
    %v2693 = vxor.u32 %v2689, 2147483648
    %v2694 = vmul.f32 %v2693, 1.442695
    %v2695 = vpow.pop %v2694
    %v2696 = vadd.f32 %v2695, 1.0
    %v2697 = vrcp.pop %v2696
    %v2698 = vmul.f32 1.0, %v2697
    %2700 = vrot.lane.b32.xlu0 %v2689, 32
    %v2701 = vpop.permute.xlu0 %2700
    %v2703 = vmul.f32 %v2698, %v2701
    %2705 = vrot.lane.b32.xlu0 %v2703, 64
    %v2706 = vpop.permute.xlu0 %2705
    %v2708 = vadd.f32 %v2689, %v2706
    %v2709 = vtanh.pop %v2708
    %v2710 = vsub.f32 1.0, %v2698
    %2712 = vrot.lane.b32.xlu0 %v2709, 96
    %v2713 = vpop.permute.xlu0 %2712
    %v2715 = vmul.f32 %v2710, %v2713
    %v2716 = vmul.f32 %v2698, %v2586
    %v2717 = vadd.f32 %v2715, %v2716
    %v2718 = vld [vmem:[#allocation3 + $0x1e] sm:$0x3]
    %v2719 = vadd.f32 %v2718, %v2691
    %v2720 = vxor.u32 %v2719, 2147483648
    %v2721 = vmul.f32 %v2720, 1.442695
    %v2722 = vpow.pop %v2721
    %v2723 = vadd.f32 %v2722, 1.0
    %v2724 = vrcp.pop %v2723
    %v2725 = vmul.f32 1.0, %v2724
    %2727 = vrot.lane.b32.xlu0 %v2691, 64
    %v2728 = vpop.permute.xlu0 %2727
    %v2730 = vmul.f32 %v2725, %v2728
    %2732 = vrot.lane.b32.xlu0 %v2730, 64
    %v2733 = vpop.permute.xlu0 %2732
    %v2735 = vadd.f32 %v2718, %v2733
    %v2736 = vtanh.pop %v2735
    %v2737 = vsub.f32 1.0, %v2725
    %2739 = vrot.lane.b32.xlu0 %v2736, 96
    %v2740 = vpop.permute.xlu0 %2739
    %v2742 = vmul.f32 %v2737, %v2740
    %v2743 = vmul.f32 %v2725, %v2613
    %v2744 = vadd.f32 %v2742, %v2743
    %2746 = vrot.lane.b32.xlu0 %v2744, 96
    %v2747 = vpop.permute.xlu0 %2746
    %v2749 = vsel %vm771, %v2747, %v2717
    %v2751 = vsel %vm784, %v2749, 0
    %2753 = vmatprep.subr.mxu0 %v722
    %2754 = vmatpush1.msra.mxu0 %v721
    %2755 = vmatprep.subr.mxu0 %v724
    %2756 = vmatpush1.msra.mxu0 %v723
    %2757 = vmatprep.subr.mxu0 %v726
    %2758 = vmatpush1.msra.mxu0 %v725
    %2759 = vmatprep.subr.mxu0 %v728
    %2760 = vmatpush1.msra.mxu0 %v727
    %2761 = vmatprep.subr.mxu0 %v730
    %2762 = vmatpush1.msra.mxu0 %v729
    %2763 = vmatprep.subr.mxu0 %v732
    %2764 = vmatpush1.msra.mxu0 %v731
    %2765 = vmatprep.subr.mxu0 %v734
    %2766 = vmatpush1.msra.mxu0 %v733
    %2767 = vmatprep.subr.mxu0 %v736
    %2768 = vmatpush1.msra.mxu0 %v735
    %2769 = vmatprep.subr.mxu0 0.0
    %2770 = vmatpush1.msra.mxu0 0.0
    %2771 = vmatprep.subr.mxu0 0.0
    %2772 = vmatpush1.msra.mxu0 0.0
    %2773 = vmatprep.subr.mxu0 0.0
    %2774 = vmatpush1.msra.mxu0 0.0
    %2775 = vmatprep.subr.mxu0 0.0
    %2776 = vmatpush1.msra.mxu0 0.0
    %2777 = vmatprep.subr.mxu0 0.0
    %2778 = vmatpush1.msra.mxu0 0.0
    %2779 = vmatprep.subr.mxu0 0.0
    %2780 = vmatpush1.msra.mxu0 0.0
    %2781 = vmatprep.subr.mxu0 0.0
    %2782 = vmatpush1.msra.mxu0 0.0
    %2783 = vmatprep.subr.mxu0 0.0
    %2784 = vmatpush1.msra.mxu0 0.0
    %2785 = vmatprep.subr.mxu0 0.0
    %2786 = vmatpush1.msra.mxu0 0.0
    %2787 = vmatprep.subr.mxu0 0.0
    %2788 = vmatpush1.msra.mxu0 0.0
    %2789 = vmatprep.subr.mxu0 0.0
    %2790 = vmatpush1.msra.mxu0 0.0
    %2791 = vmatprep.subr.mxu0 0.0
    %2792 = vmatpush1.msra.mxu0 0.0
    %2793 = vmatprep.subr.mxu0 0.0
    %2794 = vmatpush1.msra.mxu0 0.0
    %2795 = vmatprep.subr.mxu0 0.0
    %2796 = vmatpush1.msra.mxu0 0.0
    %2797 = vmatprep.subr.mxu0 0.0
    %2798 = vmatpush1.msra.mxu0 0.0
    %2799 = vmatprep.subr.mxu0 0.0
    %2800 = vmatpush1.msra.mxu0 0.0
    %2801 = vmatprep.subr.mxu0 0.0
    %2802 = vmatpush1.msra.mxu0 0.0
    %2803 = vmatprep.subr.mxu0 0.0
    %2804 = vmatpush1.msra.mxu0 0.0
    %2805 = vmatprep.subr.mxu0 0.0
    %2806 = vmatpush1.msra.mxu0 0.0
    %2807 = vmatprep.subr.mxu0 0.0
    %2808 = vmatpush1.msra.mxu0 0.0
    %2809 = vmatprep.subr.mxu0 0.0
    %2810 = vmatpush1.msra.mxu0 0.0
    %2811 = vmatprep.subr.mxu0 0.0
    %2812 = vmatpush1.msra.mxu0 0.0
    %2813 = vmatprep.subr.mxu0 0.0
    %2814 = vmatpush1.msra.mxu0 0.0
    %2815 = vmatprep.subr.mxu0 0.0
    %2816 = vmatpush1.msra.mxu0 0.0
    %2817 = vmatprep.mubr.f32.mxu0 0.0
    %2818 = vmatmul.mubr.f32.gmra.mrb[0].mxu0 %v2751
    %v2819 = vpop.f32.mrb[0].mxu0
    %v2820 = vadd.f32 %v777, %v2819
    %v2821 = vpop.f32.mrb[0].mxu0
    %v2822 = vadd.f32 %v781, %v2821
    %2823 = vdwg.mxu0
    %v2824 = vxor.u32 %v2820, 2147483648
    %v2825 = vmul.f32 %v2824, 1.442695
    %v2826 = vpow.pop %v2825
    %v2827 = vadd.f32 %v2826, 1.0
    %v2828 = vrcp.pop %v2827
    %v2829 = vmul.f32 1.0, %v2828
    %2831 = vrot.lane.b32.xlu0 %v2820, 32
    %v2832 = vpop.permute.xlu0 %2831
    %v2834 = vmul.f32 %v2829, %v2832
    %2836 = vrot.lane.b32.xlu0 %v2834, 64
    %v2837 = vpop.permute.xlu0 %2836
    %v2839 = vadd.f32 %v2820, %v2837
    %v2840 = vtanh.pop %v2839
    %v2841 = vsub.f32 1.0, %v2829
    %2843 = vrot.lane.b32.xlu0 %v2840, 96
    %v2844 = vpop.permute.xlu0 %2843
    %v2846 = vmul.f32 %v2841, %v2844
    %v2847 = vmul.f32 %v2829, %v2717
    %v2848 = vadd.f32 %v2846, %v2847
    %v2849 = vld [vmem:[#allocation3 + $0x20] sm:$0x3]
    %v2850 = vadd.f32 %v2849, %v2822
    %v2851 = vxor.u32 %v2850, 2147483648
    %v2852 = vmul.f32 %v2851, 1.442695
    %v2853 = vpow.pop %v2852
    %v2854 = vadd.f32 %v2853, 1.0
    %v2855 = vrcp.pop %v2854
    %v2856 = vmul.f32 1.0, %v2855
    %2858 = vrot.lane.b32.xlu0 %v2822, 64
    %v2859 = vpop.permute.xlu0 %2858
    %v2861 = vmul.f32 %v2856, %v2859
    %2863 = vrot.lane.b32.xlu0 %v2861, 64
    %v2864 = vpop.permute.xlu0 %2863
    %v2866 = vadd.f32 %v2849, %v2864
    %v2867 = vtanh.pop %v2866
    %v2868 = vsub.f32 1.0, %v2856
    %2870 = vrot.lane.b32.xlu0 %v2867, 96
    %v2871 = vpop.permute.xlu0 %2870
    %v2873 = vmul.f32 %v2868, %v2871
    %v2874 = vmul.f32 %v2856, %v2744
    %v2875 = vadd.f32 %v2873, %v2874
    %2877 = vrot.lane.b32.xlu0 %v2875, 96
    %v2878 = vpop.permute.xlu0 %2877
    %v2880 = vsel %vm771, %v2878, %v2848
    %v2882 = vsel %vm784, %v2880, 0
    %2884 = vmatprep.subr.mxu0 %v722
    %2885 = vmatpush1.msra.mxu0 %v721
    %2886 = vmatprep.subr.mxu0 %v724
    %2887 = vmatpush1.msra.mxu0 %v723
    %2888 = vmatprep.subr.mxu0 %v726
    %2889 = vmatpush1.msra.mxu0 %v725
    %2890 = vmatprep.subr.mxu0 %v728
    %2891 = vmatpush1.msra.mxu0 %v727
    %2892 = vmatprep.subr.mxu0 %v730
    %2893 = vmatpush1.msra.mxu0 %v729
    %2894 = vmatprep.subr.mxu0 %v732
    %2895 = vmatpush1.msra.mxu0 %v731
    %2896 = vmatprep.subr.mxu0 %v734
    %2897 = vmatpush1.msra.mxu0 %v733
    %2898 = vmatprep.subr.mxu0 %v736
    %2899 = vmatpush1.msra.mxu0 %v735
    %2900 = vmatprep.subr.mxu0 0.0
    %2901 = vmatpush1.msra.mxu0 0.0
    %2902 = vmatprep.subr.mxu0 0.0
    %2903 = vmatpush1.msra.mxu0 0.0
    %2904 = vmatprep.subr.mxu0 0.0
    %2905 = vmatpush1.msra.mxu0 0.0
    %2906 = vmatprep.subr.mxu0 0.0
    %2907 = vmatpush1.msra.mxu0 0.0
    %2908 = vmatprep.subr.mxu0 0.0
    %2909 = vmatpush1.msra.mxu0 0.0
    %2910 = vmatprep.subr.mxu0 0.0
    %2911 = vmatpush1.msra.mxu0 0.0
    %2912 = vmatprep.subr.mxu0 0.0
    %2913 = vmatpush1.msra.mxu0 0.0
    %2914 = vmatprep.subr.mxu0 0.0
    %2915 = vmatpush1.msra.mxu0 0.0
    %2916 = vmatprep.subr.mxu0 0.0
    %2917 = vmatpush1.msra.mxu0 0.0
    %2918 = vmatprep.subr.mxu0 0.0
    %2919 = vmatpush1.msra.mxu0 0.0
    %2920 = vmatprep.subr.mxu0 0.0
    %2921 = vmatpush1.msra.mxu0 0.0
    %2922 = vmatprep.subr.mxu0 0.0
    %2923 = vmatpush1.msra.mxu0 0.0
    %2924 = vmatprep.subr.mxu0 0.0
    %2925 = vmatpush1.msra.mxu0 0.0
    %2926 = vmatprep.subr.mxu0 0.0
    %2927 = vmatpush1.msra.mxu0 0.0
    %2928 = vmatprep.subr.mxu0 0.0
    %2929 = vmatpush1.msra.mxu0 0.0
    %2930 = vmatprep.subr.mxu0 0.0
    %2931 = vmatpush1.msra.mxu0 0.0
    %2932 = vmatprep.subr.mxu0 0.0
    %2933 = vmatpush1.msra.mxu0 0.0
    %2934 = vmatprep.subr.mxu0 0.0
    %2935 = vmatpush1.msra.mxu0 0.0
    %2936 = vmatprep.subr.mxu0 0.0
    %2937 = vmatpush1.msra.mxu0 0.0
    %2938 = vmatprep.subr.mxu0 0.0
    %2939 = vmatpush1.msra.mxu0 0.0
    %2940 = vmatprep.subr.mxu0 0.0
    %2941 = vmatpush1.msra.mxu0 0.0
    %2942 = vmatprep.subr.mxu0 0.0
    %2943 = vmatpush1.msra.mxu0 0.0
    %2944 = vmatprep.subr.mxu0 0.0
    %2945 = vmatpush1.msra.mxu0 0.0
    %2946 = vmatprep.subr.mxu0 0.0
    %2947 = vmatpush1.msra.mxu0 0.0
    %2948 = vmatprep.mubr.f32.mxu0 0.0
    %2949 = vmatmul.mubr.f32.gmra.mrb[0].mxu0 %v2882
    %v2950 = vpop.f32.mrb[0].mxu0
    %v2951 = vadd.f32 %v777, %v2950
    %v2952 = vpop.f32.mrb[0].mxu0
    %v2953 = vadd.f32 %v781, %v2952
    %2954 = vdwg.mxu0
    %v2955 = vxor.u32 %v2951, 2147483648
    %v2956 = vmul.f32 %v2955, 1.442695
    %v2957 = vpow.pop %v2956
    %v2958 = vadd.f32 %v2957, 1.0
    %v2959 = vrcp.pop %v2958
    %v2960 = vmul.f32 1.0, %v2959
    %2962 = vrot.lane.b32.xlu0 %v2951, 32
    %v2963 = vpop.permute.xlu0 %2962
    %v2965 = vmul.f32 %v2960, %v2963
    %2967 = vrot.lane.b32.xlu0 %v2965, 64
    %v2968 = vpop.permute.xlu0 %2967
    %v2970 = vadd.f32 %v2951, %v2968
    %v2971 = vtanh.pop %v2970
    %v2972 = vsub.f32 1.0, %v2960
    %2974 = vrot.lane.b32.xlu0 %v2971, 96
    %v2975 = vpop.permute.xlu0 %2974
    %v2977 = vmul.f32 %v2972, %v2975
    %v2978 = vmul.f32 %v2960, %v2848
    %v2979 = vadd.f32 %v2977, %v2978
    %v2980 = vld [vmem:[#allocation3 + $0x22] sm:$0x3]
    %v2981 = vadd.f32 %v2980, %v2953
    %v2982 = vxor.u32 %v2981, 2147483648
    %v2983 = vmul.f32 %v2982, 1.442695
    %v2984 = vpow.pop %v2983
    %v2985 = vadd.f32 %v2984, 1.0
    %v2986 = vrcp.pop %v2985
    %v2987 = vmul.f32 1.0, %v2986
    %2989 = vrot.lane.b32.xlu0 %v2953, 64
    %v2990 = vpop.permute.xlu0 %2989
    %v2992 = vmul.f32 %v2987, %v2990
    %2994 = vrot.lane.b32.xlu0 %v2992, 64
    %v2995 = vpop.permute.xlu0 %2994
    %v2997 = vadd.f32 %v2980, %v2995
    %v2998 = vtanh.pop %v2997
    %v2999 = vsub.f32 1.0, %v2987
    %3001 = vrot.lane.b32.xlu0 %v2998, 96
    %v3002 = vpop.permute.xlu0 %3001
    %v3004 = vmul.f32 %v2999, %v3002
    %v3005 = vmul.f32 %v2987, %v2875
    %v3006 = vadd.f32 %v3004, %v3005
    %3008 = vrot.lane.b32.xlu0 %v3006, 96
    %v3009 = vpop.permute.xlu0 %3008
    %v3011 = vsel %vm771, %v3009, %v2979
    %v3013 = vsel %vm784, %v3011, 0
    %3015 = vmatprep.subr.mxu0 %v722
    %3016 = vmatpush1.msra.mxu0 %v721
    %3017 = vmatprep.subr.mxu0 %v724
    %3018 = vmatpush1.msra.mxu0 %v723
    %3019 = vmatprep.subr.mxu0 %v726
    %3020 = vmatpush1.msra.mxu0 %v725
    %3021 = vmatprep.subr.mxu0 %v728
    %3022 = vmatpush1.msra.mxu0 %v727
    %3023 = vmatprep.subr.mxu0 %v730
    %3024 = vmatpush1.msra.mxu0 %v729
    %3025 = vmatprep.subr.mxu0 %v732
    %3026 = vmatpush1.msra.mxu0 %v731
    %3027 = vmatprep.subr.mxu0 %v734
    %3028 = vmatpush1.msra.mxu0 %v733
    %3029 = vmatprep.subr.mxu0 %v736
    %3030 = vmatpush1.msra.mxu0 %v735
    %3031 = vmatprep.subr.mxu0 0.0
    %3032 = vmatpush1.msra.mxu0 0.0
    %3033 = vmatprep.subr.mxu0 0.0
    %3034 = vmatpush1.msra.mxu0 0.0
    %3035 = vmatprep.subr.mxu0 0.0
    %3036 = vmatpush1.msra.mxu0 0.0
    %3037 = vmatprep.subr.mxu0 0.0
    %3038 = vmatpush1.msra.mxu0 0.0
    %3039 = vmatprep.subr.mxu0 0.0
    %3040 = vmatpush1.msra.mxu0 0.0
    %3041 = vmatprep.subr.mxu0 0.0
    %3042 = vmatpush1.msra.mxu0 0.0
    %3043 = vmatprep.subr.mxu0 0.0
    %3044 = vmatpush1.msra.mxu0 0.0
    %3045 = vmatprep.subr.mxu0 0.0
    %3046 = vmatpush1.msra.mxu0 0.0
    %3047 = vmatprep.subr.mxu0 0.0
    %3048 = vmatpush1.msra.mxu0 0.0
    %3049 = vmatprep.subr.mxu0 0.0
    %3050 = vmatpush1.msra.mxu0 0.0
    %3051 = vmatprep.subr.mxu0 0.0
    %3052 = vmatpush1.msra.mxu0 0.0
    %3053 = vmatprep.subr.mxu0 0.0
    %3054 = vmatpush1.msra.mxu0 0.0
    %3055 = vmatprep.subr.mxu0 0.0
    %3056 = vmatpush1.msra.mxu0 0.0
    %3057 = vmatprep.subr.mxu0 0.0
    %3058 = vmatpush1.msra.mxu0 0.0
    %3059 = vmatprep.subr.mxu0 0.0
    %3060 = vmatpush1.msra.mxu0 0.0
    %3061 = vmatprep.subr.mxu0 0.0
    %3062 = vmatpush1.msra.mxu0 0.0
    %3063 = vmatprep.subr.mxu0 0.0
    %3064 = vmatpush1.msra.mxu0 0.0
    %3065 = vmatprep.subr.mxu0 0.0
    %3066 = vmatpush1.msra.mxu0 0.0
    %3067 = vmatprep.subr.mxu0 0.0
    %3068 = vmatpush1.msra.mxu0 0.0
    %3069 = vmatprep.subr.mxu0 0.0
    %3070 = vmatpush1.msra.mxu0 0.0
    %3071 = vmatprep.subr.mxu0 0.0
    %3072 = vmatpush1.msra.mxu0 0.0
    %3073 = vmatprep.subr.mxu0 0.0
    %3074 = vmatpush1.msra.mxu0 0.0
    %3075 = vmatprep.subr.mxu0 0.0
    %3076 = vmatpush1.msra.mxu0 0.0
    %3077 = vmatprep.subr.mxu0 0.0
    %3078 = vmatpush1.msra.mxu0 0.0
    %3079 = vmatprep.mubr.f32.mxu0 0.0
    %3080 = vmatmul.mubr.f32.gmra.mrb[0].mxu0 %v3013
    %v3081 = vpop.f32.mrb[0].mxu0
    %v3082 = vadd.f32 %v777, %v3081
    %v3083 = vpop.f32.mrb[0].mxu0
    %v3084 = vadd.f32 %v781, %v3083
    %3085 = vdwg.mxu0
    %v3086 = vxor.u32 %v3082, 2147483648
    %v3087 = vmul.f32 %v3086, 1.442695
    %v3088 = vpow.pop %v3087
    %v3089 = vadd.f32 %v3088, 1.0
    %v3090 = vrcp.pop %v3089
    %v3091 = vmul.f32 1.0, %v3090
    %3093 = vrot.lane.b32.xlu0 %v3082, 32
    %v3094 = vpop.permute.xlu0 %3093
    %v3096 = vmul.f32 %v3091, %v3094
    %3098 = vrot.lane.b32.xlu0 %v3096, 64
    %v3099 = vpop.permute.xlu0 %3098
    %v3101 = vadd.f32 %v3082, %v3099
    %v3102 = vtanh.pop %v3101
    %v3103 = vsub.f32 1.0, %v3091
    %3105 = vrot.lane.b32.xlu0 %v3102, 96
    %v3106 = vpop.permute.xlu0 %3105
    %v3108 = vmul.f32 %v3103, %v3106
    %v3109 = vmul.f32 %v3091, %v2979
    %v3110 = vadd.f32 %v3108, %v3109
    %v3111 = vld [vmem:[#allocation3 + $0x24] sm:$0x3]
    %v3112 = vadd.f32 %v3111, %v3084
    %v3113 = vxor.u32 %v3112, 2147483648
    %v3114 = vmul.f32 %v3113, 1.442695
    %v3115 = vpow.pop %v3114
    %v3116 = vadd.f32 %v3115, 1.0
    %v3117 = vrcp.pop %v3116
    %v3118 = vmul.f32 1.0, %v3117
    %3120 = vrot.lane.b32.xlu0 %v3084, 64
    %v3121 = vpop.permute.xlu0 %3120
    %v3123 = vmul.f32 %v3118, %v3121
    %3125 = vrot.lane.b32.xlu0 %v3123, 64
    %v3126 = vpop.permute.xlu0 %3125
    %v3128 = vadd.f32 %v3111, %v3126
    %v3129 = vtanh.pop %v3128
    %v3130 = vsub.f32 1.0, %v3118
    %3132 = vrot.lane.b32.xlu0 %v3129, 96
    %v3133 = vpop.permute.xlu0 %3132
    %v3135 = vmul.f32 %v3130, %v3133
    %v3136 = vmul.f32 %v3118, %v3006
    %v3137 = vadd.f32 %v3135, %v3136
    %3139 = vrot.lane.b32.xlu0 %v3137, 96
    %v3140 = vpop.permute.xlu0 %3139
    %v3142 = vsel %vm771, %v3140, %v3110
    %v3144 = vsel %vm784, %v3142, 0
    %3146 = vmatprep.subr.mxu0 %v722
    %3147 = vmatpush1.msra.mxu0 %v721
    %3148 = vmatprep.subr.mxu0 %v724
    %3149 = vmatpush1.msra.mxu0 %v723
    %3150 = vmatprep.subr.mxu0 %v726
    %3151 = vmatpush1.msra.mxu0 %v725
    %3152 = vmatprep.subr.mxu0 %v728
    %3153 = vmatpush1.msra.mxu0 %v727
    %3154 = vmatprep.subr.mxu0 %v730
    %3155 = vmatpush1.msra.mxu0 %v729
    %3156 = vmatprep.subr.mxu0 %v732
    %3157 = vmatpush1.msra.mxu0 %v731
    %3158 = vmatprep.subr.mxu0 %v734
    %3159 = vmatpush1.msra.mxu0 %v733
    %3160 = vmatprep.subr.mxu0 %v736
    %3161 = vmatpush1.msra.mxu0 %v735
    %3162 = vmatprep.subr.mxu0 0.0
    %3163 = vmatpush1.msra.mxu0 0.0
    %3164 = vmatprep.subr.mxu0 0.0
    %3165 = vmatpush1.msra.mxu0 0.0
    %3166 = vmatprep.subr.mxu0 0.0
    %3167 = vmatpush1.msra.mxu0 0.0
    %3168 = vmatprep.subr.mxu0 0.0
    %3169 = vmatpush1.msra.mxu0 0.0
    %3170 = vmatprep.subr.mxu0 0.0
    %3171 = vmatpush1.msra.mxu0 0.0
    %3172 = vmatprep.subr.mxu0 0.0
    %3173 = vmatpush1.msra.mxu0 0.0
    %3174 = vmatprep.subr.mxu0 0.0
    %3175 = vmatpush1.msra.mxu0 0.0
    %3176 = vmatprep.subr.mxu0 0.0
    %3177 = vmatpush1.msra.mxu0 0.0
    %3178 = vmatprep.subr.mxu0 0.0
    %3179 = vmatpush1.msra.mxu0 0.0
    %3180 = vmatprep.subr.mxu0 0.0
    %3181 = vmatpush1.msra.mxu0 0.0
    %3182 = vmatprep.subr.mxu0 0.0
    %3183 = vmatpush1.msra.mxu0 0.0
    %3184 = vmatprep.subr.mxu0 0.0
    %3185 = vmatpush1.msra.mxu0 0.0
    %3186 = vmatprep.subr.mxu0 0.0
    %3187 = vmatpush1.msra.mxu0 0.0
    %3188 = vmatprep.subr.mxu0 0.0
    %3189 = vmatpush1.msra.mxu0 0.0
    %3190 = vmatprep.subr.mxu0 0.0
    %3191 = vmatpush1.msra.mxu0 0.0
    %3192 = vmatprep.subr.mxu0 0.0
    %3193 = vmatpush1.msra.mxu0 0.0
    %3194 = vmatprep.subr.mxu0 0.0
    %3195 = vmatpush1.msra.mxu0 0.0
    %3196 = vmatprep.subr.mxu0 0.0
    %3197 = vmatpush1.msra.mxu0 0.0
    %3198 = vmatprep.subr.mxu0 0.0
    %3199 = vmatpush1.msra.mxu0 0.0
    %3200 = vmatprep.subr.mxu0 0.0
    %3201 = vmatpush1.msra.mxu0 0.0
    %3202 = vmatprep.subr.mxu0 0.0
    %3203 = vmatpush1.msra.mxu0 0.0
    %3204 = vmatprep.subr.mxu0 0.0
    %3205 = vmatpush1.msra.mxu0 0.0
    %3206 = vmatprep.subr.mxu0 0.0
    %3207 = vmatpush1.msra.mxu0 0.0
    %3208 = vmatprep.subr.mxu0 0.0
    %3209 = vmatpush1.msra.mxu0 0.0
    %3210 = vmatprep.mubr.f32.mxu0 0.0
    %3211 = vmatmul.mubr.f32.gmra.mrb[0].mxu0 %v3144
    %v3212 = vpop.f32.mrb[0].mxu0
    %v3213 = vadd.f32 %v777, %v3212
    %v3214 = vpop.f32.mrb[0].mxu0
    %3215 = vdwg.mxu0
    %v3216 = vxor.u32 %v3213, 2147483648
    %v3217 = vmul.f32 %v3216, 1.442695
    %v3218 = vpow.pop %v3217
    %v3219 = vadd.f32 %v3218, 1.0
    %v3220 = vrcp.pop %v3219
    %v3221 = vmul.f32 1.0, %v3220
    %3223 = vrot.lane.b32.xlu0 %v3213, 32
    %v3224 = vpop.permute.xlu0 %3223
    %v3226 = vmul.f32 %v3221, %v3224
    %3228 = vrot.lane.b32.xlu0 %v3226, 64
    %v3229 = vpop.permute.xlu0 %3228
    %v3231 = vadd.f32 %v3213, %v3229
    %v3232 = vtanh.pop %v3231
    %v3233 = vsub.f32 1.0, %v3221
    %3235 = vrot.lane.b32.xlu0 %v3232, 96
    %v3236 = vpop.permute.xlu0 %3235
    %v3238 = vmul.f32 %v3233, %v3236
    %v3239 = vmul.f32 %v3221, %v3110
    %v3240 = vadd.f32 %v3238, %v3239
    %v3241 = vld [vmem:[#allocation4 + $0x130] sm:$0xff]
    %v3242 = vld [vmem:[#allocation4 + $0x140] sm:$0xff]
    %v3243 = vld [vmem:[#allocation4 + $0x150] sm:$0xff]
    %v3244 = vld [vmem:[#allocation4 + $0x160] sm:$0xff]
    %v3245 = vld [vmem:[#allocation4 + $0x170] ss:$0 sm:$0xff]
    %3247 = vrot.lane.b32.xlu0 %v3240, 96
    %v3248 = vpop.permute.xlu0 %3247
    %v3249 = vsel %vm771, %v3248, 0
    %3251 = vmatprep.subr.mxu0 0.0
    %3252 = vmatpush1.msra.mxu0 %v3241
    %3253 = vmatprep.subr.mxu0 0.0
    %3254 = vmatpush1.msra.mxu0 %v3242
    %3255 = vmatprep.subr.mxu0 0.0
    %3256 = vmatpush1.msra.mxu0 %v3243
    %3257 = vmatprep.subr.mxu0 0.0
    %3258 = vmatpush1.msra.mxu0 %v3244
    %3259 = vmatprep.subr.mxu0 0.0
    %3260 = vmatpush1.msra.mxu0 0.0
    %3261 = vmatprep.subr.mxu0 0.0
    %3262 = vmatpush1.msra.mxu0 0.0
    %3263 = vmatprep.subr.mxu0 0.0
    %3264 = vmatpush1.msra.mxu0 0.0
    %3265 = vmatprep.subr.mxu0 0.0
    %3266 = vmatpush1.msra.mxu0 0.0
    %3267 = vmatprep.subr.mxu0 0.0
    %3268 = vmatpush1.msra.mxu0 0.0
    %3269 = vmatprep.subr.mxu0 0.0
    %3270 = vmatpush1.msra.mxu0 0.0
    %3271 = vmatprep.subr.mxu0 0.0
    %3272 = vmatpush1.msra.mxu0 0.0
    %3273 = vmatprep.subr.mxu0 0.0
    %3274 = vmatpush1.msra.mxu0 0.0
    %3275 = vmatprep.subr.mxu0 0.0
    %3276 = vmatpush1.msra.mxu0 0.0
    %3277 = vmatprep.subr.mxu0 0.0
    %3278 = vmatpush1.msra.mxu0 0.0
    %3279 = vmatprep.subr.mxu0 0.0
    %3280 = vmatpush1.msra.mxu0 0.0
    %3281 = vmatprep.subr.mxu0 0.0
    %3282 = vmatpush1.msra.mxu0 0.0
    %3283 = vmatprep.subr.mxu0 0.0
    %3284 = vmatpush1.msra.mxu0 0.0
    %3285 = vmatprep.subr.mxu0 0.0
    %3286 = vmatpush1.msra.mxu0 0.0
    %3287 = vmatprep.subr.mxu0 0.0
    %3288 = vmatpush1.msra.mxu0 0.0
    %3289 = vmatprep.subr.mxu0 0.0
    %3290 = vmatpush1.msra.mxu0 0.0
    %3291 = vmatprep.subr.mxu0 0.0
    %3292 = vmatpush1.msra.mxu0 0.0
    %3293 = vmatprep.subr.mxu0 0.0
    %3294 = vmatpush1.msra.mxu0 0.0
    %3295 = vmatprep.subr.mxu0 0.0
    %3296 = vmatpush1.msra.mxu0 0.0
    %3297 = vmatprep.subr.mxu0 0.0
    %3298 = vmatpush1.msra.mxu0 0.0
    %3299 = vmatprep.subr.mxu0 0.0
    %3300 = vmatpush1.msra.mxu0 0.0
    %3301 = vmatprep.subr.mxu0 0.0
    %3302 = vmatpush1.msra.mxu0 0.0
    %3303 = vmatprep.subr.mxu0 0.0
    %3304 = vmatpush1.msra.mxu0 0.0
    %3305 = vmatprep.subr.mxu0 0.0
    %3306 = vmatpush1.msra.mxu0 0.0
    %3307 = vmatprep.subr.mxu0 0.0
    %3308 = vmatpush1.msra.mxu0 0.0
    %3309 = vmatprep.subr.mxu0 0.0
    %3310 = vmatpush1.msra.mxu0 0.0
    %3311 = vmatprep.subr.mxu0 0.0
    %3312 = vmatpush1.msra.mxu0 0.0
    %3313 = vmatprep.subr.mxu0 0.0
    %3314 = vmatpush1.msra.mxu0 0.0
    %3315 = vmatprep.mubr.f32.mxu0 0.0
    %3316 = vmatmul.mubr.f32.gmra.mrb[0].mxu0 %v3249
    %v3317 = vpop.f32.mrb[0].mxu0
    %v3318 = vadd.f32 %v3245, %v3317
    %v3319 = vpop.f32.mrb[0].mxu0
    %3320 = vdwg.mxu0
    %vm3321 = vcmask 484352
    %3322 = vst.msk [vmem:[#allocation7] sm:$0x3] %vm3321, %v3318
    // Predicated region
    $region14: #{tcn_gru_forward.1} parent=1 // pred_check
      _
    $region15: #{tcn_gru_forward.1} parent=1 // pred_check_branch
      %3324 = sbr.rel (0) target = $region17
    $region16: #{tcn_gru_forward.1} parent=1 // pred_region
      %s3326 = ssub.s32 32, 32
      %3327 = vsyncadd [#allocation6], %s3326
      %s3329 = sshll.u32 [#allocation7], 4
      %s3330 = int_to_ptr.vmem [resolvable:$true] %s3329
      %3332 = dma.vmem_to_hbm [thread:$0]  %s3330, 32, %s2, [#allocation6]
    $region17: #{tcn_gru_forward.1} parent=1 // pred_fallthru
      _
    // Predicated region
    $region18: #{tcn_gru_forward.1} parent=1 // pred_check
      _
    $region19: #{tcn_gru_forward.1} parent=1 // pred_check_branch
      %3334 = sbr.rel (0) target = $region21
    $region20: #{tcn_gru_forward.1} parent=1 // pred_region
      %3335 = dma.done [#allocation6], 32
    $region21: #{tcn_gru_forward.1} parent=1 // pred_fallthru
      _
    %3336 = vsyncpa [#allocation5], 1
    %3337 = vsyncpa [#allocation6], 1

</llo_original>
